<compile_context>
chip_gen: v7x
topology: tpu7x:2x2x1
jax: 0.10.0
libtpu: 0.0.40
codegen_flags: <defaults>
</compile_context>

<pallas_src>
import math

import jax
import jax.numpy as jnp
from jax.experimental import pallas as pl
from jax.experimental.pallas import tpu as pltpu

IN_DIM = 28 * 28          # 784 (multiple of 16 -> fine for bf16 sublane tiling)
H1, H2, H3 = 1024, 512, 128
N_CLASSES = 10
N_PAD = 128               # lane-dense padded class dim (no vst.msk on output)
MAX_TILE_B = 512          # batch-tile cap (v7x 2-TC balance + VMEM headroom)
NEG_INF = -1e30


def _mlp_kernel(x_ref,
                w1_ref, b1_ref,
                w2_ref, b2_ref,
                w3_ref, b3_ref,
                w4_ref, b4_ref,
                out_ref):
    # Cast the activation tile to bf16 in-kernel (VPU work, hidden under MXU);
    # the wrapper passes x straight from HBM with no pad / cast pass.
    x = x_ref[...].astype(jnp.bfloat16)
    # Layer 1: 784 -> 1024, bf16 MXU matmul, f32 accumulate, ReLU.
    h = jnp.dot(x, w1_ref[...], preferred_element_type=jnp.float32)
    h = jnp.maximum(h + b1_ref[...], 0.0).astype(jnp.bfloat16)
    # Layer 2: 1024 -> 512, ReLU.
    h = jnp.dot(h, w2_ref[...], preferred_element_type=jnp.float32)
    h = jnp.maximum(h + b2_ref[...], 0.0).astype(jnp.bfloat16)
    # Layer 3: 512 -> 128, ReLU.
    h = jnp.dot(h, w3_ref[...], preferred_element_type=jnp.float32)
    h = jnp.maximum(h + b3_ref[...], 0.0).astype(jnp.bfloat16)
    # Layer 4: 128 -> 128.  The 118 pad columns have zero weights and a bias
    # pre-filled with -1e30, so the class-pad mask is already baked in.
    logits = jnp.dot(h, w4_ref[...], preferred_element_type=jnp.float32)
    logits = logits + b4_ref[...]
    # Numerically stable log_softmax over the class axis.
    m = jnp.max(logits, axis=-1, keepdims=True)
    shifted = logits - m
    lse = jnp.log(jnp.sum(jnp.exp(shifted), axis=-1, keepdims=True))
    out_ref[...] = (shifted - lse).astype(out_ref.dtype)


def mlp_forward(x, params):
    """x: (B, 1, 28, 28) or (B, 784), float dtype. Returns (B, 10) f32 log-probs."""
    x2d = x.reshape(-1, IN_DIM)                    # x.view(-1, 784): no pad, no cast
    B = x2d.shape[0]
    tile_b = MAX_TILE_B if B >= MAX_TILE_B else ((B + 7) // 8) * 8
    grid = (pl.cdiv(B, tile_b),)                   # ragged last tile handled by Pallas

    (w1, b1), (w2, b2), (w3, b3), (w4, b4) = params

    # Weights/biases: constant index_map -> DMA'd once, VMEM-resident.
    resident = lambda a: pl.BlockSpec(a.shape, lambda i: (0,) * a.ndim)

    bpe = jnp.dtype(x2d.dtype).itemsize
    mm_elems = IN_DIM * H1 + H1 * H2 + H2 * H3 + H3 * N_PAD
    cost = pl.CostEstimate(
        flops=2 * B * mm_elems,
        transcendentals=B * (N_PAD + 1),
        bytes_accessed=(B * IN_DIM * bpe                 # activations in
                        + 2 * mm_elems                   # bf16 weights
                        + 4 * (H1 + H2 + H3 + N_PAD)     # f32 biases
                        + B * N_PAD * 4))                # f32 log-probs out

    out = pl.pallas_call(
        _mlp_kernel,
        out_shape=jax.ShapeDtypeStruct((B, N_PAD), jnp.float32),
        grid=grid,
        in_specs=[
            pl.BlockSpec((tile_b, IN_DIM), lambda i: (i, 0)),  # activations: tiled
            resident(w1), resident(b1),
            resident(w2), resident(b2),
            resident(w3), resident(b3),
            resident(w4), resident(b4),
        ],
        out_specs=pl.BlockSpec((tile_b, N_PAD), lambda i: (i, 0)),
        compiler_params=pltpu.CompilerParams(
            dimension_semantics=("parallel",),
            # ~13 MiB actual budget at tile_b=512; raise scoped VMEM so v5e's
            # 16 MiB default is not a constraint (no-op headroom on v6e/v7x).
            vmem_limit_bytes=32 * 1024 * 1024),
        cost_estimate=cost,
    )(x2d, w1, b1, w2, b2, w3, b3, w4, b4)

    return out[:, :N_CLASSES]


def init_params(key):
    """nn.Linear-style init (uniform +-1/sqrt(fan_in)).

    Weights: (in_features, out_features) bf16; layer-4 out-dim zero-padded
    10 -> 128.  Biases: (1, out_features) f32; layer-4 pad columns are filled
    with NEG_INF so the class-pad mask is baked into the bias.
    """
    real_dims = [(IN_DIM, H1), (H1, H2), (H2, H3), (H3, N_CLASSES)]
    pad_dims = [(IN_DIM, H1), (H1, H2), (H2, H3), (H3, N_PAD)]
    params = []
    for li, ((fan_in, fan_out), (pin, pout)) in enumerate(zip(real_dims, pad_dims)):
        key, kw, kb = jax.random.split(key, 3)
        bound = 1.0 / math.sqrt(fan_in)
        w = jax.random.uniform(kw, (fan_in, fan_out), jnp.float32, -bound, bound)
        b = jax.random.uniform(kb, (1, fan_out), jnp.float32, -bound, bound)
        w_p = jnp.zeros((pin, pout), jnp.float32).at[:fan_in, :fan_out].set(w)
        bias_fill = NEG_INF if li == 3 else 0.0
        b_p = jnp.full((1, pout), bias_fill, jnp.float32).at[:, :fan_out].set(b)
        params.append((w_p.astype(jnp.bfloat16), b_p))
    return params


def reference_forward(x, params):
    """Plain-JAX reference using the same bf16-in / f32-accumulate precision."""
    h = x.reshape(-1, IN_DIM).astype(jnp.bfloat16)
    (w1, b1), (w2, b2), (w3, b3), (w4, b4) = params
    h = jnp.maximum(jnp.dot(h, w1, preferred_element_type=jnp.float32) + b1, 0.0)
    h = jnp.maximum(jnp.dot(h.astype(jnp.bfloat16), w2,
                            preferred_element_type=jnp.float32) + b2, 0.0)
    h = jnp.maximum(jnp.dot(h.astype(jnp.bfloat16), w3,
                            preferred_element_type=jnp.float32) + b3, 0.0)
    logits = jnp.dot(h.astype(jnp.bfloat16), w4,
                     preferred_element_type=jnp.float32) + b4
    logits = logits[:, :N_CLASSES]
    return jax.nn.log_softmax(logits, axis=1)


if __name__ == "__main__":
    key = jax.random.PRNGKey(0)
    key, kx = jax.random.split(key)
    # MNIST-like input: batch=2, NCHW (2, 1, 28, 28)
    x = jax.random.normal(kx, (2, 1, 28, 28), jnp.float32)
    params = init_params(key)

    out = mlp_forward(x, params)
    out = jax.block_until_ready(out)

    ref = reference_forward(x, params)
    assert out.shape == (2, N_CLASSES), out.shape
    assert bool(jnp.all(jnp.isfinite(out))), "non-finite output"
    assert jnp.allclose(out, ref, atol=2e-3, rtol=2e-3), "mismatch vs reference"

    print("KERNEL_OK")
</pallas_src>

<mosaic_0001>
module attributes {stable_mosaic.version = 11 : i64} {
  func.func @_mlp_kernel(%arg0: i32, %arg1: memref<8x784xf32, #tpu.memory_space<vmem>>, %arg2: memref<784x1024xbf16, #tpu.memory_space<vmem>>, %arg3: memref<1x1024xf32, #tpu.memory_space<vmem>>, %arg4: memref<1024x512xbf16, #tpu.memory_space<vmem>>, %arg5: memref<1x512xf32, #tpu.memory_space<vmem>>, %arg6: memref<512x128xbf16, #tpu.memory_space<vmem>>, %arg7: memref<1x128xf32, #tpu.memory_space<vmem>>, %arg8: memref<128x128xbf16, #tpu.memory_space<vmem>>, %arg9: memref<1x128xf32, #tpu.memory_space<vmem>>, %arg10: memref<8x128xf32, #tpu.memory_space<vmem>>) attributes {dimension_semantics = [#tpu.dimension_semantics<parallel>], iteration_bounds = array<i64: 1>, scalar_prefetch = 0 : i64, scratch_operands = 0 : i64, tpu.core_type = #tpu.core_type<tc>, window_params = [{transform_indices = @transform_0, window_bounds = array<i64: 8, 784>}, {pipeline_mode = #tpu.pipeline_mode<synchronous>, transform_indices = @transform_1, window_bounds = array<i64: 784, 1024>}, {pipeline_mode = #tpu.pipeline_mode<synchronous>, transform_indices = @transform_2, window_bounds = array<i64: 1, 1024>}, {pipeline_mode = #tpu.pipeline_mode<synchronous>, transform_indices = @transform_3, window_bounds = array<i64: 1024, 512>}, {pipeline_mode = #tpu.pipeline_mode<synchronous>, transform_indices = @transform_4, window_bounds = array<i64: 1, 512>}, {pipeline_mode = #tpu.pipeline_mode<synchronous>, transform_indices = @transform_5, window_bounds = array<i64: 512, 128>}, {pipeline_mode = #tpu.pipeline_mode<synchronous>, transform_indices = @transform_6, window_bounds = array<i64: 1, 128>}, {pipeline_mode = #tpu.pipeline_mode<synchronous>, transform_indices = @transform_7, window_bounds = array<i64: 128, 128>}, {pipeline_mode = #tpu.pipeline_mode<synchronous>, transform_indices = @transform_8, window_bounds = array<i64: 1, 128>}, {transform_indices = @transform_9, window_bounds = array<i64: 8, 128>}]} {
    %c0 = arith.constant 0 : index
    %c0_0 = arith.constant 0 : index
    %0 = vector.load %arg1[%c0, %c0_0] : memref<8x784xf32, #tpu.memory_space<vmem>>, vector<8x784xf32>
    %1 = arith.truncf %0 : vector<8x784xf32> to vector<8x784xbf16>
    %c0_1 = arith.constant 0 : index
    %c0_2 = arith.constant 0 : index
    %2 = vector.load %arg2[%c0_1, %c0_2] : memref<784x1024xbf16, #tpu.memory_space<vmem>>, vector<784x1024xbf16>
    %cst = arith.constant dense<0.000000e+00> : vector<8x1024xf32>
    %3 = tpu.matmul %1, %2, %cst {dimension_numbers = #tpu.dot_dimension_numbers<[1], [0], [0], [1], [0, 0, 1, 1], [], []>} : vector<8x784xbf16>, vector<784x1024xbf16>, vector<8x1024xf32> -> vector<8x1024xf32>
    %c0_3 = arith.constant 0 : index
    %c0_4 = arith.constant 0 : index
    %4 = vector.load %arg3[%c0_3, %c0_4] : memref<1x1024xf32, #tpu.memory_space<vmem>>, vector<1x1024xf32>
    %5 = vector.broadcast %4 : vector<1x1024xf32> to vector<8x1024xf32>
    %6 = arith.addf %3, %5 : vector<8x1024xf32>
    %cst_5 = arith.constant 0.000000e+00 : f32
    %7 = vector.broadcast %cst_5 : f32 to vector<8x1024xf32>
    %8 = arith.maximumf %6, %7 : vector<8x1024xf32>
    %9 = arith.truncf %8 : vector<8x1024xf32> to vector<8x1024xbf16>
    %c0_6 = arith.constant 0 : index
    %c0_7 = arith.constant 0 : index
    %10 = vector.load %arg4[%c0_6, %c0_7] : memref<1024x512xbf16, #tpu.memory_space<vmem>>, vector<1024x512xbf16>
    %cst_8 = arith.constant dense<0.000000e+00> : vector<8x512xf32>
    %11 = tpu.matmul %9, %10, %cst_8 {dimension_numbers = #tpu.dot_dimension_numbers<[1], [0], [0], [1], [0, 0, 1, 1], [], []>} : vector<8x1024xbf16>, vector<1024x512xbf16>, vector<8x512xf32> -> vector<8x512xf32>
    %c0_9 = arith.constant 0 : index
    %c0_10 = arith.constant 0 : index
    %12 = vector.load %arg5[%c0_9, %c0_10] : memref<1x512xf32, #tpu.memory_space<vmem>>, vector<1x512xf32>
    %13 = vector.broadcast %12 : vector<1x512xf32> to vector<8x512xf32>
    %14 = arith.addf %11, %13 : vector<8x512xf32>
    %cst_11 = arith.constant 0.000000e+00 : f32
    %15 = vector.broadcast %cst_11 : f32 to vector<8x512xf32>
    %16 = arith.maximumf %14, %15 : vector<8x512xf32>
    %17 = arith.truncf %16 : vector<8x512xf32> to vector<8x512xbf16>
    %c0_12 = arith.constant 0 : index
    %c0_13 = arith.constant 0 : index
    %18 = vector.load %arg6[%c0_12, %c0_13] : memref<512x128xbf16, #tpu.memory_space<vmem>>, vector<512x128xbf16>
    %cst_14 = arith.constant dense<0.000000e+00> : vector<8x128xf32>
    %19 = tpu.matmul %17, %18, %cst_14 {dimension_numbers = #tpu.dot_dimension_numbers<[1], [0], [0], [1], [0, 0, 1, 1], [], []>} : vector<8x512xbf16>, vector<512x128xbf16>, vector<8x128xf32> -> vector<8x128xf32>
    %c0_15 = arith.constant 0 : index
    %c0_16 = arith.constant 0 : index
    %20 = vector.load %arg7[%c0_15, %c0_16] : memref<1x128xf32, #tpu.memory_space<vmem>>, vector<1x128xf32>
    %21 = vector.broadcast %20 : vector<1x128xf32> to vector<8x128xf32>
    %22 = arith.addf %19, %21 : vector<8x128xf32>
    %cst_17 = arith.constant 0.000000e+00 : f32
    %23 = vector.broadcast %cst_17 : f32 to vector<8x128xf32>
    %24 = arith.maximumf %22, %23 : vector<8x128xf32>
    %25 = arith.truncf %24 : vector<8x128xf32> to vector<8x128xbf16>
    %c0_18 = arith.constant 0 : index
    %c0_19 = arith.constant 0 : index
    %26 = vector.load %arg8[%c0_18, %c0_19] : memref<128x128xbf16, #tpu.memory_space<vmem>>, vector<128x128xbf16>
    %cst_20 = arith.constant dense<0.000000e+00> : vector<8x128xf32>
    %27 = tpu.matmul %25, %26, %cst_20 {dimension_numbers = #tpu.dot_dimension_numbers<[1], [0], [0], [1], [0, 0, 1, 1], [], []>} : vector<8x128xbf16>, vector<128x128xbf16>, vector<8x128xf32> -> vector<8x128xf32>
    %c0_21 = arith.constant 0 : index
    %c0_22 = arith.constant 0 : index
    %28 = vector.load %arg9[%c0_21, %c0_22] : memref<1x128xf32, #tpu.memory_space<vmem>>, vector<1x128xf32>
    %29 = vector.broadcast %28 : vector<1x128xf32> to vector<8x128xf32>
    %30 = arith.addf %27, %29 : vector<8x128xf32>
    %cst_23 = arith.constant dense<0xFF800000> : vector<8xf32>
    %31 = vector.multi_reduction <maximumf>, %30, %cst_23 [1] : vector<8x128xf32> to vector<8xf32>
    %32 = vector.shape_cast %31 : vector<8xf32> to vector<8x1xf32>
    %33 = vector.broadcast %32 : vector<8x1xf32> to vector<8x128xf32>
    %34 = arith.subf %30, %33 : vector<8x128xf32>
    %35 = math.exp %34 : vector<8x128xf32>
    %cst_24 = arith.constant dense<0.000000e+00> : vector<8xf32>
    %36 = vector.multi_reduction <add>, %35, %cst_24 [1] : vector<8x128xf32> to vector<8xf32>
    %37 = vector.shape_cast %36 : vector<8xf32> to vector<8x1xf32>
    %38 = math.log %37 : vector<8x1xf32>
    %39 = vector.broadcast %38 : vector<8x1xf32> to vector<8x128xf32>
    %40 = arith.subf %34, %39 : vector<8x128xf32>
    %c0_25 = arith.constant 0 : index
    %c0_26 = arith.constant 0 : index
    %41 = vector.load %arg10[%c0_25, %c0_26] : memref<8x128xf32, #tpu.memory_space<vmem>>, vector<8x128xf32>
    tpu.vector_store %arg10[%c0_25, %c0_26], %40 {strides = array<i32>} : memref<8x128xf32, #tpu.memory_space<vmem>>, vector<8x128xf32>,
    return
  }
  func.func @transform_0(%arg0: i32) -> (i32, i32) {
    %c0_i32 = arith.constant 0 : i32
    %c0_i32_0 = arith.constant 0 : i32
    return %arg0, %c0_i32 : i32, i32
  }
  func.func @transform_1(%arg0: i32) -> (i32, i32) {
    %c0_i32 = arith.constant 0 : i32
    %c0_i32_0 = arith.constant 0 : i32
    %c0_i32_1 = arith.constant 0 : i32
    return %c0_i32, %c0_i32_0 : i32, i32
  }
  func.func @transform_2(%arg0: i32) -> (i32, i32) {
    %c0_i32 = arith.constant 0 : i32
    %c0_i32_0 = arith.constant 0 : i32
    %c0_i32_1 = arith.constant 0 : i32
    return %c0_i32, %c0_i32_0 : i32, i32
  }
  func.func @transform_3(%arg0: i32) -> (i32, i32) {
    %c0_i32 = arith.constant 0 : i32
    %c0_i32_0 = arith.constant 0 : i32
    %c0_i32_1 = arith.constant 0 : i32
    return %c0_i32, %c0_i32_0 : i32, i32
  }
  func.func @transform_4(%arg0: i32) -> (i32, i32) {
    %c0_i32 = arith.constant 0 : i32
    %c0_i32_0 = arith.constant 0 : i32
    %c0_i32_1 = arith.constant 0 : i32
    return %c0_i32, %c0_i32_0 : i32, i32
  }
  func.func @transform_5(%arg0: i32) -> (i32, i32) {
    %c0_i32 = arith.constant 0 : i32
    %c0_i32_0 = arith.constant 0 : i32
    %c0_i32_1 = arith.constant 0 : i32
    return %c0_i32, %c0_i32_0 : i32, i32
  }
  func.func @transform_6(%arg0: i32) -> (i32, i32) {
    %c0_i32 = arith.constant 0 : i32
    %c0_i32_0 = arith.constant 0 : i32
    %c0_i32_1 = arith.constant 0 : i32
    return %c0_i32, %c0_i32_0 : i32, i32
  }
  func.func @transform_7(%arg0: i32) -> (i32, i32) {
    %c0_i32 = arith.constant 0 : i32
    %c0_i32_0 = arith.constant 0 : i32
    %c0_i32_1 = arith.constant 0 : i32
    return %c0_i32, %c0_i32_0 : i32, i32
  }
  func.func @transform_8(%arg0: i32) -> (i32, i32) {
    %c0_i32 = arith.constant 0 : i32
    %c0_i32_0 = arith.constant 0 : i32
    %c0_i32_1 = arith.constant 0 : i32
    return %c0_i32, %c0_i32_0 : i32, i32
  }
  func.func @transform_9(%arg0: i32) -> (i32, i32) {
    %c0_i32 = arith.constant 0 : i32
    %c0_i32_0 = arith.constant 0 : i32
    return %arg0, %c0_i32 : i32, i32
  }
}

</mosaic_0001>

<llo_original>
// kernel: tpu_custom_call.1
$region0: #{tpu_custom_call.1}
  #allocation0 [shape = 'u32[]', space=smem, size = 0x4, offset = 0x4, fixed_abs, tag = 'smem constant byte address 0x4 - core index']
  #allocation1 [shape = 'u32[144,128]{1,0:T(1,128)}', space=vmem, size = 0x12000, scoped, tag = 'internal scratch']
  %s0 = inlined_call_operand.hbm [shape: f32[2,784], index: 0, kind: input, shape index: {}]
  %s1 = inlined_call_operand.hbm [shape: bf16[784,1024], index: 1, kind: input, shape index: {}]
  %s2 = inlined_call_operand.hbm [shape: f32[1,1024], index: 2, kind: input, shape index: {}]
  %s3 = inlined_call_operand.hbm [shape: bf16[1024,512], index: 3, kind: input, shape index: {}]
  %s4 = inlined_call_operand.hbm [shape: f32[1,512], index: 4, kind: input, shape index: {}]
  %s5 = inlined_call_operand.hbm [shape: bf16[512,128], index: 5, kind: input, shape index: {}]
  %s6 = inlined_call_operand.hbm [shape: f32[1,128], index: 6, kind: input, shape index: {}]
  %s7 = inlined_call_operand.hbm [shape: bf16[128,128], index: 7, kind: input, shape index: {}]
  %s8 = inlined_call_operand.hbm [shape: f32[1,128], index: 8, kind: input, shape index: {}]
  %s9 = inlined_call_operand.hbm [shape: f32[2,128], index: 9, kind: output, shape index: {}]
  %s10 = sld [smem:[#allocation0]]
  $region82: #{tpu_custom_call.1} parent=0
    _
  %s12 = ssub.s32 1, %s10
  %s13 = scalar_select 0, %s12, %s10
  $region1: #{tpu_custom_call.1} parent=0
    #allocation2 [shape = 'u8[28672]{0}', space=vmem, size = 0x7000, scoped, tag = 'input window, operand 0, single buffered']
    #allocation3 [shape = 's32[1]{0}', space=sflag, size = 0x4, scoped, tag = 'scoped memory for tpu_custom_call.1']
    #allocation4 [shape = 's32[1]{0}', space=sflag, size = 0x4, scoped, tag = 'scoped memory for tpu_custom_call.1']
    #allocation5 [shape = 'u8[1605632]{0}', space=vmem, size = 0x188000, scoped, tag = 'input window, operand 1, single buffered']
    #allocation6 [shape = 's32[1]{0}', space=sflag, size = 0x4, scoped, tag = 'scoped memory for tpu_custom_call.1']
    #allocation7 [shape = 'u8[4096]{0}', space=vmem, size = 0x1000, scoped, tag = 'input window, operand 2, single buffered']
    #allocation8 [shape = 'u8[1048576]{0}', space=vmem, size = 0x100000, scoped, tag = 'input window, operand 3, single buffered']
    #allocation9 [shape = 's32[1]{0}', space=sflag, size = 0x4, scoped, tag = 'scoped memory for tpu_custom_call.1']
    #allocation10 [shape = 'u8[2048]{0}', space=vmem, size = 0x800, scoped, tag = 'input window, operand 4, single buffered']
    #allocation11 [shape = 'u8[131072]{0}', space=vmem, size = 0x20000, scoped, tag = 'input window, operand 5, single buffered']
    #allocation12 [shape = 's32[1]{0}', space=sflag, size = 0x4, scoped, tag = 'scoped memory for tpu_custom_call.1']
    #allocation13 [shape = 'u8[512]{0}', space=vmem, size = 0x400, scoped, tag = 'input window, operand 6, single buffered']
    #allocation14 [shape = 'u8[32768]{0}', space=vmem, size = 0x8000, scoped, tag = 'input window, operand 7, single buffered']
    #allocation15 [shape = 's32[1]{0}', space=sflag, size = 0x4, scoped, tag = 'scoped memory for tpu_custom_call.1']
    #allocation16 [shape = 'u8[512]{0}', space=vmem, size = 0x400, scoped, tag = 'input window, operand 8, single buffered']
    #allocation17 [shape = 'u8[4096]{0}', space=vmem, size = 0x1000, scoped, tag = 'output window, operand 0, single buffered']
    %14 = vsyncpa [#allocation3], 0
    %15 = vsyncpa [#allocation6], 0
    %16 = vsyncpa [#allocation9], 0
    %17 = vsyncpa [#allocation12], 0
    %18 = vsyncpa [#allocation15], 0
    %19 = vsyncpa [#allocation4], 0
    // Predicated region
    $region2: #{tpu_custom_call.1} parent=1 // pred_check
      _
    $region3: #{tpu_custom_call.1} parent=1 // pred_check_branch
      %21 = sbr.rel (0) target = $region5
    $region4: #{tpu_custom_call.1} parent=1 // pred_region
      %s23 = ssub.s32 896, 224
      %24 = vsyncadd [#allocation3], %s23
      %s25 = sshll.u32 [#allocation2], 4
      %s26 = int_to_ptr.vmem [resolvable:$true] %s25
      %31 = dma.hbm_to_vmem [thread:$0]  %s0, 224, %s26, [#allocation3], 224, 224, 14
    $region5: #{tpu_custom_call.1} parent=1 // pred_fallthru
      _
    // Predicated region
    $region6: #{tpu_custom_call.1} parent=1 // pred_check
      _
    $region7: #{tpu_custom_call.1} parent=1 // pred_check_branch
      %33 = sbr.rel (0) target = $region9
    $region8: #{tpu_custom_call.1} parent=1 // pred_region
      %s35 = ssub.s32 50176, 50176
      %36 = vsyncadd [#allocation6], %s35
      %s37 = sshll.u32 [#allocation5], 4
      %s38 = int_to_ptr.vmem [resolvable:$true] %s37
      %43 = dma.hbm_to_vmem [thread:$0]  %s1, 50176, %s38, [#allocation6], 512, 512, 32
    $region9: #{tpu_custom_call.1} parent=1 // pred_fallthru
      _
    // Predicated region
    $region10: #{tpu_custom_call.1} parent=1 // pred_check
      _
    $region11: #{tpu_custom_call.1} parent=1 // pred_check_branch
      %45 = sbr.rel (0) target = $region13
    $region12: #{tpu_custom_call.1} parent=1 // pred_region
      %s47 = ssub.s32 128, 128
      %48 = vsyncadd [#allocation6], %s47
      %s50 = sshll.u32 [#allocation7], 4
      %s51 = int_to_ptr.vmem [resolvable:$true] %s50
      %53 = dma.hbm_to_vmem [thread:$0]  %s2, 128, %s51, [#allocation6]
    $region13: #{tpu_custom_call.1} parent=1 // pred_fallthru
      _
    // Predicated region
    $region14: #{tpu_custom_call.1} parent=1 // pred_check
      _
    $region15: #{tpu_custom_call.1} parent=1 // pred_check_branch
      %55 = sbr.rel (0) target = $region17
    $region16: #{tpu_custom_call.1} parent=1 // pred_region
      %s57 = ssub.s32 32768, 32768
      %58 = vsyncadd [#allocation9], %s57
      %s59 = sshll.u32 [#allocation8], 4
      %s60 = int_to_ptr.vmem [resolvable:$true] %s59
      %65 = dma.hbm_to_vmem [thread:$0]  %s3, 32768, %s60, [#allocation9], 256, 256, 16
    $region17: #{tpu_custom_call.1} parent=1 // pred_fallthru
      _
    // Predicated region
    $region18: #{tpu_custom_call.1} parent=1 // pred_check
      _
    $region19: #{tpu_custom_call.1} parent=1 // pred_check_branch
      %67 = sbr.rel (0) target = $region21
    $region20: #{tpu_custom_call.1} parent=1 // pred_region
      %s69 = ssub.s32 64, 64
      %70 = vsyncadd [#allocation9], %s69
      %s72 = sshll.u32 [#allocation10], 4
      %s73 = int_to_ptr.vmem [resolvable:$true] %s72
      %75 = dma.hbm_to_vmem [thread:$0]  %s4, 64, %s73, [#allocation9]
    $region21: #{tpu_custom_call.1} parent=1 // pred_fallthru
      _
    // Predicated region
    $region22: #{tpu_custom_call.1} parent=1 // pred_check
      _
    $region23: #{tpu_custom_call.1} parent=1 // pred_check_branch
      %77 = sbr.rel (0) target = $region25
    $region24: #{tpu_custom_call.1} parent=1 // pred_region
      %s79 = ssub.s32 4096, 4096
      %80 = vsyncadd [#allocation12], %s79
      %s81 = sshll.u32 [#allocation11], 4
      %s82 = int_to_ptr.vmem [resolvable:$true] %s81
      %87 = dma.hbm_to_vmem [thread:$0]  %s5, 4096, %s82, [#allocation12], 64, 64, 4
    $region25: #{tpu_custom_call.1} parent=1 // pred_fallthru
      _
    // Predicated region
    $region26: #{tpu_custom_call.1} parent=1 // pred_check
      _
    $region27: #{tpu_custom_call.1} parent=1 // pred_check_branch
      %89 = sbr.rel (0) target = $region29
    $region28: #{tpu_custom_call.1} parent=1 // pred_region
      %s91 = ssub.s32 16, 16
      %92 = vsyncadd [#allocation12], %s91
      %s94 = sshll.u32 [#allocation13], 4
      %s95 = int_to_ptr.vmem [resolvable:$true] %s94
      %97 = dma.hbm_to_vmem [thread:$0]  %s6, 16, %s95, [#allocation12]
    $region29: #{tpu_custom_call.1} parent=1 // pred_fallthru
      _
    // Predicated region
    $region30: #{tpu_custom_call.1} parent=1 // pred_check
      _
    $region31: #{tpu_custom_call.1} parent=1 // pred_check_branch
      %99 = sbr.rel (0) target = $region33
    $region32: #{tpu_custom_call.1} parent=1 // pred_region
      %s101 = ssub.s32 1024, 1024
      %102 = vsyncadd [#allocation15], %s101
      %s103 = sshll.u32 [#allocation14], 4
      %s104 = int_to_ptr.vmem [resolvable:$true] %s103
      %109 = dma.hbm_to_vmem [thread:$0]  %s7, 1024, %s104, [#allocation15], 64, 64, 4
    $region33: #{tpu_custom_call.1} parent=1 // pred_fallthru
      _
    // Predicated region
    $region34: #{tpu_custom_call.1} parent=1 // pred_check
      _
    $region35: #{tpu_custom_call.1} parent=1 // pred_check_branch
      %111 = sbr.rel (0) target = $region37
    $region36: #{tpu_custom_call.1} parent=1 // pred_region
      %s113 = ssub.s32 16, 16
      %114 = vsyncadd [#allocation15], %s113
      %s116 = sshll.u32 [#allocation16], 4
      %s117 = int_to_ptr.vmem [resolvable:$true] %s116
      %119 = dma.hbm_to_vmem [thread:$0]  %s8, 16, %s117, [#allocation15]
    $region37: #{tpu_custom_call.1} parent=1 // pred_fallthru
      _
    // Predicated region
    $region38: #{tpu_custom_call.1} parent=1 // pred_check
      _
    $region39: #{tpu_custom_call.1} parent=1 // pred_check_branch
      %121 = sbr.rel (0) target = $region41
    $region40: #{tpu_custom_call.1} parent=1 // pred_region
      %122 = dma.done [#allocation3], 896
    $region41: #{tpu_custom_call.1} parent=1 // pred_fallthru
      _
    // Predicated region
    $region42: #{tpu_custom_call.1} parent=1 // pred_check
      _
    $region43: #{tpu_custom_call.1} parent=1 // pred_check_branch
      %124 = sbr.rel (0) target = $region45
    $region44: #{tpu_custom_call.1} parent=1 // pred_region
      %125 = dma.done [#allocation6], 50176
    $region45: #{tpu_custom_call.1} parent=1 // pred_fallthru
      _
    // Predicated region
    $region46: #{tpu_custom_call.1} parent=1 // pred_check
      _
    $region47: #{tpu_custom_call.1} parent=1 // pred_check_branch
      %127 = sbr.rel (0) target = $region49
    $region48: #{tpu_custom_call.1} parent=1 // pred_region
      %128 = dma.done [#allocation6], 128
    $region49: #{tpu_custom_call.1} parent=1 // pred_fallthru
      _
    // Predicated region
    $region50: #{tpu_custom_call.1} parent=1 // pred_check
      _
    $region51: #{tpu_custom_call.1} parent=1 // pred_check_branch
      %130 = sbr.rel (0) target = $region53
    $region52: #{tpu_custom_call.1} parent=1 // pred_region
      %131 = dma.done [#allocation9], 32768
    $region53: #{tpu_custom_call.1} parent=1 // pred_fallthru
      _
    // Predicated region
    $region54: #{tpu_custom_call.1} parent=1 // pred_check
      _
    $region55: #{tpu_custom_call.1} parent=1 // pred_check_branch
      %133 = sbr.rel (0) target = $region57
    $region56: #{tpu_custom_call.1} parent=1 // pred_region
      %134 = dma.done [#allocation9], 64
    $region57: #{tpu_custom_call.1} parent=1 // pred_fallthru
      _
    // Predicated region
    $region58: #{tpu_custom_call.1} parent=1 // pred_check
      _
    $region59: #{tpu_custom_call.1} parent=1 // pred_check_branch
      %136 = sbr.rel (0) target = $region61
    $region60: #{tpu_custom_call.1} parent=1 // pred_region
      %137 = dma.done [#allocation12], 4096
    $region61: #{tpu_custom_call.1} parent=1 // pred_fallthru
      _
    // Predicated region
    $region62: #{tpu_custom_call.1} parent=1 // pred_check
      _
    $region63: #{tpu_custom_call.1} parent=1 // pred_check_branch
      %139 = sbr.rel (0) target = $region65
    $region64: #{tpu_custom_call.1} parent=1 // pred_region
      %140 = dma.done [#allocation12], 16
    $region65: #{tpu_custom_call.1} parent=1 // pred_fallthru
      _
    // Predicated region
    $region66: #{tpu_custom_call.1} parent=1 // pred_check
      _
    $region67: #{tpu_custom_call.1} parent=1 // pred_check_branch
      %142 = sbr.rel (0) target = $region69
    $region68: #{tpu_custom_call.1} parent=1 // pred_region
      %143 = dma.done [#allocation15], 1024
    $region69: #{tpu_custom_call.1} parent=1 // pred_fallthru
      _
    // Predicated region
    $region70: #{tpu_custom_call.1} parent=1 // pred_check
      _
    $region71: #{tpu_custom_call.1} parent=1 // pred_check_branch
      %145 = sbr.rel (0) target = $region73
    $region72: #{tpu_custom_call.1} parent=1 // pred_region
      %146 = dma.done [#allocation15], 16
    $region73: #{tpu_custom_call.1} parent=1 // pred_fallthru
      _
    %v148 = vld [vmem:[#allocation2] sm:$0xff]
    %v149 = vld [vmem:[#allocation2 + $0x8] sm:$0x3f]
    %v150 = vld [vmem:[#allocation2 + $0xe] sm:$0xff]
    %v151 = vld [vmem:[#allocation2 + $0x16] sm:$0x3f]
    %v152 = vld [vmem:[#allocation2 + $0x1c] sm:$0xff]
    %v153 = vld [vmem:[#allocation2 + $0x24] sm:$0x3f]
    %v154 = vld [vmem:[#allocation2 + $0x2a] sm:$0xff]
    %v155 = vld [vmem:[#allocation2 + $0x32] sm:$0x3f]
    %v164 = vcombine.low %v148, %v150
    %v165 = vcombine.high %v148, %v150
    %v166 = vcombine.low %v152, %v154
    %v167 = vcombine.high %v152, %v154
    %v169 = vunpack.c.l.s4 1983009808
    %v170 = vunpack.c.0.s8 %v169
    %v171 = vlaneseq
    %v172 = vshrl.u32 %v171, 7
    %v173 = vsub.s32 %v170, %v172
    %v174 = vrot.slane %v164, %v173
    %v176 = vunpack.c.l.s4 1983009808
    %v177 = vunpack.c.0.s8 %v176
    %v178 = vlaneseq
    %v179 = vshrl.u32 %v178, 7
    %v180 = vsub.s32 %v177, %v179
    %v181 = vrot.slane %v165, %v180
    %v183 = vunpack.c.l.s4 1983009808
    %v184 = vunpack.c.0.s8 %v183
    %v185 = vlaneseq
    %v186 = vshrl.u32 %v185, 7
    %v187 = vsub.s32 %v184, %v186
    %v188 = vrot.slane %v166, %v187
    %v190 = vunpack.c.l.s4 1983009808
    %v191 = vunpack.c.0.s8 %v190
    %v192 = vlaneseq
    %v193 = vshrl.u32 %v192, 7
    %v194 = vsub.s32 %v191, %v193
    %v195 = vrot.slane %v167, %v194
    %v196 = vcombine.low %v174, %v188
    %v197 = vcombine.high %v174, %v188
    %v198 = vcombine.low %v181, %v195
    %v199 = vcombine.high %v181, %v195
    %v200 = vcombine.low %v149, %v151
    %v201 = vcombine.high %v149, %v151
    %v202 = vcombine.low %v153, %v155
    %v203 = vcombine.high %v153, %v155
    %v205 = vunpack.c.l.s4 1983009808
    %v206 = vunpack.c.0.s8 %v205
    %v207 = vlaneseq
    %v208 = vshrl.u32 %v207, 7
    %v209 = vsub.s32 %v206, %v208
    %v210 = vrot.slane %v200, %v209
    %v212 = vunpack.c.l.s4 1983009808
    %v213 = vunpack.c.0.s8 %v212
    %v214 = vlaneseq
    %v215 = vshrl.u32 %v214, 7
    %v216 = vsub.s32 %v213, %v215
    %v217 = vrot.slane %v201, %v216
    %v219 = vunpack.c.l.s4 1983009808
    %v220 = vunpack.c.0.s8 %v219
    %v221 = vlaneseq
    %v222 = vshrl.u32 %v221, 7
    %v223 = vsub.s32 %v220, %v222
    %v224 = vrot.slane %v202, %v223
    %v226 = vunpack.c.l.s4 1983009808
    %v227 = vunpack.c.0.s8 %v226
    %v228 = vlaneseq
    %v229 = vshrl.u32 %v228, 7
    %v230 = vsub.s32 %v227, %v229
    %v231 = vrot.slane %v203, %v230
    %v232 = vcombine.low %v210, %v224
    %v233 = vcombine.high %v210, %v224
    %v234 = vcombine.low %v217, %v231
    %v242 = vpack.c.bf16 %v196, %v196
    %v243 = vpack.c.bf16 %v197, %v197
    %v244 = vpack.c.bf16 %v198, %v198
    %v245 = vpack.c.bf16 %v199, %v199
    %v246 = vpack.c.bf16 %v232, %v232
    %v247 = vpack.c.bf16 %v233, %v233
    %v248 = vpack.c.bf16 %v234, %v234
    %v249 = vld [vmem:[#allocation5] sm:$0xff]
    %v250 = vld [vmem:[#allocation5 + $0x8] sm:$0xff]
    %v251 = vld [vmem:[#allocation5 + $0x10] sm:$0xff]
    %v252 = vld [vmem:[#allocation5 + $0x18] sm:$0xff]
    %v253 = vld [vmem:[#allocation5 + $0x20] sm:$0xff]
    %v254 = vld [vmem:[#allocation5 + $0x28] sm:$0xff]
    %v255 = vld [vmem:[#allocation5 + $0x30] sm:$0xff]
    %v256 = vld [vmem:[#allocation5 + $0x38] sm:$0xff]
    %v257 = vld [vmem:[#allocation5 + $0x40] sm:$0xff]
    %v258 = vld [vmem:[#allocation5 + $0x48] sm:$0xff]
    %v259 = vld [vmem:[#allocation5 + $0x50] sm:$0xff]
    %v260 = vld [vmem:[#allocation5 + $0x58] sm:$0xff]
    %v261 = vld [vmem:[#allocation5 + $0x60] sm:$0xff]
    %v262 = vld [vmem:[#allocation5 + $0x68] sm:$0xff]
    %v263 = vld [vmem:[#allocation5 + $0x70] sm:$0xff]
    %v264 = vld [vmem:[#allocation5 + $0x78] sm:$0xff]
    %v265 = vld [vmem:[#allocation5 + $0x80] sm:$0xff]
    %v266 = vld [vmem:[#allocation5 + $0x88] sm:$0xff]
    %v267 = vld [vmem:[#allocation5 + $0x90] sm:$0xff]
    %v268 = vld [vmem:[#allocation5 + $0x98] sm:$0xff]
    %v269 = vld [vmem:[#allocation5 + $0xa0] sm:$0xff]
    %v270 = vld [vmem:[#allocation5 + $0xa8] sm:$0xff]
    %v271 = vld [vmem:[#allocation5 + $0xb0] sm:$0xff]
    %v272 = vld [vmem:[#allocation5 + $0xb8] sm:$0xff]
    %v273 = vld [vmem:[#allocation5 + $0xc0] sm:$0xff]
    %v274 = vld [vmem:[#allocation5 + $0xc8] sm:$0xff]
    %v275 = vld [vmem:[#allocation5 + $0xd0] sm:$0xff]
    %v276 = vld [vmem:[#allocation5 + $0xd8] sm:$0xff]
    %v277 = vld [vmem:[#allocation5 + $0xe0] sm:$0xff]
    %v278 = vld [vmem:[#allocation5 + $0xe8] sm:$0xff]
    %v279 = vld [vmem:[#allocation5 + $0xf0] sm:$0xff]
    %v280 = vld [vmem:[#allocation5 + $0xf8] sm:$0xff]
    %v281 = vld [vmem:[#allocation5 + $0x100] sm:$0xff]
    %v282 = vld [vmem:[#allocation5 + $0x108] sm:$0xff]
    %v283 = vld [vmem:[#allocation5 + $0x110] sm:$0xff]
    %v284 = vld [vmem:[#allocation5 + $0x118] sm:$0xff]
    %v285 = vld [vmem:[#allocation5 + $0x120] sm:$0xff]
    %v286 = vld [vmem:[#allocation5 + $0x128] sm:$0xff]
    %v287 = vld [vmem:[#allocation5 + $0x130] sm:$0xff]
    %v288 = vld [vmem:[#allocation5 + $0x138] sm:$0xff]
    %v289 = vld [vmem:[#allocation5 + $0x140] sm:$0xff]
    %v290 = vld [vmem:[#allocation5 + $0x148] sm:$0xff]
    %v291 = vld [vmem:[#allocation5 + $0x150] sm:$0xff]
    %v292 = vld [vmem:[#allocation5 + $0x158] sm:$0xff]
    %v293 = vld [vmem:[#allocation5 + $0x160] sm:$0xff]
    %v294 = vld [vmem:[#allocation5 + $0x168] sm:$0xff]
    %v295 = vld [vmem:[#allocation5 + $0x170] sm:$0xff]
    %v296 = vld [vmem:[#allocation5 + $0x178] sm:$0xff]
    %v297 = vld [vmem:[#allocation5 + $0x180] sm:$0xff]
    %v298 = vld [vmem:[#allocation5 + $0x188] sm:$0xff]
    %v299 = vld [vmem:[#allocation5 + $0x190] sm:$0xff]
    %v300 = vld [vmem:[#allocation5 + $0x198] sm:$0xff]
    %v301 = vld [vmem:[#allocation5 + $0x1a0] sm:$0xff]
    %v302 = vld [vmem:[#allocation5 + $0x1a8] sm:$0xff]
    %v303 = vld [vmem:[#allocation5 + $0x1b0] sm:$0xff]
    %v304 = vld [vmem:[#allocation5 + $0x1b8] sm:$0xff]
    %v305 = vld [vmem:[#allocation5 + $0x1c0] sm:$0xff]
    %v306 = vld [vmem:[#allocation5 + $0x1c8] sm:$0xff]
    %v307 = vld [vmem:[#allocation5 + $0x1d0] sm:$0xff]
    %v308 = vld [vmem:[#allocation5 + $0x1d8] sm:$0xff]
    %v309 = vld [vmem:[#allocation5 + $0x1e0] sm:$0xff]
    %v310 = vld [vmem:[#allocation5 + $0x1e8] sm:$0xff]
    %v311 = vld [vmem:[#allocation5 + $0x1f0] sm:$0xff]
    %v312 = vld [vmem:[#allocation5 + $0x1f8] sm:$0xff]
    %v313 = vld [vmem:[#allocation5 + $0x200] sm:$0xff]
    %v314 = vld [vmem:[#allocation5 + $0x208] sm:$0xff]
    %v315 = vld [vmem:[#allocation5 + $0x210] sm:$0xff]
    %v316 = vld [vmem:[#allocation5 + $0x218] sm:$0xff]
    %v317 = vld [vmem:[#allocation5 + $0x220] sm:$0xff]
    %v318 = vld [vmem:[#allocation5 + $0x228] sm:$0xff]
    %v319 = vld [vmem:[#allocation5 + $0x230] sm:$0xff]
    %v320 = vld [vmem:[#allocation5 + $0x238] sm:$0xff]
    %v321 = vld [vmem:[#allocation5 + $0x240] sm:$0xff]
    %v322 = vld [vmem:[#allocation5 + $0x248] sm:$0xff]
    %v323 = vld [vmem:[#allocation5 + $0x250] sm:$0xff]
    %v324 = vld [vmem:[#allocation5 + $0x258] sm:$0xff]
    %v325 = vld [vmem:[#allocation5 + $0x260] sm:$0xff]
    %v326 = vld [vmem:[#allocation5 + $0x268] sm:$0xff]
    %v327 = vld [vmem:[#allocation5 + $0x270] sm:$0xff]
    %v328 = vld [vmem:[#allocation5 + $0x278] sm:$0xff]
    %v329 = vld [vmem:[#allocation5 + $0x280] sm:$0xff]
    %v330 = vld [vmem:[#allocation5 + $0x288] sm:$0xff]
    %v331 = vld [vmem:[#allocation5 + $0x290] sm:$0xff]
    %v332 = vld [vmem:[#allocation5 + $0x298] sm:$0xff]
    %v333 = vld [vmem:[#allocation5 + $0x2a0] sm:$0xff]
    %v334 = vld [vmem:[#allocation5 + $0x2a8] sm:$0xff]
    %v335 = vld [vmem:[#allocation5 + $0x2b0] sm:$0xff]
    %v336 = vld [vmem:[#allocation5 + $0x2b8] sm:$0xff]
    %v337 = vld [vmem:[#allocation5 + $0x2c0] sm:$0xff]
    %v338 = vld [vmem:[#allocation5 + $0x2c8] sm:$0xff]
    %v339 = vld [vmem:[#allocation5 + $0x2d0] sm:$0xff]
    %v340 = vld [vmem:[#allocation5 + $0x2d8] sm:$0xff]
    %v341 = vld [vmem:[#allocation5 + $0x2e0] sm:$0xff]
    %v342 = vld [vmem:[#allocation5 + $0x2e8] sm:$0xff]
    %v343 = vld [vmem:[#allocation5 + $0x2f0] sm:$0xff]
    %v344 = vld [vmem:[#allocation5 + $0x2f8] sm:$0xff]
    %v345 = vld [vmem:[#allocation5 + $0x300] sm:$0xff]
    %v346 = vld [vmem:[#allocation5 + $0x308] sm:$0xff]
    %v347 = vld [vmem:[#allocation5 + $0x310] sm:$0xff]
    %v348 = vld [vmem:[#allocation5 + $0x318] sm:$0xff]
    %v349 = vld [vmem:[#allocation5 + $0x320] sm:$0xff]
    %v350 = vld [vmem:[#allocation5 + $0x328] sm:$0xff]
    %v351 = vld [vmem:[#allocation5 + $0x330] sm:$0xff]
    %v352 = vld [vmem:[#allocation5 + $0x338] sm:$0xff]
    %v353 = vld [vmem:[#allocation5 + $0x340] sm:$0xff]
    %v354 = vld [vmem:[#allocation5 + $0x348] sm:$0xff]
    %v355 = vld [vmem:[#allocation5 + $0x350] sm:$0xff]
    %v356 = vld [vmem:[#allocation5 + $0x358] sm:$0xff]
    %v357 = vld [vmem:[#allocation5 + $0x360] sm:$0xff]
    %v358 = vld [vmem:[#allocation5 + $0x368] sm:$0xff]
    %v359 = vld [vmem:[#allocation5 + $0x370] sm:$0xff]
    %v360 = vld [vmem:[#allocation5 + $0x378] sm:$0xff]
    %v361 = vld [vmem:[#allocation5 + $0x380] sm:$0xff]
    %v362 = vld [vmem:[#allocation5 + $0x388] sm:$0xff]
    %v363 = vld [vmem:[#allocation5 + $0x390] sm:$0xff]
    %v364 = vld [vmem:[#allocation5 + $0x398] sm:$0xff]
    %v365 = vld [vmem:[#allocation5 + $0x3a0] sm:$0xff]
    %v366 = vld [vmem:[#allocation5 + $0x3a8] sm:$0xff]
    %v367 = vld [vmem:[#allocation5 + $0x3b0] sm:$0xff]
    %v368 = vld [vmem:[#allocation5 + $0x3b8] sm:$0xff]
    %v369 = vld [vmem:[#allocation5 + $0x3c0] sm:$0xff]
    %v370 = vld [vmem:[#allocation5 + $0x3c8] sm:$0xff]
    %v371 = vld [vmem:[#allocation5 + $0x3d0] sm:$0xff]
    %v372 = vld [vmem:[#allocation5 + $0x3d8] sm:$0xff]
    %v373 = vld [vmem:[#allocation5 + $0x3e0] sm:$0xff]
    %v374 = vld [vmem:[#allocation5 + $0x3e8] sm:$0xff]
    %v375 = vld [vmem:[#allocation5 + $0x3f0] sm:$0xff]
    %v376 = vld [vmem:[#allocation5 + $0x3f8] sm:$0xff]
    %v377 = vld [vmem:[#allocation5 + $0x400] sm:$0xff]
    %v378 = vld [vmem:[#allocation5 + $0x408] sm:$0xff]
    %v379 = vld [vmem:[#allocation5 + $0x410] sm:$0xff]
    %v380 = vld [vmem:[#allocation5 + $0x418] sm:$0xff]
    %v381 = vld [vmem:[#allocation5 + $0x420] sm:$0xff]
    %v382 = vld [vmem:[#allocation5 + $0x428] sm:$0xff]
    %v383 = vld [vmem:[#allocation5 + $0x430] sm:$0xff]
    %v384 = vld [vmem:[#allocation5 + $0x438] sm:$0xff]
    %v385 = vld [vmem:[#allocation5 + $0x440] sm:$0xff]
    %v386 = vld [vmem:[#allocation5 + $0x448] sm:$0xff]
    %v387 = vld [vmem:[#allocation5 + $0x450] sm:$0xff]
    %v388 = vld [vmem:[#allocation5 + $0x458] sm:$0xff]
    %v389 = vld [vmem:[#allocation5 + $0x460] sm:$0xff]
    %v390 = vld [vmem:[#allocation5 + $0x468] sm:$0xff]
    %v391 = vld [vmem:[#allocation5 + $0x470] sm:$0xff]
    %v392 = vld [vmem:[#allocation5 + $0x478] sm:$0xff]
    %v393 = vld [vmem:[#allocation5 + $0x480] sm:$0xff]
    %v394 = vld [vmem:[#allocation5 + $0x488] sm:$0xff]
    %v395 = vld [vmem:[#allocation5 + $0x490] sm:$0xff]
    %v396 = vld [vmem:[#allocation5 + $0x498] sm:$0xff]
    %v397 = vld [vmem:[#allocation5 + $0x4a0] sm:$0xff]
    %v398 = vld [vmem:[#allocation5 + $0x4a8] sm:$0xff]
    %v399 = vld [vmem:[#allocation5 + $0x4b0] sm:$0xff]
    %v400 = vld [vmem:[#allocation5 + $0x4b8] sm:$0xff]
    %v401 = vld [vmem:[#allocation5 + $0x4c0] sm:$0xff]
    %v402 = vld [vmem:[#allocation5 + $0x4c8] sm:$0xff]
    %v403 = vld [vmem:[#allocation5 + $0x4d0] sm:$0xff]
    %v404 = vld [vmem:[#allocation5 + $0x4d8] sm:$0xff]
    %v405 = vld [vmem:[#allocation5 + $0x4e0] sm:$0xff]
    %v406 = vld [vmem:[#allocation5 + $0x4e8] sm:$0xff]
    %v407 = vld [vmem:[#allocation5 + $0x4f0] sm:$0xff]
    %v408 = vld [vmem:[#allocation5 + $0x4f8] sm:$0xff]
    %v409 = vld [vmem:[#allocation5 + $0x500] sm:$0xff]
    %v410 = vld [vmem:[#allocation5 + $0x508] sm:$0xff]
    %v411 = vld [vmem:[#allocation5 + $0x510] sm:$0xff]
    %v412 = vld [vmem:[#allocation5 + $0x518] sm:$0xff]
    %v413 = vld [vmem:[#allocation5 + $0x520] sm:$0xff]
    %v414 = vld [vmem:[#allocation5 + $0x528] sm:$0xff]
    %v415 = vld [vmem:[#allocation5 + $0x530] sm:$0xff]
    %v416 = vld [vmem:[#allocation5 + $0x538] sm:$0xff]
    %v417 = vld [vmem:[#allocation5 + $0x540] sm:$0xff]
    %v418 = vld [vmem:[#allocation5 + $0x548] sm:$0xff]
    %v419 = vld [vmem:[#allocation5 + $0x550] sm:$0xff]
    %v420 = vld [vmem:[#allocation5 + $0x558] sm:$0xff]
    %v421 = vld [vmem:[#allocation5 + $0x560] sm:$0xff]
    %v422 = vld [vmem:[#allocation5 + $0x568] sm:$0xff]
    %v423 = vld [vmem:[#allocation5 + $0x570] sm:$0xff]
    %v424 = vld [vmem:[#allocation5 + $0x578] sm:$0xff]
    %v425 = vld [vmem:[#allocation5 + $0x580] sm:$0xff]
    %v426 = vld [vmem:[#allocation5 + $0x588] sm:$0xff]
    %v427 = vld [vmem:[#allocation5 + $0x590] sm:$0xff]
    %v428 = vld [vmem:[#allocation5 + $0x598] sm:$0xff]
    %v429 = vld [vmem:[#allocation5 + $0x5a0] sm:$0xff]
    %v430 = vld [vmem:[#allocation5 + $0x5a8] sm:$0xff]
    %v431 = vld [vmem:[#allocation5 + $0x5b0] sm:$0xff]
    %v432 = vld [vmem:[#allocation5 + $0x5b8] sm:$0xff]
    %v433 = vld [vmem:[#allocation5 + $0x5c0] sm:$0xff]
    %v434 = vld [vmem:[#allocation5 + $0x5c8] sm:$0xff]
    %v435 = vld [vmem:[#allocation5 + $0x5d0] sm:$0xff]
    %v436 = vld [vmem:[#allocation5 + $0x5d8] sm:$0xff]
    %v437 = vld [vmem:[#allocation5 + $0x5e0] sm:$0xff]
    %v438 = vld [vmem:[#allocation5 + $0x5e8] sm:$0xff]
    %v439 = vld [vmem:[#allocation5 + $0x5f0] sm:$0xff]
    %v440 = vld [vmem:[#allocation5 + $0x5f8] sm:$0xff]
    %v441 = vld [vmem:[#allocation5 + $0x600] sm:$0xff]
    %v442 = vld [vmem:[#allocation5 + $0x608] sm:$0xff]
    %v443 = vld [vmem:[#allocation5 + $0x610] sm:$0xff]
    %v444 = vld [vmem:[#allocation5 + $0x618] sm:$0xff]
    %v445 = vld [vmem:[#allocation5 + $0x620] sm:$0xff]
    %v446 = vld [vmem:[#allocation5 + $0x628] sm:$0xff]
    %v447 = vld [vmem:[#allocation5 + $0x630] sm:$0xff]
    %v448 = vld [vmem:[#allocation5 + $0x638] sm:$0xff]
    %v449 = vld [vmem:[#allocation5 + $0x640] sm:$0xff]
    %v450 = vld [vmem:[#allocation5 + $0x648] sm:$0xff]
    %v451 = vld [vmem:[#allocation5 + $0x650] sm:$0xff]
    %v452 = vld [vmem:[#allocation5 + $0x658] sm:$0xff]
    %v453 = vld [vmem:[#allocation5 + $0x660] sm:$0xff]
    %v454 = vld [vmem:[#allocation5 + $0x668] sm:$0xff]
    %v455 = vld [vmem:[#allocation5 + $0x670] sm:$0xff]
    %v456 = vld [vmem:[#allocation5 + $0x678] sm:$0xff]
    %v457 = vld [vmem:[#allocation5 + $0x680] sm:$0xff]
    %v458 = vld [vmem:[#allocation5 + $0x688] sm:$0xff]
    %v459 = vld [vmem:[#allocation5 + $0x690] sm:$0xff]
    %v460 = vld [vmem:[#allocation5 + $0x698] sm:$0xff]
    %v461 = vld [vmem:[#allocation5 + $0x6a0] sm:$0xff]
    %v462 = vld [vmem:[#allocation5 + $0x6a8] sm:$0xff]
    %v463 = vld [vmem:[#allocation5 + $0x6b0] sm:$0xff]
    %v464 = vld [vmem:[#allocation5 + $0x6b8] sm:$0xff]
    %v465 = vld [vmem:[#allocation5 + $0x6c0] sm:$0xff]
    %v466 = vld [vmem:[#allocation5 + $0x6c8] sm:$0xff]
    %v467 = vld [vmem:[#allocation5 + $0x6d0] sm:$0xff]
    %v468 = vld [vmem:[#allocation5 + $0x6d8] sm:$0xff]
    %v469 = vld [vmem:[#allocation5 + $0x6e0] sm:$0xff]
    %v470 = vld [vmem:[#allocation5 + $0x6e8] sm:$0xff]
    %v471 = vld [vmem:[#allocation5 + $0x6f0] sm:$0xff]
    %v472 = vld [vmem:[#allocation5 + $0x6f8] sm:$0xff]
    %v473 = vld [vmem:[#allocation5 + $0x700] sm:$0xff]
    %v474 = vld [vmem:[#allocation5 + $0x708] sm:$0xff]
    %v475 = vld [vmem:[#allocation5 + $0x710] sm:$0xff]
    %v476 = vld [vmem:[#allocation5 + $0x718] sm:$0xff]
    %v477 = vld [vmem:[#allocation5 + $0x720] sm:$0xff]
    %v478 = vld [vmem:[#allocation5 + $0x728] sm:$0xff]
    %v479 = vld [vmem:[#allocation5 + $0x730] sm:$0xff]
    %v480 = vld [vmem:[#allocation5 + $0x738] sm:$0xff]
    %v481 = vld [vmem:[#allocation5 + $0x740] sm:$0xff]
    %v482 = vld [vmem:[#allocation5 + $0x748] sm:$0xff]
    %v483 = vld [vmem:[#allocation5 + $0x750] sm:$0xff]
    %v484 = vld [vmem:[#allocation5 + $0x758] sm:$0xff]
    %v485 = vld [vmem:[#allocation5 + $0x760] sm:$0xff]
    %v486 = vld [vmem:[#allocation5 + $0x768] sm:$0xff]
    %v487 = vld [vmem:[#allocation5 + $0x770] sm:$0xff]
    %v488 = vld [vmem:[#allocation5 + $0x778] sm:$0xff]
    %v489 = vld [vmem:[#allocation5 + $0x780] sm:$0xff]
    %v490 = vld [vmem:[#allocation5 + $0x788] sm:$0xff]
    %v491 = vld [vmem:[#allocation5 + $0x790] sm:$0xff]
    %v492 = vld [vmem:[#allocation5 + $0x798] sm:$0xff]
    %v493 = vld [vmem:[#allocation5 + $0x7a0] sm:$0xff]
    %v494 = vld [vmem:[#allocation5 + $0x7a8] sm:$0xff]
    %v495 = vld [vmem:[#allocation5 + $0x7b0] sm:$0xff]
    %v496 = vld [vmem:[#allocation5 + $0x7b8] sm:$0xff]
    %v497 = vld [vmem:[#allocation5 + $0x7c0] sm:$0xff]
    %v498 = vld [vmem:[#allocation5 + $0x7c8] sm:$0xff]
    %v499 = vld [vmem:[#allocation5 + $0x7d0] sm:$0xff]
    %v500 = vld [vmem:[#allocation5 + $0x7d8] sm:$0xff]
    %v501 = vld [vmem:[#allocation5 + $0x7e0] sm:$0xff]
    %v502 = vld [vmem:[#allocation5 + $0x7e8] sm:$0xff]
    %v503 = vld [vmem:[#allocation5 + $0x7f0] sm:$0xff]
    %v504 = vld [vmem:[#allocation5 + $0x7f8] sm:$0xff]
    %v505 = vld [vmem:[#allocation5 + $0x800] sm:$0xff]
    %v506 = vld [vmem:[#allocation5 + $0x808] sm:$0xff]
    %v507 = vld [vmem:[#allocation5 + $0x810] sm:$0xff]
    %v508 = vld [vmem:[#allocation5 + $0x818] sm:$0xff]
    %v509 = vld [vmem:[#allocation5 + $0x820] sm:$0xff]
    %v510 = vld [vmem:[#allocation5 + $0x828] sm:$0xff]
    %v511 = vld [vmem:[#allocation5 + $0x830] sm:$0xff]
    %v512 = vld [vmem:[#allocation5 + $0x838] sm:$0xff]
    %v513 = vld [vmem:[#allocation5 + $0x840] sm:$0xff]
    %v514 = vld [vmem:[#allocation5 + $0x848] sm:$0xff]
    %v515 = vld [vmem:[#allocation5 + $0x850] sm:$0xff]
    %v516 = vld [vmem:[#allocation5 + $0x858] sm:$0xff]
    %v517 = vld [vmem:[#allocation5 + $0x860] sm:$0xff]
    %v518 = vld [vmem:[#allocation5 + $0x868] sm:$0xff]
    %v519 = vld [vmem:[#allocation5 + $0x870] sm:$0xff]
    %v520 = vld [vmem:[#allocation5 + $0x878] sm:$0xff]
    %v521 = vld [vmem:[#allocation5 + $0x880] sm:$0xff]
    %v522 = vld [vmem:[#allocation5 + $0x888] sm:$0xff]
    %v523 = vld [vmem:[#allocation5 + $0x890] sm:$0xff]
    %v524 = vld [vmem:[#allocation5 + $0x898] sm:$0xff]
    %v525 = vld [vmem:[#allocation5 + $0x8a0] sm:$0xff]
    %v526 = vld [vmem:[#allocation5 + $0x8a8] sm:$0xff]
    %v527 = vld [vmem:[#allocation5 + $0x8b0] sm:$0xff]
    %v528 = vld [vmem:[#allocation5 + $0x8b8] sm:$0xff]
    %v529 = vld [vmem:[#allocation5 + $0x8c0] sm:$0xff]
    %v530 = vld [vmem:[#allocation5 + $0x8c8] sm:$0xff]
    %v531 = vld [vmem:[#allocation5 + $0x8d0] sm:$0xff]
    %v532 = vld [vmem:[#allocation5 + $0x8d8] sm:$0xff]
    %v533 = vld [vmem:[#allocation5 + $0x8e0] sm:$0xff]
    %v534 = vld [vmem:[#allocation5 + $0x8e8] sm:$0xff]
    %v535 = vld [vmem:[#allocation5 + $0x8f0] sm:$0xff]
    %v536 = vld [vmem:[#allocation5 + $0x8f8] sm:$0xff]
    %v537 = vld [vmem:[#allocation5 + $0x900] sm:$0xff]
    %v538 = vld [vmem:[#allocation5 + $0x908] sm:$0xff]
    %v539 = vld [vmem:[#allocation5 + $0x910] sm:$0xff]
    %v540 = vld [vmem:[#allocation5 + $0x918] sm:$0xff]
    %v541 = vld [vmem:[#allocation5 + $0x920] sm:$0xff]
    %v542 = vld [vmem:[#allocation5 + $0x928] sm:$0xff]
    %v543 = vld [vmem:[#allocation5 + $0x930] sm:$0xff]
    %v544 = vld [vmem:[#allocation5 + $0x938] sm:$0xff]
    %v545 = vld [vmem:[#allocation5 + $0x940] sm:$0xff]
    %v546 = vld [vmem:[#allocation5 + $0x948] sm:$0xff]
    %v547 = vld [vmem:[#allocation5 + $0x950] sm:$0xff]
    %v548 = vld [vmem:[#allocation5 + $0x958] sm:$0xff]
    %v549 = vld [vmem:[#allocation5 + $0x960] sm:$0xff]
    %v550 = vld [vmem:[#allocation5 + $0x968] sm:$0xff]
    %v551 = vld [vmem:[#allocation5 + $0x970] sm:$0xff]
    %v552 = vld [vmem:[#allocation5 + $0x978] sm:$0xff]
    %v553 = vld [vmem:[#allocation5 + $0x980] sm:$0xff]
    %v554 = vld [vmem:[#allocation5 + $0x988] sm:$0xff]
    %v555 = vld [vmem:[#allocation5 + $0x990] sm:$0xff]
    %v556 = vld [vmem:[#allocation5 + $0x998] sm:$0xff]
    %v557 = vld [vmem:[#allocation5 + $0x9a0] sm:$0xff]
    %v558 = vld [vmem:[#allocation5 + $0x9a8] sm:$0xff]
    %v559 = vld [vmem:[#allocation5 + $0x9b0] sm:$0xff]
    %v560 = vld [vmem:[#allocation5 + $0x9b8] sm:$0xff]
    %v561 = vld [vmem:[#allocation5 + $0x9c0] sm:$0xff]
    %v562 = vld [vmem:[#allocation5 + $0x9c8] sm:$0xff]
    %v563 = vld [vmem:[#allocation5 + $0x9d0] sm:$0xff]
    %v564 = vld [vmem:[#allocation5 + $0x9d8] sm:$0xff]
    %v565 = vld [vmem:[#allocation5 + $0x9e0] sm:$0xff]
    %v566 = vld [vmem:[#allocation5 + $0x9e8] sm:$0xff]
    %v567 = vld [vmem:[#allocation5 + $0x9f0] sm:$0xff]
    %v568 = vld [vmem:[#allocation5 + $0x9f8] sm:$0xff]
    %v569 = vld [vmem:[#allocation5 + $0xa00] sm:$0xff]
    %v570 = vld [vmem:[#allocation5 + $0xa08] sm:$0xff]
    %v571 = vld [vmem:[#allocation5 + $0xa10] sm:$0xff]
    %v572 = vld [vmem:[#allocation5 + $0xa18] sm:$0xff]
    %v573 = vld [vmem:[#allocation5 + $0xa20] sm:$0xff]
    %v574 = vld [vmem:[#allocation5 + $0xa28] sm:$0xff]
    %v575 = vld [vmem:[#allocation5 + $0xa30] sm:$0xff]
    %v576 = vld [vmem:[#allocation5 + $0xa38] sm:$0xff]
    %v577 = vld [vmem:[#allocation5 + $0xa40] sm:$0xff]
    %v578 = vld [vmem:[#allocation5 + $0xa48] sm:$0xff]
    %v579 = vld [vmem:[#allocation5 + $0xa50] sm:$0xff]
    %v580 = vld [vmem:[#allocation5 + $0xa58] sm:$0xff]
    %v581 = vld [vmem:[#allocation5 + $0xa60] sm:$0xff]
    %v582 = vld [vmem:[#allocation5 + $0xa68] sm:$0xff]
    %v583 = vld [vmem:[#allocation5 + $0xa70] sm:$0xff]
    %v584 = vld [vmem:[#allocation5 + $0xa78] sm:$0xff]
    %v585 = vld [vmem:[#allocation5 + $0xa80] sm:$0xff]
    %v586 = vld [vmem:[#allocation5 + $0xa88] sm:$0xff]
    %v587 = vld [vmem:[#allocation5 + $0xa90] sm:$0xff]
    %v588 = vld [vmem:[#allocation5 + $0xa98] sm:$0xff]
    %v589 = vld [vmem:[#allocation5 + $0xaa0] sm:$0xff]
    %v590 = vld [vmem:[#allocation5 + $0xaa8] sm:$0xff]
    %v591 = vld [vmem:[#allocation5 + $0xab0] sm:$0xff]
    %v592 = vld [vmem:[#allocation5 + $0xab8] sm:$0xff]
    %v593 = vld [vmem:[#allocation5 + $0xac0] sm:$0xff]
    %v594 = vld [vmem:[#allocation5 + $0xac8] sm:$0xff]
    %v595 = vld [vmem:[#allocation5 + $0xad0] sm:$0xff]
    %v596 = vld [vmem:[#allocation5 + $0xad8] sm:$0xff]
    %v597 = vld [vmem:[#allocation5 + $0xae0] sm:$0xff]
    %v598 = vld [vmem:[#allocation5 + $0xae8] sm:$0xff]
    %v599 = vld [vmem:[#allocation5 + $0xaf0] sm:$0xff]
    %v600 = vld [vmem:[#allocation5 + $0xaf8] sm:$0xff]
    %v601 = vld [vmem:[#allocation5 + $0xb00] sm:$0xff]
    %v602 = vld [vmem:[#allocation5 + $0xb08] sm:$0xff]
    %v603 = vld [vmem:[#allocation5 + $0xb10] sm:$0xff]
    %v604 = vld [vmem:[#allocation5 + $0xb18] sm:$0xff]
    %v605 = vld [vmem:[#allocation5 + $0xb20] sm:$0xff]
    %v606 = vld [vmem:[#allocation5 + $0xb28] sm:$0xff]
    %v607 = vld [vmem:[#allocation5 + $0xb30] sm:$0xff]
    %v608 = vld [vmem:[#allocation5 + $0xb38] sm:$0xff]
    %v609 = vld [vmem:[#allocation5 + $0xb40] sm:$0xff]
    %v610 = vld [vmem:[#allocation5 + $0xb48] sm:$0xff]
    %v611 = vld [vmem:[#allocation5 + $0xb50] sm:$0xff]
    %v612 = vld [vmem:[#allocation5 + $0xb58] sm:$0xff]
    %v613 = vld [vmem:[#allocation5 + $0xb60] sm:$0xff]
    %v614 = vld [vmem:[#allocation5 + $0xb68] sm:$0xff]
    %v615 = vld [vmem:[#allocation5 + $0xb70] sm:$0xff]
    %v616 = vld [vmem:[#allocation5 + $0xb78] sm:$0xff]
    %v617 = vld [vmem:[#allocation5 + $0xb80] sm:$0xff]
    %v618 = vld [vmem:[#allocation5 + $0xb88] sm:$0xff]
    %v619 = vld [vmem:[#allocation5 + $0xb90] sm:$0xff]
    %v620 = vld [vmem:[#allocation5 + $0xb98] sm:$0xff]
    %v621 = vld [vmem:[#allocation5 + $0xba0] sm:$0xff]
    %v622 = vld [vmem:[#allocation5 + $0xba8] sm:$0xff]
    %v623 = vld [vmem:[#allocation5 + $0xbb0] sm:$0xff]
    %v624 = vld [vmem:[#allocation5 + $0xbb8] sm:$0xff]
    %v625 = vld [vmem:[#allocation5 + $0xbc0] sm:$0xff]
    %v626 = vld [vmem:[#allocation5 + $0xbc8] sm:$0xff]
    %v627 = vld [vmem:[#allocation5 + $0xbd0] sm:$0xff]
    %v628 = vld [vmem:[#allocation5 + $0xbd8] sm:$0xff]
    %v629 = vld [vmem:[#allocation5 + $0xbe0] sm:$0xff]
    %v630 = vld [vmem:[#allocation5 + $0xbe8] sm:$0xff]
    %v631 = vld [vmem:[#allocation5 + $0xbf0] sm:$0xff]
    %v632 = vld [vmem:[#allocation5 + $0xbf8] sm:$0xff]
    %v633 = vld [vmem:[#allocation5 + $0xc00] sm:$0xff]
    %v634 = vld [vmem:[#allocation5 + $0xc08] sm:$0xff]
    %v635 = vld [vmem:[#allocation5 + $0xc10] sm:$0xff]
    %v636 = vld [vmem:[#allocation5 + $0xc18] sm:$0xff]
    %v637 = vld [vmem:[#allocation5 + $0xc20] sm:$0xff]
    %v638 = vld [vmem:[#allocation5 + $0xc28] sm:$0xff]
    %v639 = vld [vmem:[#allocation5 + $0xc30] sm:$0xff]
    %v640 = vld [vmem:[#allocation5 + $0xc38] sm:$0xff]
    %v641 = vld [vmem:[#allocation7] sm:$0xff]
    %v643 = vlaneseq
    %v644 = vshrl.u32 %v643, 7
    %v645 = vsub.s32 0, %v644
    %v646 = vrot.slane %v641, %v645
    %v647 = vlaneseq
    %v648 = vshrl.u32 %v647, 7
    %v649 = vsub.s32 1, %v648
    %v650 = vrot.slane %v641, %v649
    %v651 = vlaneseq
    %v652 = vshrl.u32 %v651, 7
    %v653 = vsub.s32 2, %v652
    %v654 = vrot.slane %v641, %v653
    %v655 = vlaneseq
    %v656 = vshrl.u32 %v655, 7
    %v657 = vsub.s32 3, %v656
    %v658 = vrot.slane %v641, %v657
    %v659 = vlaneseq
    %v660 = vshrl.u32 %v659, 7
    %v661 = vsub.s32 4, %v660
    %v662 = vrot.slane %v641, %v661
    %v663 = vlaneseq
    %v664 = vshrl.u32 %v663, 7
    %v665 = vsub.s32 5, %v664
    %v666 = vrot.slane %v641, %v665
    %v667 = vlaneseq
    %v668 = vshrl.u32 %v667, 7
    %v669 = vsub.s32 6, %v668
    %v670 = vrot.slane %v641, %v669
    %v671 = vlaneseq
    %v672 = vshrl.u32 %v671, 7
    %v673 = vsub.s32 7, %v672
    %v674 = vrot.slane %v641, %v673
    %v1075 = vunpack.c.l.b16 %v249
    %v1076 = vunpack.c.h.b16 %v249
    %v1077 = vunpack.c.l.b16 %v250
    %v1078 = vunpack.c.h.b16 %v250
    %v1079 = vunpack.c.l.b16 %v251
    %v1080 = vunpack.c.h.b16 %v251
    %v1081 = vunpack.c.l.b16 %v252
    %v1082 = vunpack.c.h.b16 %v252
    %v1083 = vunpack.c.l.b16 %v253
    %v1084 = vunpack.c.h.b16 %v253
    %v1085 = vunpack.c.l.b16 %v254
    %v1086 = vunpack.c.h.b16 %v254
    %v1087 = vunpack.c.l.b16 %v255
    %v1088 = vunpack.c.h.b16 %v255
    %v1089 = vunpack.c.l.b16 %v256
    %v1090 = vunpack.c.h.b16 %v256
    %v1091 = vunpack.c.l.b16 %v257
    %v1092 = vunpack.c.h.b16 %v257
    %v1093 = vunpack.c.l.b16 %v258
    %v1094 = vunpack.c.h.b16 %v258
    %v1095 = vunpack.c.l.b16 %v259
    %v1096 = vunpack.c.h.b16 %v259
    %v1097 = vunpack.c.l.b16 %v260
    %v1098 = vunpack.c.h.b16 %v260
    %v1099 = vunpack.c.l.b16 %v261
    %v1100 = vunpack.c.h.b16 %v261
    %v1101 = vunpack.c.l.b16 %v262
    %v1102 = vunpack.c.h.b16 %v262
    %v1103 = vunpack.c.l.b16 %v263
    %v1104 = vunpack.c.h.b16 %v263
    %v1105 = vunpack.c.l.b16 %v264
    %v1106 = vunpack.c.h.b16 %v264
    %v1107 = vunpack.c.l.b16 %v265
    %v1108 = vunpack.c.h.b16 %v265
    %v1109 = vunpack.c.l.b16 %v266
    %v1110 = vunpack.c.h.b16 %v266
    %v1111 = vunpack.c.l.b16 %v267
    %v1112 = vunpack.c.h.b16 %v267
    %v1113 = vunpack.c.l.b16 %v268
    %v1114 = vunpack.c.h.b16 %v268
    %v1115 = vunpack.c.l.b16 %v269
    %v1116 = vunpack.c.h.b16 %v269
    %v1117 = vunpack.c.l.b16 %v270
    %v1118 = vunpack.c.h.b16 %v270
    %v1119 = vunpack.c.l.b16 %v271
    %v1120 = vunpack.c.h.b16 %v271
    %v1121 = vunpack.c.l.b16 %v272
    %v1122 = vunpack.c.h.b16 %v272
    %v1123 = vunpack.c.l.b16 %v273
    %v1124 = vunpack.c.h.b16 %v273
    %v1125 = vunpack.c.l.b16 %v274
    %v1126 = vunpack.c.h.b16 %v274
    %v1127 = vunpack.c.l.b16 %v275
    %v1128 = vunpack.c.h.b16 %v275
    %v1129 = vunpack.c.l.b16 %v276
    %v1130 = vunpack.c.h.b16 %v276
    %v1131 = vunpack.c.l.b16 %v277
    %v1132 = vunpack.c.h.b16 %v277
    %v1133 = vunpack.c.l.b16 %v278
    %v1134 = vunpack.c.h.b16 %v278
    %v1135 = vunpack.c.l.b16 %v279
    %v1136 = vunpack.c.h.b16 %v279
    %v1137 = vunpack.c.l.b16 %v280
    %v1138 = vunpack.c.h.b16 %v280
    %v1139 = vunpack.c.l.b16 %v281
    %v1140 = vunpack.c.h.b16 %v281
    %v1141 = vunpack.c.l.b16 %v282
    %v1142 = vunpack.c.h.b16 %v282
    %v1143 = vunpack.c.l.b16 %v283
    %v1144 = vunpack.c.h.b16 %v283
    %v1145 = vunpack.c.l.b16 %v284
    %v1146 = vunpack.c.h.b16 %v284
    %v1147 = vunpack.c.l.b16 %v285
    %v1148 = vunpack.c.h.b16 %v285
    %v1149 = vunpack.c.l.b16 %v286
    %v1150 = vunpack.c.h.b16 %v286
    %v1151 = vunpack.c.l.b16 %v287
    %v1152 = vunpack.c.h.b16 %v287
    %v1153 = vunpack.c.l.b16 %v288
    %v1154 = vunpack.c.h.b16 %v288
    %v1155 = vunpack.c.l.b16 %v289
    %v1156 = vunpack.c.h.b16 %v289
    %v1157 = vunpack.c.l.b16 %v290
    %v1158 = vunpack.c.h.b16 %v290
    %v1159 = vunpack.c.l.b16 %v291
    %v1160 = vunpack.c.h.b16 %v291
    %v1161 = vunpack.c.l.b16 %v292
    %v1162 = vunpack.c.h.b16 %v292
    %v1163 = vunpack.c.l.b16 %v293
    %v1164 = vunpack.c.h.b16 %v293
    %v1165 = vunpack.c.l.b16 %v294
    %v1166 = vunpack.c.h.b16 %v294
    %v1167 = vunpack.c.l.b16 %v295
    %v1168 = vunpack.c.h.b16 %v295
    %v1169 = vunpack.c.l.b16 %v296
    %v1170 = vunpack.c.h.b16 %v296
    %v1171 = vunpack.c.l.b16 %v297
    %v1172 = vunpack.c.h.b16 %v297
    %v1173 = vunpack.c.l.b16 %v298
    %v1174 = vunpack.c.h.b16 %v298
    %v1175 = vunpack.c.l.b16 %v299
    %v1176 = vunpack.c.h.b16 %v299
    %v1177 = vunpack.c.l.b16 %v300
    %v1178 = vunpack.c.h.b16 %v300
    %v1179 = vunpack.c.l.b16 %v301
    %v1180 = vunpack.c.h.b16 %v301
    %v1181 = vunpack.c.l.b16 %v302
    %v1182 = vunpack.c.h.b16 %v302
    %v1183 = vunpack.c.l.b16 %v303
    %v1184 = vunpack.c.h.b16 %v303
    %v1185 = vunpack.c.l.b16 %v304
    %v1186 = vunpack.c.h.b16 %v304
    %v1187 = vunpack.c.l.b16 %v305
    %v1188 = vunpack.c.h.b16 %v305
    %v1189 = vunpack.c.l.b16 %v306
    %v1190 = vunpack.c.h.b16 %v306
    %v1191 = vunpack.c.l.b16 %v307
    %v1192 = vunpack.c.h.b16 %v307
    %v1193 = vunpack.c.l.b16 %v308
    %v1194 = vunpack.c.h.b16 %v308
    %v1195 = vunpack.c.l.b16 %v309
    %v1196 = vunpack.c.h.b16 %v309
    %v1197 = vunpack.c.l.b16 %v310
    %v1198 = vunpack.c.h.b16 %v310
    %v1199 = vunpack.c.l.b16 %v311
    %v1200 = vunpack.c.h.b16 %v311
    %v1201 = vunpack.c.l.b16 %v312
    %v1202 = vunpack.c.h.b16 %v312
    %v1203 = vunpack.c.l.b16 %v313
    %v1204 = vunpack.c.h.b16 %v313
    %v1205 = vunpack.c.l.b16 %v314
    %v1206 = vunpack.c.h.b16 %v314
    %v1207 = vunpack.c.l.b16 %v315
    %v1208 = vunpack.c.h.b16 %v315
    %v1209 = vunpack.c.l.b16 %v316
    %v1210 = vunpack.c.h.b16 %v316
    %v1211 = vunpack.c.l.b16 %v317
    %v1212 = vunpack.c.h.b16 %v317
    %v1213 = vunpack.c.l.b16 %v318
    %v1214 = vunpack.c.h.b16 %v318
    %v1215 = vunpack.c.l.b16 %v319
    %v1216 = vunpack.c.h.b16 %v319
    %v1217 = vunpack.c.l.b16 %v320
    %v1218 = vunpack.c.h.b16 %v320
    %v1219 = vunpack.c.l.b16 %v321
    %v1220 = vunpack.c.h.b16 %v321
    %v1221 = vunpack.c.l.b16 %v322
    %v1222 = vunpack.c.h.b16 %v322
    %v1223 = vunpack.c.l.b16 %v323
    %v1224 = vunpack.c.h.b16 %v323
    %v1225 = vunpack.c.l.b16 %v324
    %v1226 = vunpack.c.h.b16 %v324
    %v1227 = vunpack.c.l.b16 %v325
    %v1228 = vunpack.c.h.b16 %v325
    %v1229 = vunpack.c.l.b16 %v326
    %v1230 = vunpack.c.h.b16 %v326
    %v1231 = vunpack.c.l.b16 %v327
    %v1232 = vunpack.c.h.b16 %v327
    %v1233 = vunpack.c.l.b16 %v328
    %v1234 = vunpack.c.h.b16 %v328
    %v1235 = vunpack.c.l.b16 %v329
    %v1236 = vunpack.c.h.b16 %v329
    %v1237 = vunpack.c.l.b16 %v330
    %v1238 = vunpack.c.h.b16 %v330
    %v1239 = vunpack.c.l.b16 %v331
    %v1240 = vunpack.c.h.b16 %v331
    %v1241 = vunpack.c.l.b16 %v332
    %v1242 = vunpack.c.h.b16 %v332
    %v1243 = vunpack.c.l.b16 %v333
    %v1244 = vunpack.c.h.b16 %v333
    %v1245 = vunpack.c.l.b16 %v334
    %v1246 = vunpack.c.h.b16 %v334
    %v1247 = vunpack.c.l.b16 %v335
    %v1248 = vunpack.c.h.b16 %v335
    %v1249 = vunpack.c.l.b16 %v336
    %v1250 = vunpack.c.h.b16 %v336
    %v1251 = vunpack.c.l.b16 %v337
    %v1252 = vunpack.c.h.b16 %v337
    %v1253 = vunpack.c.l.b16 %v338
    %v1254 = vunpack.c.h.b16 %v338
    %v1255 = vunpack.c.l.b16 %v339
    %v1256 = vunpack.c.h.b16 %v339
    %v1257 = vunpack.c.l.b16 %v340
    %v1258 = vunpack.c.h.b16 %v340
    %v1259 = vunpack.c.l.b16 %v341
    %v1260 = vunpack.c.h.b16 %v341
    %v1261 = vunpack.c.l.b16 %v342
    %v1262 = vunpack.c.h.b16 %v342
    %v1263 = vunpack.c.l.b16 %v343
    %v1264 = vunpack.c.h.b16 %v343
    %v1265 = vunpack.c.l.b16 %v344
    %v1266 = vunpack.c.h.b16 %v344
    %v1267 = vunpack.c.l.b16 %v345
    %v1268 = vunpack.c.h.b16 %v345
    %v1269 = vunpack.c.l.b16 %v346
    %v1270 = vunpack.c.h.b16 %v346
    %v1271 = vunpack.c.l.b16 %v347
    %v1272 = vunpack.c.h.b16 %v347
    %v1273 = vunpack.c.l.b16 %v348
    %v1274 = vunpack.c.h.b16 %v348
    %v1275 = vunpack.c.l.b16 %v349
    %v1276 = vunpack.c.h.b16 %v349
    %v1277 = vunpack.c.l.b16 %v350
    %v1278 = vunpack.c.h.b16 %v350
    %v1279 = vunpack.c.l.b16 %v351
    %v1280 = vunpack.c.h.b16 %v351
    %v1281 = vunpack.c.l.b16 %v352
    %v1282 = vunpack.c.h.b16 %v352
    %v1283 = vunpack.c.l.b16 %v353
    %v1284 = vunpack.c.h.b16 %v353
    %v1285 = vunpack.c.l.b16 %v354
    %v1286 = vunpack.c.h.b16 %v354
    %v1287 = vunpack.c.l.b16 %v355
    %v1288 = vunpack.c.h.b16 %v355
    %v1289 = vunpack.c.l.b16 %v356
    %v1290 = vunpack.c.h.b16 %v356
    %v1291 = vunpack.c.l.b16 %v357
    %v1292 = vunpack.c.h.b16 %v357
    %v1293 = vunpack.c.l.b16 %v358
    %v1294 = vunpack.c.h.b16 %v358
    %v1295 = vunpack.c.l.b16 %v359
    %v1296 = vunpack.c.h.b16 %v359
    %v1297 = vunpack.c.l.b16 %v360
    %v1298 = vunpack.c.h.b16 %v360
    %v1299 = vunpack.c.l.b16 %v361
    %v1300 = vunpack.c.h.b16 %v361
    %v1301 = vunpack.c.l.b16 %v362
    %v1302 = vunpack.c.h.b16 %v362
    %v1303 = vunpack.c.l.b16 %v363
    %v1304 = vunpack.c.h.b16 %v363
    %v1305 = vunpack.c.l.b16 %v364
    %v1306 = vunpack.c.h.b16 %v364
    %v1307 = vunpack.c.l.b16 %v365
    %v1308 = vunpack.c.h.b16 %v365
    %v1309 = vunpack.c.l.b16 %v366
    %v1310 = vunpack.c.h.b16 %v366
    %v1311 = vunpack.c.l.b16 %v367
    %v1312 = vunpack.c.h.b16 %v367
    %v1313 = vunpack.c.l.b16 %v368
    %v1314 = vunpack.c.h.b16 %v368
    %v1315 = vunpack.c.l.b16 %v369
    %v1316 = vunpack.c.h.b16 %v369
    %v1317 = vunpack.c.l.b16 %v370
    %v1318 = vunpack.c.h.b16 %v370
    %v1319 = vunpack.c.l.b16 %v371
    %v1320 = vunpack.c.h.b16 %v371
    %v1321 = vunpack.c.l.b16 %v372
    %v1322 = vunpack.c.h.b16 %v372
    %v1323 = vunpack.c.l.b16 %v373
    %v1324 = vunpack.c.h.b16 %v373
    %v1325 = vunpack.c.l.b16 %v374
    %v1326 = vunpack.c.h.b16 %v374
    %v1327 = vunpack.c.l.b16 %v375
    %v1328 = vunpack.c.h.b16 %v375
    %v1329 = vunpack.c.l.b16 %v376
    %v1330 = vunpack.c.h.b16 %v376
    %v1331 = vunpack.c.l.b16 %v377
    %v1332 = vunpack.c.h.b16 %v377
    %v1333 = vunpack.c.l.b16 %v378
    %v1334 = vunpack.c.h.b16 %v378
    %v1335 = vunpack.c.l.b16 %v379
    %v1336 = vunpack.c.h.b16 %v379
    %v1337 = vunpack.c.l.b16 %v380
    %v1338 = vunpack.c.h.b16 %v380
    %v1339 = vunpack.c.l.b16 %v381
    %v1340 = vunpack.c.h.b16 %v381
    %v1341 = vunpack.c.l.b16 %v382
    %v1342 = vunpack.c.h.b16 %v382
    %v1343 = vunpack.c.l.b16 %v383
    %v1344 = vunpack.c.h.b16 %v383
    %v1345 = vunpack.c.l.b16 %v384
    %v1346 = vunpack.c.h.b16 %v384
    %v1347 = vunpack.c.l.b16 %v385
    %v1348 = vunpack.c.h.b16 %v385
    %v1349 = vunpack.c.l.b16 %v386
    %v1350 = vunpack.c.h.b16 %v386
    %v1351 = vunpack.c.l.b16 %v387
    %v1352 = vunpack.c.h.b16 %v387
    %v1353 = vunpack.c.l.b16 %v388
    %v1354 = vunpack.c.h.b16 %v388
    %v1355 = vunpack.c.l.b16 %v389
    %v1356 = vunpack.c.h.b16 %v389
    %v1357 = vunpack.c.l.b16 %v390
    %v1358 = vunpack.c.h.b16 %v390
    %v1359 = vunpack.c.l.b16 %v391
    %v1360 = vunpack.c.h.b16 %v391
    %v1361 = vunpack.c.l.b16 %v392
    %v1362 = vunpack.c.h.b16 %v392
    %v1363 = vunpack.c.l.b16 %v393
    %v1364 = vunpack.c.h.b16 %v393
    %v1365 = vunpack.c.l.b16 %v394
    %v1366 = vunpack.c.h.b16 %v394
    %v1367 = vunpack.c.l.b16 %v395
    %v1368 = vunpack.c.h.b16 %v395
    %v1369 = vunpack.c.l.b16 %v396
    %v1370 = vunpack.c.h.b16 %v396
    %v1371 = vunpack.c.l.b16 %v397
    %v1372 = vunpack.c.h.b16 %v397
    %v1373 = vunpack.c.l.b16 %v398
    %v1374 = vunpack.c.h.b16 %v398
    %v1375 = vunpack.c.l.b16 %v399
    %v1376 = vunpack.c.h.b16 %v399
    %v1377 = vunpack.c.l.b16 %v400
    %v1378 = vunpack.c.h.b16 %v400
    %v1379 = vunpack.c.l.b16 %v401
    %v1380 = vunpack.c.h.b16 %v401
    %v1381 = vunpack.c.l.b16 %v402
    %v1382 = vunpack.c.h.b16 %v402
    %v1383 = vunpack.c.l.b16 %v403
    %v1384 = vunpack.c.h.b16 %v403
    %v1385 = vunpack.c.l.b16 %v404
    %v1386 = vunpack.c.h.b16 %v404
    %v1387 = vunpack.c.l.b16 %v405
    %v1388 = vunpack.c.h.b16 %v405
    %v1389 = vunpack.c.l.b16 %v406
    %v1390 = vunpack.c.h.b16 %v406
    %v1391 = vunpack.c.l.b16 %v407
    %v1392 = vunpack.c.h.b16 %v407
    %v1393 = vunpack.c.l.b16 %v408
    %v1394 = vunpack.c.h.b16 %v408
    %v1395 = vunpack.c.l.b16 %v409
    %v1396 = vunpack.c.h.b16 %v409
    %v1397 = vunpack.c.l.b16 %v410
    %v1398 = vunpack.c.h.b16 %v410
    %v1399 = vunpack.c.l.b16 %v411
    %v1400 = vunpack.c.h.b16 %v411
    %v1401 = vunpack.c.l.b16 %v412
    %v1402 = vunpack.c.h.b16 %v412
    %v1403 = vunpack.c.l.b16 %v413
    %v1404 = vunpack.c.h.b16 %v413
    %v1405 = vunpack.c.l.b16 %v414
    %v1406 = vunpack.c.h.b16 %v414
    %v1407 = vunpack.c.l.b16 %v415
    %v1408 = vunpack.c.h.b16 %v415
    %v1409 = vunpack.c.l.b16 %v416
    %v1410 = vunpack.c.h.b16 %v416
    %v1411 = vunpack.c.l.b16 %v417
    %v1412 = vunpack.c.h.b16 %v417
    %v1413 = vunpack.c.l.b16 %v418
    %v1414 = vunpack.c.h.b16 %v418
    %v1415 = vunpack.c.l.b16 %v419
    %v1416 = vunpack.c.h.b16 %v419
    %v1417 = vunpack.c.l.b16 %v420
    %v1418 = vunpack.c.h.b16 %v420
    %v1419 = vunpack.c.l.b16 %v421
    %v1420 = vunpack.c.h.b16 %v421
    %v1421 = vunpack.c.l.b16 %v422
    %v1422 = vunpack.c.h.b16 %v422
    %v1423 = vunpack.c.l.b16 %v423
    %v1424 = vunpack.c.h.b16 %v423
    %v1425 = vunpack.c.l.b16 %v424
    %v1426 = vunpack.c.h.b16 %v424
    %v1427 = vunpack.c.l.b16 %v425
    %v1428 = vunpack.c.h.b16 %v425
    %v1429 = vunpack.c.l.b16 %v426
    %v1430 = vunpack.c.h.b16 %v426
    %v1431 = vunpack.c.l.b16 %v427
    %v1432 = vunpack.c.h.b16 %v427
    %v1433 = vunpack.c.l.b16 %v428
    %v1434 = vunpack.c.h.b16 %v428
    %v1435 = vunpack.c.l.b16 %v429
    %v1436 = vunpack.c.h.b16 %v429
    %v1437 = vunpack.c.l.b16 %v430
    %v1438 = vunpack.c.h.b16 %v430
    %v1439 = vunpack.c.l.b16 %v431
    %v1440 = vunpack.c.h.b16 %v431
    %v1441 = vunpack.c.l.b16 %v432
    %v1442 = vunpack.c.h.b16 %v432
    %v1443 = vunpack.c.l.b16 %v433
    %v1444 = vunpack.c.h.b16 %v433
    %v1445 = vunpack.c.l.b16 %v434
    %v1446 = vunpack.c.h.b16 %v434
    %v1447 = vunpack.c.l.b16 %v435
    %v1448 = vunpack.c.h.b16 %v435
    %v1449 = vunpack.c.l.b16 %v436
    %v1450 = vunpack.c.h.b16 %v436
    %v1451 = vunpack.c.l.b16 %v437
    %v1452 = vunpack.c.h.b16 %v437
    %v1453 = vunpack.c.l.b16 %v438
    %v1454 = vunpack.c.h.b16 %v438
    %v1455 = vunpack.c.l.b16 %v439
    %v1456 = vunpack.c.h.b16 %v439
    %v1457 = vunpack.c.l.b16 %v440
    %v1458 = vunpack.c.h.b16 %v440
    %v1459 = vunpack.c.l.b16 %v441
    %v1460 = vunpack.c.h.b16 %v441
    %v1461 = vunpack.c.l.b16 %v442
    %v1462 = vunpack.c.h.b16 %v442
    %v1463 = vunpack.c.l.b16 %v443
    %v1464 = vunpack.c.h.b16 %v443
    %v1465 = vunpack.c.l.b16 %v444
    %v1466 = vunpack.c.h.b16 %v444
    %v1467 = vunpack.c.l.b16 %v445
    %v1468 = vunpack.c.h.b16 %v445
    %v1469 = vunpack.c.l.b16 %v446
    %v1470 = vunpack.c.h.b16 %v446
    %v1471 = vunpack.c.l.b16 %v447
    %v1472 = vunpack.c.h.b16 %v447
    %v1473 = vunpack.c.l.b16 %v448
    %v1474 = vunpack.c.h.b16 %v448
    %v1475 = vunpack.c.l.b16 %v449
    %v1476 = vunpack.c.h.b16 %v449
    %v1477 = vunpack.c.l.b16 %v450
    %v1478 = vunpack.c.h.b16 %v450
    %v1479 = vunpack.c.l.b16 %v451
    %v1480 = vunpack.c.h.b16 %v451
    %v1481 = vunpack.c.l.b16 %v452
    %v1482 = vunpack.c.h.b16 %v452
    %v1483 = vunpack.c.l.b16 %v453
    %v1484 = vunpack.c.h.b16 %v453
    %v1485 = vunpack.c.l.b16 %v454
    %v1486 = vunpack.c.h.b16 %v454
    %v1487 = vunpack.c.l.b16 %v455
    %v1488 = vunpack.c.h.b16 %v455
    %v1489 = vunpack.c.l.b16 %v456
    %v1490 = vunpack.c.h.b16 %v456
    %v1491 = vunpack.c.l.b16 %v457
    %v1492 = vunpack.c.h.b16 %v457
    %v1493 = vunpack.c.l.b16 %v458
    %v1494 = vunpack.c.h.b16 %v458
    %v1495 = vunpack.c.l.b16 %v459
    %v1496 = vunpack.c.h.b16 %v459
    %v1497 = vunpack.c.l.b16 %v460
    %v1498 = vunpack.c.h.b16 %v460
    %v1499 = vunpack.c.l.b16 %v461
    %v1500 = vunpack.c.h.b16 %v461
    %v1501 = vunpack.c.l.b16 %v462
    %v1502 = vunpack.c.h.b16 %v462
    %v1503 = vunpack.c.l.b16 %v463
    %v1504 = vunpack.c.h.b16 %v463
    %v1505 = vunpack.c.l.b16 %v464
    %v1506 = vunpack.c.h.b16 %v464
    %v1507 = vunpack.c.l.b16 %v465
    %v1508 = vunpack.c.h.b16 %v465
    %v1509 = vunpack.c.l.b16 %v466
    %v1510 = vunpack.c.h.b16 %v466
    %v1511 = vunpack.c.l.b16 %v467
    %v1512 = vunpack.c.h.b16 %v467
    %v1513 = vunpack.c.l.b16 %v468
    %v1514 = vunpack.c.h.b16 %v468
    %v1515 = vunpack.c.l.b16 %v469
    %v1516 = vunpack.c.h.b16 %v469
    %v1517 = vunpack.c.l.b16 %v470
    %v1518 = vunpack.c.h.b16 %v470
    %v1519 = vunpack.c.l.b16 %v471
    %v1520 = vunpack.c.h.b16 %v471
    %v1521 = vunpack.c.l.b16 %v472
    %v1522 = vunpack.c.h.b16 %v472
    %v1523 = vunpack.c.l.b16 %v473
    %v1524 = vunpack.c.h.b16 %v473
    %v1525 = vunpack.c.l.b16 %v474
    %v1526 = vunpack.c.h.b16 %v474
    %v1527 = vunpack.c.l.b16 %v475
    %v1528 = vunpack.c.h.b16 %v475
    %v1529 = vunpack.c.l.b16 %v476
    %v1530 = vunpack.c.h.b16 %v476
    %v1531 = vunpack.c.l.b16 %v477
    %v1532 = vunpack.c.h.b16 %v477
    %v1533 = vunpack.c.l.b16 %v478
    %v1534 = vunpack.c.h.b16 %v478
    %v1535 = vunpack.c.l.b16 %v479
    %v1536 = vunpack.c.h.b16 %v479
    %v1537 = vunpack.c.l.b16 %v480
    %v1538 = vunpack.c.h.b16 %v480
    %v1539 = vunpack.c.l.b16 %v481
    %v1540 = vunpack.c.h.b16 %v481
    %v1541 = vunpack.c.l.b16 %v482
    %v1542 = vunpack.c.h.b16 %v482
    %v1543 = vunpack.c.l.b16 %v483
    %v1544 = vunpack.c.h.b16 %v483
    %v1545 = vunpack.c.l.b16 %v484
    %v1546 = vunpack.c.h.b16 %v484
    %v1547 = vunpack.c.l.b16 %v485
    %v1548 = vunpack.c.h.b16 %v485
    %v1549 = vunpack.c.l.b16 %v486
    %v1550 = vunpack.c.h.b16 %v486
    %v1551 = vunpack.c.l.b16 %v487
    %v1552 = vunpack.c.h.b16 %v487
    %v1553 = vunpack.c.l.b16 %v488
    %v1554 = vunpack.c.h.b16 %v488
    %v1555 = vunpack.c.l.b16 %v489
    %v1556 = vunpack.c.h.b16 %v489
    %v1557 = vunpack.c.l.b16 %v490
    %v1558 = vunpack.c.h.b16 %v490
    %v1559 = vunpack.c.l.b16 %v491
    %v1560 = vunpack.c.h.b16 %v491
    %v1561 = vunpack.c.l.b16 %v492
    %v1562 = vunpack.c.h.b16 %v492
    %v1563 = vunpack.c.l.b16 %v493
    %v1564 = vunpack.c.h.b16 %v493
    %v1565 = vunpack.c.l.b16 %v494
    %v1566 = vunpack.c.h.b16 %v494
    %v1567 = vunpack.c.l.b16 %v495
    %v1568 = vunpack.c.h.b16 %v495
    %v1569 = vunpack.c.l.b16 %v496
    %v1570 = vunpack.c.h.b16 %v496
    %v1571 = vunpack.c.l.b16 %v497
    %v1572 = vunpack.c.h.b16 %v497
    %v1573 = vunpack.c.l.b16 %v498
    %v1574 = vunpack.c.h.b16 %v498
    %v1575 = vunpack.c.l.b16 %v499
    %v1576 = vunpack.c.h.b16 %v499
    %v1577 = vunpack.c.l.b16 %v500
    %v1578 = vunpack.c.h.b16 %v500
    %v1579 = vunpack.c.l.b16 %v501
    %v1580 = vunpack.c.h.b16 %v501
    %v1581 = vunpack.c.l.b16 %v502
    %v1582 = vunpack.c.h.b16 %v502
    %v1583 = vunpack.c.l.b16 %v503
    %v1584 = vunpack.c.h.b16 %v503
    %v1585 = vunpack.c.l.b16 %v504
    %v1586 = vunpack.c.h.b16 %v504
    %v1587 = vunpack.c.l.b16 %v505
    %v1588 = vunpack.c.h.b16 %v505
    %v1589 = vunpack.c.l.b16 %v506
    %v1590 = vunpack.c.h.b16 %v506
    %v1591 = vunpack.c.l.b16 %v507
    %v1592 = vunpack.c.h.b16 %v507
    %v1593 = vunpack.c.l.b16 %v508
    %v1594 = vunpack.c.h.b16 %v508
    %v1595 = vunpack.c.l.b16 %v509
    %v1596 = vunpack.c.h.b16 %v509
    %v1597 = vunpack.c.l.b16 %v510
    %v1598 = vunpack.c.h.b16 %v510
    %v1599 = vunpack.c.l.b16 %v511
    %v1600 = vunpack.c.h.b16 %v511
    %v1601 = vunpack.c.l.b16 %v512
    %v1602 = vunpack.c.h.b16 %v512
    %v1603 = vunpack.c.l.b16 %v513
    %v1604 = vunpack.c.h.b16 %v513
    %v1605 = vunpack.c.l.b16 %v514
    %v1606 = vunpack.c.h.b16 %v514
    %v1607 = vunpack.c.l.b16 %v515
    %v1608 = vunpack.c.h.b16 %v515
    %v1609 = vunpack.c.l.b16 %v516
    %v1610 = vunpack.c.h.b16 %v516
    %v1611 = vunpack.c.l.b16 %v517
    %v1612 = vunpack.c.h.b16 %v517
    %v1613 = vunpack.c.l.b16 %v518
    %v1614 = vunpack.c.h.b16 %v518
    %v1615 = vunpack.c.l.b16 %v519
    %v1616 = vunpack.c.h.b16 %v519
    %v1617 = vunpack.c.l.b16 %v520
    %v1618 = vunpack.c.h.b16 %v520
    %v1619 = vunpack.c.l.b16 %v521
    %v1620 = vunpack.c.h.b16 %v521
    %v1621 = vunpack.c.l.b16 %v522
    %v1622 = vunpack.c.h.b16 %v522
    %v1623 = vunpack.c.l.b16 %v523
    %v1624 = vunpack.c.h.b16 %v523
    %v1625 = vunpack.c.l.b16 %v524
    %v1626 = vunpack.c.h.b16 %v524
    %v1627 = vunpack.c.l.b16 %v525
    %v1628 = vunpack.c.h.b16 %v525
    %v1629 = vunpack.c.l.b16 %v526
    %v1630 = vunpack.c.h.b16 %v526
    %v1631 = vunpack.c.l.b16 %v527
    %v1632 = vunpack.c.h.b16 %v527
    %v1633 = vunpack.c.l.b16 %v528
    %v1634 = vunpack.c.h.b16 %v528
    %v1635 = vunpack.c.l.b16 %v529
    %v1636 = vunpack.c.h.b16 %v529
    %v1637 = vunpack.c.l.b16 %v530
    %v1638 = vunpack.c.h.b16 %v530
    %v1639 = vunpack.c.l.b16 %v531
    %v1640 = vunpack.c.h.b16 %v531
    %v1641 = vunpack.c.l.b16 %v532
    %v1642 = vunpack.c.h.b16 %v532
    %v1643 = vunpack.c.l.b16 %v533
    %v1644 = vunpack.c.h.b16 %v533
    %v1645 = vunpack.c.l.b16 %v534
    %v1646 = vunpack.c.h.b16 %v534
    %v1647 = vunpack.c.l.b16 %v535
    %v1648 = vunpack.c.h.b16 %v535
    %v1649 = vunpack.c.l.b16 %v536
    %v1650 = vunpack.c.h.b16 %v536
    %v1651 = vunpack.c.l.b16 %v537
    %v1652 = vunpack.c.h.b16 %v537
    %v1653 = vunpack.c.l.b16 %v538
    %v1654 = vunpack.c.h.b16 %v538
    %v1655 = vunpack.c.l.b16 %v539
    %v1656 = vunpack.c.h.b16 %v539
    %v1657 = vunpack.c.l.b16 %v540
    %v1658 = vunpack.c.h.b16 %v540
    %v1659 = vunpack.c.l.b16 %v541
    %v1660 = vunpack.c.h.b16 %v541
    %v1661 = vunpack.c.l.b16 %v542
    %v1662 = vunpack.c.h.b16 %v542
    %v1663 = vunpack.c.l.b16 %v543
    %v1664 = vunpack.c.h.b16 %v543
    %v1665 = vunpack.c.l.b16 %v544
    %v1666 = vunpack.c.h.b16 %v544
    %v1667 = vunpack.c.l.b16 %v545
    %v1668 = vunpack.c.h.b16 %v545
    %v1669 = vunpack.c.l.b16 %v546
    %v1670 = vunpack.c.h.b16 %v546
    %v1671 = vunpack.c.l.b16 %v547
    %v1672 = vunpack.c.h.b16 %v547
    %v1673 = vunpack.c.l.b16 %v548
    %v1674 = vunpack.c.h.b16 %v548
    %v1675 = vunpack.c.l.b16 %v549
    %v1676 = vunpack.c.h.b16 %v549
    %v1677 = vunpack.c.l.b16 %v550
    %v1678 = vunpack.c.h.b16 %v550
    %v1679 = vunpack.c.l.b16 %v551
    %v1680 = vunpack.c.h.b16 %v551
    %v1681 = vunpack.c.l.b16 %v552
    %v1682 = vunpack.c.h.b16 %v552
    %v1683 = vunpack.c.l.b16 %v553
    %v1684 = vunpack.c.h.b16 %v553
    %v1685 = vunpack.c.l.b16 %v554
    %v1686 = vunpack.c.h.b16 %v554
    %v1687 = vunpack.c.l.b16 %v555
    %v1688 = vunpack.c.h.b16 %v555
    %v1689 = vunpack.c.l.b16 %v556
    %v1690 = vunpack.c.h.b16 %v556
    %v1691 = vunpack.c.l.b16 %v557
    %v1692 = vunpack.c.h.b16 %v557
    %v1693 = vunpack.c.l.b16 %v558
    %v1694 = vunpack.c.h.b16 %v558
    %v1695 = vunpack.c.l.b16 %v559
    %v1696 = vunpack.c.h.b16 %v559
    %v1697 = vunpack.c.l.b16 %v560
    %v1698 = vunpack.c.h.b16 %v560
    %v1699 = vunpack.c.l.b16 %v561
    %v1700 = vunpack.c.h.b16 %v561
    %v1701 = vunpack.c.l.b16 %v562
    %v1702 = vunpack.c.h.b16 %v562
    %v1703 = vunpack.c.l.b16 %v563
    %v1704 = vunpack.c.h.b16 %v563
    %v1705 = vunpack.c.l.b16 %v564
    %v1706 = vunpack.c.h.b16 %v564
    %v1707 = vunpack.c.l.b16 %v565
    %v1708 = vunpack.c.h.b16 %v565
    %v1709 = vunpack.c.l.b16 %v566
    %v1710 = vunpack.c.h.b16 %v566
    %v1711 = vunpack.c.l.b16 %v567
    %v1712 = vunpack.c.h.b16 %v567
    %v1713 = vunpack.c.l.b16 %v568
    %v1714 = vunpack.c.h.b16 %v568
    %v1715 = vunpack.c.l.b16 %v569
    %v1716 = vunpack.c.h.b16 %v569
    %v1717 = vunpack.c.l.b16 %v570
    %v1718 = vunpack.c.h.b16 %v570
    %v1719 = vunpack.c.l.b16 %v571
    %v1720 = vunpack.c.h.b16 %v571
    %v1721 = vunpack.c.l.b16 %v572
    %v1722 = vunpack.c.h.b16 %v572
    %v1723 = vunpack.c.l.b16 %v573
    %v1724 = vunpack.c.h.b16 %v573
    %v1725 = vunpack.c.l.b16 %v574
    %v1726 = vunpack.c.h.b16 %v574
    %v1727 = vunpack.c.l.b16 %v575
    %v1728 = vunpack.c.h.b16 %v575
    %v1729 = vunpack.c.l.b16 %v576
    %v1730 = vunpack.c.h.b16 %v576
    %v1731 = vunpack.c.l.b16 %v577
    %v1732 = vunpack.c.h.b16 %v577
    %v1733 = vunpack.c.l.b16 %v578
    %v1734 = vunpack.c.h.b16 %v578
    %v1735 = vunpack.c.l.b16 %v579
    %v1736 = vunpack.c.h.b16 %v579
    %v1737 = vunpack.c.l.b16 %v580
    %v1738 = vunpack.c.h.b16 %v580
    %v1739 = vunpack.c.l.b16 %v581
    %v1740 = vunpack.c.h.b16 %v581
    %v1741 = vunpack.c.l.b16 %v582
    %v1742 = vunpack.c.h.b16 %v582
    %v1743 = vunpack.c.l.b16 %v583
    %v1744 = vunpack.c.h.b16 %v583
    %v1745 = vunpack.c.l.b16 %v584
    %v1746 = vunpack.c.h.b16 %v584
    %v1747 = vunpack.c.l.b16 %v585
    %v1748 = vunpack.c.h.b16 %v585
    %v1749 = vunpack.c.l.b16 %v586
    %v1750 = vunpack.c.h.b16 %v586
    %v1751 = vunpack.c.l.b16 %v587
    %v1752 = vunpack.c.h.b16 %v587
    %v1753 = vunpack.c.l.b16 %v588
    %v1754 = vunpack.c.h.b16 %v588
    %v1755 = vunpack.c.l.b16 %v589
    %v1756 = vunpack.c.h.b16 %v589
    %v1757 = vunpack.c.l.b16 %v590
    %v1758 = vunpack.c.h.b16 %v590
    %v1759 = vunpack.c.l.b16 %v591
    %v1760 = vunpack.c.h.b16 %v591
    %v1761 = vunpack.c.l.b16 %v592
    %v1762 = vunpack.c.h.b16 %v592
    %v1763 = vunpack.c.l.b16 %v593
    %v1764 = vunpack.c.h.b16 %v593
    %v1765 = vunpack.c.l.b16 %v594
    %v1766 = vunpack.c.h.b16 %v594
    %v1767 = vunpack.c.l.b16 %v595
    %v1768 = vunpack.c.h.b16 %v595
    %v1769 = vunpack.c.l.b16 %v596
    %v1770 = vunpack.c.h.b16 %v596
    %v1771 = vunpack.c.l.b16 %v597
    %v1772 = vunpack.c.h.b16 %v597
    %v1773 = vunpack.c.l.b16 %v598
    %v1774 = vunpack.c.h.b16 %v598
    %v1775 = vunpack.c.l.b16 %v599
    %v1776 = vunpack.c.h.b16 %v599
    %v1777 = vunpack.c.l.b16 %v600
    %v1778 = vunpack.c.h.b16 %v600
    %v1779 = vunpack.c.l.b16 %v601
    %v1780 = vunpack.c.h.b16 %v601
    %v1781 = vunpack.c.l.b16 %v602
    %v1782 = vunpack.c.h.b16 %v602
    %v1783 = vunpack.c.l.b16 %v603
    %v1784 = vunpack.c.h.b16 %v603
    %v1785 = vunpack.c.l.b16 %v604
    %v1786 = vunpack.c.h.b16 %v604
    %v1787 = vunpack.c.l.b16 %v605
    %v1788 = vunpack.c.h.b16 %v605
    %v1789 = vunpack.c.l.b16 %v606
    %v1790 = vunpack.c.h.b16 %v606
    %v1791 = vunpack.c.l.b16 %v607
    %v1792 = vunpack.c.h.b16 %v607
    %v1793 = vunpack.c.l.b16 %v608
    %v1794 = vunpack.c.h.b16 %v608
    %v1795 = vunpack.c.l.b16 %v609
    %v1796 = vunpack.c.h.b16 %v609
    %v1797 = vunpack.c.l.b16 %v610
    %v1798 = vunpack.c.h.b16 %v610
    %v1799 = vunpack.c.l.b16 %v611
    %v1800 = vunpack.c.h.b16 %v611
    %v1801 = vunpack.c.l.b16 %v612
    %v1802 = vunpack.c.h.b16 %v612
    %v1803 = vunpack.c.l.b16 %v613
    %v1804 = vunpack.c.h.b16 %v613
    %v1805 = vunpack.c.l.b16 %v614
    %v1806 = vunpack.c.h.b16 %v614
    %v1807 = vunpack.c.l.b16 %v615
    %v1808 = vunpack.c.h.b16 %v615
    %v1809 = vunpack.c.l.b16 %v616
    %v1810 = vunpack.c.h.b16 %v616
    %v1811 = vunpack.c.l.b16 %v617
    %v1812 = vunpack.c.h.b16 %v617
    %v1813 = vunpack.c.l.b16 %v618
    %v1814 = vunpack.c.h.b16 %v618
    %v1815 = vunpack.c.l.b16 %v619
    %v1816 = vunpack.c.h.b16 %v619
    %v1817 = vunpack.c.l.b16 %v620
    %v1818 = vunpack.c.h.b16 %v620
    %v1819 = vunpack.c.l.b16 %v621
    %v1820 = vunpack.c.h.b16 %v621
    %v1821 = vunpack.c.l.b16 %v622
    %v1822 = vunpack.c.h.b16 %v622
    %v1823 = vunpack.c.l.b16 %v623
    %v1824 = vunpack.c.h.b16 %v623
    %v1825 = vunpack.c.l.b16 %v624
    %v1826 = vunpack.c.h.b16 %v624
    %v1827 = vunpack.c.l.b16 %v625
    %v1828 = vunpack.c.h.b16 %v625
    %v1829 = vunpack.c.l.b16 %v626
    %v1830 = vunpack.c.h.b16 %v626
    %v1831 = vunpack.c.l.b16 %v627
    %v1832 = vunpack.c.h.b16 %v627
    %v1833 = vunpack.c.l.b16 %v628
    %v1834 = vunpack.c.h.b16 %v628
    %v1835 = vunpack.c.l.b16 %v629
    %v1836 = vunpack.c.h.b16 %v629
    %v1837 = vunpack.c.l.b16 %v630
    %v1838 = vunpack.c.h.b16 %v630
    %v1839 = vunpack.c.l.b16 %v631
    %v1840 = vunpack.c.h.b16 %v631
    %v1841 = vunpack.c.l.b16 %v632
    %v1842 = vunpack.c.h.b16 %v632
    %v1843 = vunpack.c.l.b16 %v633
    %v1844 = vunpack.c.h.b16 %v633
    %v1845 = vunpack.c.l.b16 %v634
    %v1846 = vunpack.c.h.b16 %v634
    %v1847 = vunpack.c.l.b16 %v635
    %v1848 = vunpack.c.h.b16 %v635
    %v1849 = vunpack.c.l.b16 %v636
    %v1850 = vunpack.c.h.b16 %v636
    %v1851 = vunpack.c.l.b16 %v637
    %v1852 = vunpack.c.h.b16 %v637
    %v1853 = vunpack.c.l.b16 %v638
    %v1854 = vunpack.c.h.b16 %v638
    %v1855 = vunpack.c.l.b16 %v639
    %v1856 = vunpack.c.h.b16 %v639
    %v1857 = vunpack.c.l.b16 %v640
    %v1858 = vunpack.c.h.b16 %v640
    %v1859 = vpack.c.b16 %v1083, %v1075
    %v1860 = vpack.c.b16 %v1084, %v1076
    %v1861 = vpack.c.b16 %v1085, %v1077
    %v1862 = vpack.c.b16 %v1086, %v1078
    %v1863 = vpack.c.b16 %v1087, %v1079
    %v1864 = vpack.c.b16 %v1088, %v1080
    %v1865 = vpack.c.b16 %v1089, %v1081
    %v1866 = vpack.c.b16 %v1090, %v1082
    %v1867 = vpack.c.b16 %v1099, %v1091
    %v1868 = vpack.c.b16 %v1100, %v1092
    %v1869 = vpack.c.b16 %v1101, %v1093
    %v1870 = vpack.c.b16 %v1102, %v1094
    %v1871 = vpack.c.b16 %v1103, %v1095
    %v1872 = vpack.c.b16 %v1104, %v1096
    %v1873 = vpack.c.b16 %v1105, %v1097
    %v1874 = vpack.c.b16 %v1106, %v1098
    %v1875 = vpack.c.b16 %v1115, %v1107
    %v1876 = vpack.c.b16 %v1116, %v1108
    %v1877 = vpack.c.b16 %v1117, %v1109
    %v1878 = vpack.c.b16 %v1118, %v1110
    %v1879 = vpack.c.b16 %v1119, %v1111
    %v1880 = vpack.c.b16 %v1120, %v1112
    %v1881 = vpack.c.b16 %v1121, %v1113
    %v1882 = vpack.c.b16 %v1122, %v1114
    %v1883 = vpack.c.b16 %v1131, %v1123
    %v1884 = vpack.c.b16 %v1132, %v1124
    %v1885 = vpack.c.b16 %v1133, %v1125
    %v1886 = vpack.c.b16 %v1134, %v1126
    %v1887 = vpack.c.b16 %v1135, %v1127
    %v1888 = vpack.c.b16 %v1136, %v1128
    %v1889 = vpack.c.b16 %v1137, %v1129
    %v1890 = vpack.c.b16 %v1138, %v1130
    %v1891 = vpack.c.b16 %v1147, %v1139
    %v1892 = vpack.c.b16 %v1148, %v1140
    %v1893 = vpack.c.b16 %v1149, %v1141
    %v1894 = vpack.c.b16 %v1150, %v1142
    %v1895 = vpack.c.b16 %v1151, %v1143
    %v1896 = vpack.c.b16 %v1152, %v1144
    %v1897 = vpack.c.b16 %v1153, %v1145
    %v1898 = vpack.c.b16 %v1154, %v1146
    %v1899 = vpack.c.b16 %v1163, %v1155
    %v1900 = vpack.c.b16 %v1164, %v1156
    %v1901 = vpack.c.b16 %v1165, %v1157
    %v1902 = vpack.c.b16 %v1166, %v1158
    %v1903 = vpack.c.b16 %v1167, %v1159
    %v1904 = vpack.c.b16 %v1168, %v1160
    %v1905 = vpack.c.b16 %v1169, %v1161
    %v1906 = vpack.c.b16 %v1170, %v1162
    %v1907 = vpack.c.b16 %v1179, %v1171
    %v1908 = vpack.c.b16 %v1180, %v1172
    %v1909 = vpack.c.b16 %v1181, %v1173
    %v1910 = vpack.c.b16 %v1182, %v1174
    %v1911 = vpack.c.b16 %v1183, %v1175
    %v1912 = vpack.c.b16 %v1184, %v1176
    %v1913 = vpack.c.b16 %v1185, %v1177
    %v1914 = vpack.c.b16 %v1186, %v1178
    %v1915 = vpack.c.b16 %v1195, %v1187
    %v1916 = vpack.c.b16 %v1196, %v1188
    %v1917 = vpack.c.b16 %v1197, %v1189
    %v1918 = vpack.c.b16 %v1198, %v1190
    %v1919 = vpack.c.b16 %v1199, %v1191
    %v1920 = vpack.c.b16 %v1200, %v1192
    %v1921 = vpack.c.b16 %v1201, %v1193
    %v1922 = vpack.c.b16 %v1202, %v1194
    %v1923 = vpack.c.b16 %v1211, %v1203
    %v1924 = vpack.c.b16 %v1212, %v1204
    %v1925 = vpack.c.b16 %v1213, %v1205
    %v1926 = vpack.c.b16 %v1214, %v1206
    %v1927 = vpack.c.b16 %v1215, %v1207
    %v1928 = vpack.c.b16 %v1216, %v1208
    %v1929 = vpack.c.b16 %v1217, %v1209
    %v1930 = vpack.c.b16 %v1218, %v1210
    %v1931 = vpack.c.b16 %v1227, %v1219
    %v1932 = vpack.c.b16 %v1228, %v1220
    %v1933 = vpack.c.b16 %v1229, %v1221
    %v1934 = vpack.c.b16 %v1230, %v1222
    %v1935 = vpack.c.b16 %v1231, %v1223
    %v1936 = vpack.c.b16 %v1232, %v1224
    %v1937 = vpack.c.b16 %v1233, %v1225
    %v1938 = vpack.c.b16 %v1234, %v1226
    %v1939 = vpack.c.b16 %v1243, %v1235
    %v1940 = vpack.c.b16 %v1244, %v1236
    %v1941 = vpack.c.b16 %v1245, %v1237
    %v1942 = vpack.c.b16 %v1246, %v1238
    %v1943 = vpack.c.b16 %v1247, %v1239
    %v1944 = vpack.c.b16 %v1248, %v1240
    %v1945 = vpack.c.b16 %v1249, %v1241
    %v1946 = vpack.c.b16 %v1250, %v1242
    %v1947 = vpack.c.b16 %v1259, %v1251
    %v1948 = vpack.c.b16 %v1260, %v1252
    %v1949 = vpack.c.b16 %v1261, %v1253
    %v1950 = vpack.c.b16 %v1262, %v1254
    %v1951 = vpack.c.b16 %v1263, %v1255
    %v1952 = vpack.c.b16 %v1264, %v1256
    %v1953 = vpack.c.b16 %v1265, %v1257
    %v1954 = vpack.c.b16 %v1266, %v1258
    %v1955 = vpack.c.b16 %v1275, %v1267
    %v1956 = vpack.c.b16 %v1276, %v1268
    %v1957 = vpack.c.b16 %v1277, %v1269
    %v1958 = vpack.c.b16 %v1278, %v1270
    %v1959 = vpack.c.b16 %v1279, %v1271
    %v1960 = vpack.c.b16 %v1280, %v1272
    %v1961 = vpack.c.b16 %v1281, %v1273
    %v1962 = vpack.c.b16 %v1282, %v1274
    %v1963 = vpack.c.b16 %v1291, %v1283
    %v1964 = vpack.c.b16 %v1292, %v1284
    %v1965 = vpack.c.b16 %v1293, %v1285
    %v1966 = vpack.c.b16 %v1294, %v1286
    %v1967 = vpack.c.b16 %v1295, %v1287
    %v1968 = vpack.c.b16 %v1296, %v1288
    %v1969 = vpack.c.b16 %v1297, %v1289
    %v1970 = vpack.c.b16 %v1298, %v1290
    %v1971 = vpack.c.b16 %v1307, %v1299
    %v1972 = vpack.c.b16 %v1308, %v1300
    %v1973 = vpack.c.b16 %v1309, %v1301
    %v1974 = vpack.c.b16 %v1310, %v1302
    %v1975 = vpack.c.b16 %v1311, %v1303
    %v1976 = vpack.c.b16 %v1312, %v1304
    %v1977 = vpack.c.b16 %v1313, %v1305
    %v1978 = vpack.c.b16 %v1314, %v1306
    %v1979 = vpack.c.b16 %v1323, %v1315
    %v1980 = vpack.c.b16 %v1324, %v1316
    %v1981 = vpack.c.b16 %v1325, %v1317
    %v1982 = vpack.c.b16 %v1326, %v1318
    %v1983 = vpack.c.b16 %v1327, %v1319
    %v1984 = vpack.c.b16 %v1328, %v1320
    %v1985 = vpack.c.b16 %v1329, %v1321
    %v1986 = vpack.c.b16 %v1330, %v1322
    %v1987 = vpack.c.b16 %v1339, %v1331
    %v1988 = vpack.c.b16 %v1340, %v1332
    %v1989 = vpack.c.b16 %v1341, %v1333
    %v1990 = vpack.c.b16 %v1342, %v1334
    %v1991 = vpack.c.b16 %v1343, %v1335
    %v1992 = vpack.c.b16 %v1344, %v1336
    %v1993 = vpack.c.b16 %v1345, %v1337
    %v1994 = vpack.c.b16 %v1346, %v1338
    %v1995 = vpack.c.b16 %v1355, %v1347
    %v1996 = vpack.c.b16 %v1356, %v1348
    %v1997 = vpack.c.b16 %v1357, %v1349
    %v1998 = vpack.c.b16 %v1358, %v1350
    %v1999 = vpack.c.b16 %v1359, %v1351
    %v2000 = vpack.c.b16 %v1360, %v1352
    %v2001 = vpack.c.b16 %v1361, %v1353
    %v2002 = vpack.c.b16 %v1362, %v1354
    %v2003 = vpack.c.b16 %v1371, %v1363
    %v2004 = vpack.c.b16 %v1372, %v1364
    %v2005 = vpack.c.b16 %v1373, %v1365
    %v2006 = vpack.c.b16 %v1374, %v1366
    %v2007 = vpack.c.b16 %v1375, %v1367
    %v2008 = vpack.c.b16 %v1376, %v1368
    %v2009 = vpack.c.b16 %v1377, %v1369
    %v2010 = vpack.c.b16 %v1378, %v1370
    %v2011 = vpack.c.b16 %v1387, %v1379
    %v2012 = vpack.c.b16 %v1388, %v1380
    %v2013 = vpack.c.b16 %v1389, %v1381
    %v2014 = vpack.c.b16 %v1390, %v1382
    %v2015 = vpack.c.b16 %v1391, %v1383
    %v2016 = vpack.c.b16 %v1392, %v1384
    %v2017 = vpack.c.b16 %v1393, %v1385
    %v2018 = vpack.c.b16 %v1394, %v1386
    %v2019 = vpack.c.b16 %v1403, %v1395
    %v2020 = vpack.c.b16 %v1404, %v1396
    %v2021 = vpack.c.b16 %v1405, %v1397
    %v2022 = vpack.c.b16 %v1406, %v1398
    %v2023 = vpack.c.b16 %v1407, %v1399
    %v2024 = vpack.c.b16 %v1408, %v1400
    %v2025 = vpack.c.b16 %v1409, %v1401
    %v2026 = vpack.c.b16 %v1410, %v1402
    %v2027 = vpack.c.b16 %v1419, %v1411
    %v2028 = vpack.c.b16 %v1420, %v1412
    %v2029 = vpack.c.b16 %v1421, %v1413
    %v2030 = vpack.c.b16 %v1422, %v1414
    %v2031 = vpack.c.b16 %v1423, %v1415
    %v2032 = vpack.c.b16 %v1424, %v1416
    %v2033 = vpack.c.b16 %v1425, %v1417
    %v2034 = vpack.c.b16 %v1426, %v1418
    %v2035 = vpack.c.b16 %v1435, %v1427
    %v2036 = vpack.c.b16 %v1436, %v1428
    %v2037 = vpack.c.b16 %v1437, %v1429
    %v2038 = vpack.c.b16 %v1438, %v1430
    %v2039 = vpack.c.b16 %v1439, %v1431
    %v2040 = vpack.c.b16 %v1440, %v1432
    %v2041 = vpack.c.b16 %v1441, %v1433
    %v2042 = vpack.c.b16 %v1442, %v1434
    %v2043 = vpack.c.b16 %v1451, %v1443
    %v2044 = vpack.c.b16 %v1452, %v1444
    %v2045 = vpack.c.b16 %v1453, %v1445
    %v2046 = vpack.c.b16 %v1454, %v1446
    %v2047 = vpack.c.b16 %v1455, %v1447
    %v2048 = vpack.c.b16 %v1456, %v1448
    %v2049 = vpack.c.b16 %v1457, %v1449
    %v2050 = vpack.c.b16 %v1458, %v1450
    %v2051 = vpack.c.b16 %v1467, %v1459
    %v2052 = vpack.c.b16 %v1468, %v1460
    %v2053 = vpack.c.b16 %v1469, %v1461
    %v2054 = vpack.c.b16 %v1470, %v1462
    %v2055 = vpack.c.b16 %v1471, %v1463
    %v2056 = vpack.c.b16 %v1472, %v1464
    %v2057 = vpack.c.b16 %v1473, %v1465
    %v2058 = vpack.c.b16 %v1474, %v1466
    %v2059 = vpack.c.b16 %v1483, %v1475
    %v2060 = vpack.c.b16 %v1484, %v1476
    %v2061 = vpack.c.b16 %v1485, %v1477
    %v2062 = vpack.c.b16 %v1486, %v1478
    %v2063 = vpack.c.b16 %v1487, %v1479
    %v2064 = vpack.c.b16 %v1488, %v1480
    %v2065 = vpack.c.b16 %v1489, %v1481
    %v2066 = vpack.c.b16 %v1490, %v1482
    %v2067 = vpack.c.b16 %v1499, %v1491
    %v2068 = vpack.c.b16 %v1500, %v1492
    %v2069 = vpack.c.b16 %v1501, %v1493
    %v2070 = vpack.c.b16 %v1502, %v1494
    %v2071 = vpack.c.b16 %v1503, %v1495
    %v2072 = vpack.c.b16 %v1504, %v1496
    %v2073 = vpack.c.b16 %v1505, %v1497
    %v2074 = vpack.c.b16 %v1506, %v1498
    %v2075 = vpack.c.b16 %v1515, %v1507
    %v2076 = vpack.c.b16 %v1516, %v1508
    %v2077 = vpack.c.b16 %v1517, %v1509
    %v2078 = vpack.c.b16 %v1518, %v1510
    %v2079 = vpack.c.b16 %v1519, %v1511
    %v2080 = vpack.c.b16 %v1520, %v1512
    %v2081 = vpack.c.b16 %v1521, %v1513
    %v2082 = vpack.c.b16 %v1522, %v1514
    %v2083 = vpack.c.b16 %v1531, %v1523
    %v2084 = vpack.c.b16 %v1532, %v1524
    %v2085 = vpack.c.b16 %v1533, %v1525
    %v2086 = vpack.c.b16 %v1534, %v1526
    %v2087 = vpack.c.b16 %v1535, %v1527
    %v2088 = vpack.c.b16 %v1536, %v1528
    %v2089 = vpack.c.b16 %v1537, %v1529
    %v2090 = vpack.c.b16 %v1538, %v1530
    %v2091 = vpack.c.b16 %v1547, %v1539
    %v2092 = vpack.c.b16 %v1548, %v1540
    %v2093 = vpack.c.b16 %v1549, %v1541
    %v2094 = vpack.c.b16 %v1550, %v1542
    %v2095 = vpack.c.b16 %v1551, %v1543
    %v2096 = vpack.c.b16 %v1552, %v1544
    %v2097 = vpack.c.b16 %v1553, %v1545
    %v2098 = vpack.c.b16 %v1554, %v1546
    %v2099 = vpack.c.b16 %v1563, %v1555
    %v2100 = vpack.c.b16 %v1564, %v1556
    %v2101 = vpack.c.b16 %v1565, %v1557
    %v2102 = vpack.c.b16 %v1566, %v1558
    %v2103 = vpack.c.b16 %v1567, %v1559
    %v2104 = vpack.c.b16 %v1568, %v1560
    %v2105 = vpack.c.b16 %v1569, %v1561
    %v2106 = vpack.c.b16 %v1570, %v1562
    %v2107 = vpack.c.b16 %v1579, %v1571
    %v2108 = vpack.c.b16 %v1580, %v1572
    %v2109 = vpack.c.b16 %v1581, %v1573
    %v2110 = vpack.c.b16 %v1582, %v1574
    %v2111 = vpack.c.b16 %v1583, %v1575
    %v2112 = vpack.c.b16 %v1584, %v1576
    %v2113 = vpack.c.b16 %v1585, %v1577
    %v2114 = vpack.c.b16 %v1586, %v1578
    %v2115 = vpack.c.b16 %v1595, %v1587
    %v2116 = vpack.c.b16 %v1596, %v1588
    %v2117 = vpack.c.b16 %v1597, %v1589
    %v2118 = vpack.c.b16 %v1598, %v1590
    %v2119 = vpack.c.b16 %v1599, %v1591
    %v2120 = vpack.c.b16 %v1600, %v1592
    %v2121 = vpack.c.b16 %v1601, %v1593
    %v2122 = vpack.c.b16 %v1602, %v1594
    %v2123 = vpack.c.b16 %v1611, %v1603
    %v2124 = vpack.c.b16 %v1612, %v1604
    %v2125 = vpack.c.b16 %v1613, %v1605
    %v2126 = vpack.c.b16 %v1614, %v1606
    %v2127 = vpack.c.b16 %v1615, %v1607
    %v2128 = vpack.c.b16 %v1616, %v1608
    %v2129 = vpack.c.b16 %v1617, %v1609
    %v2130 = vpack.c.b16 %v1618, %v1610
    %v2131 = vpack.c.b16 %v1627, %v1619
    %v2132 = vpack.c.b16 %v1628, %v1620
    %v2133 = vpack.c.b16 %v1629, %v1621
    %v2134 = vpack.c.b16 %v1630, %v1622
    %v2135 = vpack.c.b16 %v1631, %v1623
    %v2136 = vpack.c.b16 %v1632, %v1624
    %v2137 = vpack.c.b16 %v1633, %v1625
    %v2138 = vpack.c.b16 %v1634, %v1626
    %v2139 = vpack.c.b16 %v1643, %v1635
    %v2140 = vpack.c.b16 %v1644, %v1636
    %v2141 = vpack.c.b16 %v1645, %v1637
    %v2142 = vpack.c.b16 %v1646, %v1638
    %v2143 = vpack.c.b16 %v1647, %v1639
    %v2144 = vpack.c.b16 %v1648, %v1640
    %v2145 = vpack.c.b16 %v1649, %v1641
    %v2146 = vpack.c.b16 %v1650, %v1642
    %v2147 = vpack.c.b16 %v1659, %v1651
    %v2148 = vpack.c.b16 %v1660, %v1652
    %v2149 = vpack.c.b16 %v1661, %v1653
    %v2150 = vpack.c.b16 %v1662, %v1654
    %v2151 = vpack.c.b16 %v1663, %v1655
    %v2152 = vpack.c.b16 %v1664, %v1656
    %v2153 = vpack.c.b16 %v1665, %v1657
    %v2154 = vpack.c.b16 %v1666, %v1658
    %v2155 = vpack.c.b16 %v1675, %v1667
    %v2156 = vpack.c.b16 %v1676, %v1668
    %v2157 = vpack.c.b16 %v1677, %v1669
    %v2158 = vpack.c.b16 %v1678, %v1670
    %v2159 = vpack.c.b16 %v1679, %v1671
    %v2160 = vpack.c.b16 %v1680, %v1672
    %v2161 = vpack.c.b16 %v1681, %v1673
    %v2162 = vpack.c.b16 %v1682, %v1674
    %v2163 = vpack.c.b16 %v1691, %v1683
    %v2164 = vpack.c.b16 %v1692, %v1684
    %v2165 = vpack.c.b16 %v1693, %v1685
    %v2166 = vpack.c.b16 %v1694, %v1686
    %v2167 = vpack.c.b16 %v1695, %v1687
    %v2168 = vpack.c.b16 %v1696, %v1688
    %v2169 = vpack.c.b16 %v1697, %v1689
    %v2170 = vpack.c.b16 %v1698, %v1690
    %v2171 = vpack.c.b16 %v1707, %v1699
    %v2172 = vpack.c.b16 %v1708, %v1700
    %v2173 = vpack.c.b16 %v1709, %v1701
    %v2174 = vpack.c.b16 %v1710, %v1702
    %v2175 = vpack.c.b16 %v1711, %v1703
    %v2176 = vpack.c.b16 %v1712, %v1704
    %v2177 = vpack.c.b16 %v1713, %v1705
    %v2178 = vpack.c.b16 %v1714, %v1706
    %v2179 = vpack.c.b16 %v1723, %v1715
    %v2180 = vpack.c.b16 %v1724, %v1716
    %v2181 = vpack.c.b16 %v1725, %v1717
    %v2182 = vpack.c.b16 %v1726, %v1718
    %v2183 = vpack.c.b16 %v1727, %v1719
    %v2184 = vpack.c.b16 %v1728, %v1720
    %v2185 = vpack.c.b16 %v1729, %v1721
    %v2186 = vpack.c.b16 %v1730, %v1722
    %v2187 = vpack.c.b16 %v1739, %v1731
    %v2188 = vpack.c.b16 %v1740, %v1732
    %v2189 = vpack.c.b16 %v1741, %v1733
    %v2190 = vpack.c.b16 %v1742, %v1734
    %v2191 = vpack.c.b16 %v1743, %v1735
    %v2192 = vpack.c.b16 %v1744, %v1736
    %v2193 = vpack.c.b16 %v1745, %v1737
    %v2194 = vpack.c.b16 %v1746, %v1738
    %v2195 = vpack.c.b16 %v1755, %v1747
    %v2196 = vpack.c.b16 %v1756, %v1748
    %v2197 = vpack.c.b16 %v1757, %v1749
    %v2198 = vpack.c.b16 %v1758, %v1750
    %v2199 = vpack.c.b16 %v1759, %v1751
    %v2200 = vpack.c.b16 %v1760, %v1752
    %v2201 = vpack.c.b16 %v1761, %v1753
    %v2202 = vpack.c.b16 %v1762, %v1754
    %v2203 = vpack.c.b16 %v1771, %v1763
    %v2204 = vpack.c.b16 %v1772, %v1764
    %v2205 = vpack.c.b16 %v1773, %v1765
    %v2206 = vpack.c.b16 %v1774, %v1766
    %v2207 = vpack.c.b16 %v1775, %v1767
    %v2208 = vpack.c.b16 %v1776, %v1768
    %v2209 = vpack.c.b16 %v1777, %v1769
    %v2210 = vpack.c.b16 %v1778, %v1770
    %v2211 = vpack.c.b16 %v1787, %v1779
    %v2212 = vpack.c.b16 %v1788, %v1780
    %v2213 = vpack.c.b16 %v1789, %v1781
    %v2214 = vpack.c.b16 %v1790, %v1782
    %v2215 = vpack.c.b16 %v1791, %v1783
    %v2216 = vpack.c.b16 %v1792, %v1784
    %v2217 = vpack.c.b16 %v1793, %v1785
    %v2218 = vpack.c.b16 %v1794, %v1786
    %v2219 = vpack.c.b16 %v1803, %v1795
    %v2220 = vpack.c.b16 %v1804, %v1796
    %v2221 = vpack.c.b16 %v1805, %v1797
    %v2222 = vpack.c.b16 %v1806, %v1798
    %v2223 = vpack.c.b16 %v1807, %v1799
    %v2224 = vpack.c.b16 %v1808, %v1800
    %v2225 = vpack.c.b16 %v1809, %v1801
    %v2226 = vpack.c.b16 %v1810, %v1802
    %v2227 = vpack.c.b16 %v1819, %v1811
    %v2228 = vpack.c.b16 %v1820, %v1812
    %v2229 = vpack.c.b16 %v1821, %v1813
    %v2230 = vpack.c.b16 %v1822, %v1814
    %v2231 = vpack.c.b16 %v1823, %v1815
    %v2232 = vpack.c.b16 %v1824, %v1816
    %v2233 = vpack.c.b16 %v1825, %v1817
    %v2234 = vpack.c.b16 %v1826, %v1818
    %v2235 = vpack.c.b16 %v1835, %v1827
    %v2236 = vpack.c.b16 %v1836, %v1828
    %v2237 = vpack.c.b16 %v1837, %v1829
    %v2238 = vpack.c.b16 %v1838, %v1830
    %v2239 = vpack.c.b16 %v1839, %v1831
    %v2240 = vpack.c.b16 %v1840, %v1832
    %v2241 = vpack.c.b16 %v1841, %v1833
    %v2242 = vpack.c.b16 %v1842, %v1834
    %v2243 = vpack.c.b16 %v1851, %v1843
    %v2244 = vpack.c.b16 %v1852, %v1844
    %v2245 = vpack.c.b16 %v1853, %v1845
    %v2246 = vpack.c.b16 %v1854, %v1846
    %v2247 = vpack.c.b16 %v1855, %v1847
    %v2248 = vpack.c.b16 %v1856, %v1848
    %v2249 = vpack.c.b16 %v1857, %v1849
    %v2250 = vpack.c.b16 %v1858, %v1850
    %vm2643 = vcmask 130048
    %v2645 = vsel %vm2643, %v248, 0
    %2647 = vmatprep.subr.bf16.mxu0 %v1860
    %2648 = vmatpush1.bf16.msra.mxu0 %v1859
    %2649 = vmatprep.subr.bf16.mxu0 %v1868
    %2650 = vmatpush1.bf16.msra.mxu0 %v1867
    %2651 = vmatprep.subr.bf16.mxu0 %v1876
    %2652 = vmatpush1.bf16.msra.mxu0 %v1875
    %2653 = vmatprep.subr.bf16.mxu0 %v1884
    %2654 = vmatpush1.bf16.msra.mxu0 %v1883
    %2655 = vmatprep.subr.bf16.mxu0 %v1892
    %2656 = vmatpush1.bf16.msra.mxu0 %v1891
    %2657 = vmatprep.subr.bf16.mxu0 %v1900
    %2658 = vmatpush1.bf16.msra.mxu0 %v1899
    %2659 = vmatprep.subr.bf16.mxu0 %v1908
    %2660 = vmatpush1.bf16.msra.mxu0 %v1907
    %2661 = vmatprep.subr.bf16.mxu0 %v1916
    %2662 = vmatpush1.bf16.msra.mxu0 %v1915
    %2663 = vmatprep.subr.bf16.mxu0 %v1924
    %2664 = vmatpush1.bf16.msra.mxu0 %v1923
    %2665 = vmatprep.subr.bf16.mxu0 %v1932
    %2666 = vmatpush1.bf16.msra.mxu0 %v1931
    %2667 = vmatprep.subr.bf16.mxu0 %v1940
    %2668 = vmatpush1.bf16.msra.mxu0 %v1939
    %2669 = vmatprep.subr.bf16.mxu0 %v1948
    %2670 = vmatpush1.bf16.msra.mxu0 %v1947
    %2671 = vmatprep.subr.bf16.mxu0 %v1956
    %2672 = vmatpush1.bf16.msra.mxu0 %v1955
    %2673 = vmatprep.subr.bf16.mxu0 %v1964
    %2674 = vmatpush1.bf16.msra.mxu0 %v1963
    %2675 = vmatprep.subr.bf16.mxu0 %v1972
    %2676 = vmatpush1.bf16.msra.mxu0 %v1971
    %2677 = vmatprep.subr.bf16.mxu0 %v1980
    %2678 = vmatpush1.bf16.msra.mxu0 %v1979
    %2679 = vmatprep.mubr.bf16.mxu0 %v243
    %2680 = vmatmul.mubr.bf16.gmra.mrb[0].mxu0 %v242
    %v2681 = vpop.f32.mrb[0].mxu0
    %v2682 = vadd.f32 %v646, %v2681
    %v2683 = vpop.f32.mrb[0].mxu0
    %v2684 = vadd.f32 %v650, %v2683
    %v2685 = vpop.f32.mrb[0].mxu0
    %v2686 = vpop.f32.mrb[0].mxu0
    %2687 = vdwg.mxu0
    %2688 = vmatprep.subr.bf16.mxu0 %v1988
    %2689 = vmatpush1.bf16.msra.mxu0 %v1987
    %2690 = vmatprep.subr.bf16.mxu0 %v1996
    %2691 = vmatpush1.bf16.msra.mxu0 %v1995
    %2692 = vmatprep.subr.bf16.mxu0 %v2004
    %2693 = vmatpush1.bf16.msra.mxu0 %v2003
    %2694 = vmatprep.subr.bf16.mxu0 %v2012
    %2695 = vmatpush1.bf16.msra.mxu0 %v2011
    %2696 = vmatprep.subr.bf16.mxu0 %v2020
    %2697 = vmatpush1.bf16.msra.mxu0 %v2019
    %2698 = vmatprep.subr.bf16.mxu0 %v2028
    %2699 = vmatpush1.bf16.msra.mxu0 %v2027
    %2700 = vmatprep.subr.bf16.mxu0 %v2036
    %2701 = vmatpush1.bf16.msra.mxu0 %v2035
    %2702 = vmatprep.subr.bf16.mxu0 %v2044
    %2703 = vmatpush1.bf16.msra.mxu0 %v2043
    %2704 = vmatprep.subr.bf16.mxu0 %v2052
    %2705 = vmatpush1.bf16.msra.mxu0 %v2051
    %2706 = vmatprep.subr.bf16.mxu0 %v2060
    %2707 = vmatpush1.bf16.msra.mxu0 %v2059
    %2708 = vmatprep.subr.bf16.mxu0 %v2068
    %2709 = vmatpush1.bf16.msra.mxu0 %v2067
    %2710 = vmatprep.subr.bf16.mxu0 %v2076
    %2711 = vmatpush1.bf16.msra.mxu0 %v2075
    %2712 = vmatprep.subr.bf16.mxu0 %v2084
    %2713 = vmatpush1.bf16.msra.mxu0 %v2083
    %2714 = vmatprep.subr.bf16.mxu0 %v2092
    %2715 = vmatpush1.bf16.msra.mxu0 %v2091
    %2716 = vmatprep.subr.bf16.mxu0 %v2100
    %2717 = vmatpush1.bf16.msra.mxu0 %v2099
    %2718 = vmatprep.subr.bf16.mxu0 %v2108
    %2719 = vmatpush1.bf16.msra.mxu0 %v2107
    %2720 = vmatprep.mubr.bf16.mxu0 %v245
    %2721 = vmatmul.mubr.bf16.gmra.mrb[0].mxu0 %v244
    %v2722 = vpop.f32.mrb[0].mxu0
    %v2723 = vadd.f32 %v2682, %v2722
    %v2724 = vpop.f32.mrb[0].mxu0
    %v2725 = vadd.f32 %v2684, %v2724
    %v2726 = vpop.f32.mrb[0].mxu0
    %v2727 = vpop.f32.mrb[0].mxu0
    %2728 = vdwg.mxu0
    %2729 = vmatprep.subr.bf16.mxu0 %v2116
    %2730 = vmatpush1.bf16.msra.mxu0 %v2115
    %2731 = vmatprep.subr.bf16.mxu0 %v2124
    %2732 = vmatpush1.bf16.msra.mxu0 %v2123
    %2733 = vmatprep.subr.bf16.mxu0 %v2132
    %2734 = vmatpush1.bf16.msra.mxu0 %v2131
    %2735 = vmatprep.subr.bf16.mxu0 %v2140
    %2736 = vmatpush1.bf16.msra.mxu0 %v2139
    %2737 = vmatprep.subr.bf16.mxu0 %v2148
    %2738 = vmatpush1.bf16.msra.mxu0 %v2147
    %2739 = vmatprep.subr.bf16.mxu0 %v2156
    %2740 = vmatpush1.bf16.msra.mxu0 %v2155
    %2741 = vmatprep.subr.bf16.mxu0 %v2164
    %2742 = vmatpush1.bf16.msra.mxu0 %v2163
    %2743 = vmatprep.subr.bf16.mxu0 %v2172
    %2744 = vmatpush1.bf16.msra.mxu0 %v2171
    %2745 = vmatprep.subr.bf16.mxu0 %v2180
    %2746 = vmatpush1.bf16.msra.mxu0 %v2179
    %2747 = vmatprep.subr.bf16.mxu0 %v2188
    %2748 = vmatpush1.bf16.msra.mxu0 %v2187
    %2749 = vmatprep.subr.bf16.mxu0 %v2196
    %2750 = vmatpush1.bf16.msra.mxu0 %v2195
    %2751 = vmatprep.subr.bf16.mxu0 %v2204
    %2752 = vmatpush1.bf16.msra.mxu0 %v2203
    %2753 = vmatprep.subr.bf16.mxu0 %v2212
    %2754 = vmatpush1.bf16.msra.mxu0 %v2211
    %2755 = vmatprep.subr.bf16.mxu0 %v2220
    %2756 = vmatpush1.bf16.msra.mxu0 %v2219
    %2757 = vmatprep.subr.bf16.mxu0 %v2228
    %2758 = vmatpush1.bf16.msra.mxu0 %v2227
    %2759 = vmatprep.subr.bf16.mxu0 %v2236
    %2760 = vmatpush1.bf16.msra.mxu0 %v2235
    %2761 = vmatprep.mubr.bf16.mxu0 %v247
    %2762 = vmatmul.mubr.bf16.gmra.mrb[0].mxu0 %v246
    %v2763 = vpop.f32.mrb[0].mxu0
    %v2764 = vadd.f32 %v2723, %v2763
    %v2765 = vpop.f32.mrb[0].mxu0
    %v2766 = vadd.f32 %v2725, %v2765
    %v2767 = vpop.f32.mrb[0].mxu0
    %v2768 = vpop.f32.mrb[0].mxu0
    %2769 = vdwg.mxu0
    %2770 = vmatprep.subr.bf16.mxu0 %v2244
    %2771 = vmatpush1.bf16.msra.mxu0 %v2243
    %2772 = vmatprep.subr.bf16.mxu0 0
    %2773 = vmatpush1.bf16.msra.mxu0 0
    %2774 = vmatprep.subr.bf16.mxu0 0
    %2775 = vmatpush1.bf16.msra.mxu0 0
    %2776 = vmatprep.subr.bf16.mxu0 0
    %2777 = vmatpush1.bf16.msra.mxu0 0
    %2778 = vmatprep.subr.bf16.mxu0 0
    %2779 = vmatpush1.bf16.msra.mxu0 0
    %2780 = vmatprep.subr.bf16.mxu0 0
    %2781 = vmatpush1.bf16.msra.mxu0 0
    %2782 = vmatprep.subr.bf16.mxu0 0
    %2783 = vmatpush1.bf16.msra.mxu0 0
    %2784 = vmatprep.subr.bf16.mxu0 0
    %2785 = vmatpush1.bf16.msra.mxu0 0
    %2786 = vmatprep.subr.bf16.mxu0 0
    %2787 = vmatpush1.bf16.msra.mxu0 0
    %2788 = vmatprep.subr.bf16.mxu0 0
    %2789 = vmatpush1.bf16.msra.mxu0 0
    %2790 = vmatprep.subr.bf16.mxu0 0
    %2791 = vmatpush1.bf16.msra.mxu0 0
    %2792 = vmatprep.subr.bf16.mxu0 0
    %2793 = vmatpush1.bf16.msra.mxu0 0
    %2794 = vmatprep.subr.bf16.mxu0 0
    %2795 = vmatpush1.bf16.msra.mxu0 0
    %2796 = vmatprep.subr.bf16.mxu0 0
    %2797 = vmatpush1.bf16.msra.mxu0 0
    %2798 = vmatprep.subr.bf16.mxu0 0
    %2799 = vmatpush1.bf16.msra.mxu0 0
    %2800 = vmatprep.subr.bf16.mxu0 0
    %2801 = vmatpush1.bf16.msra.mxu0 0
    %2802 = vmatprep.mubr.bf16.mxu0 0
    %2803 = vmatmul.mubr.bf16.gmra.mrb[0].mxu0 %v2645
    %v2804 = vpop.f32.mrb[0].mxu0
    %v2805 = vadd.f32 %v2764, %v2804
    %v2806 = vpop.f32.mrb[0].mxu0
    %v2807 = vadd.f32 %v2766, %v2806
    %v2808 = vpop.f32.mrb[0].mxu0
    %v2809 = vpop.f32.mrb[0].mxu0
    %2810 = vdwg.mxu0
    %2811 = vmatprep.subr.bf16.mxu0 %v1862
    %2812 = vmatpush1.bf16.msra.mxu0 %v1861
    %2813 = vmatprep.subr.bf16.mxu0 %v1870
    %2814 = vmatpush1.bf16.msra.mxu0 %v1869
    %2815 = vmatprep.subr.bf16.mxu0 %v1878
    %2816 = vmatpush1.bf16.msra.mxu0 %v1877
    %2817 = vmatprep.subr.bf16.mxu0 %v1886
    %2818 = vmatpush1.bf16.msra.mxu0 %v1885
    %2819 = vmatprep.subr.bf16.mxu0 %v1894
    %2820 = vmatpush1.bf16.msra.mxu0 %v1893
    %2821 = vmatprep.subr.bf16.mxu0 %v1902
    %2822 = vmatpush1.bf16.msra.mxu0 %v1901
    %2823 = vmatprep.subr.bf16.mxu0 %v1910
    %2824 = vmatpush1.bf16.msra.mxu0 %v1909
    %2825 = vmatprep.subr.bf16.mxu0 %v1918
    %2826 = vmatpush1.bf16.msra.mxu0 %v1917
    %2827 = vmatprep.subr.bf16.mxu0 %v1926
    %2828 = vmatpush1.bf16.msra.mxu0 %v1925
    %2829 = vmatprep.subr.bf16.mxu0 %v1934
    %2830 = vmatpush1.bf16.msra.mxu0 %v1933
    %2831 = vmatprep.subr.bf16.mxu0 %v1942
    %2832 = vmatpush1.bf16.msra.mxu0 %v1941
    %2833 = vmatprep.subr.bf16.mxu0 %v1950
    %2834 = vmatpush1.bf16.msra.mxu0 %v1949
    %2835 = vmatprep.subr.bf16.mxu0 %v1958
    %2836 = vmatpush1.bf16.msra.mxu0 %v1957
    %2837 = vmatprep.subr.bf16.mxu0 %v1966
    %2838 = vmatpush1.bf16.msra.mxu0 %v1965
    %2839 = vmatprep.subr.bf16.mxu0 %v1974
    %2840 = vmatpush1.bf16.msra.mxu0 %v1973
    %2841 = vmatprep.subr.bf16.mxu0 %v1982
    %2842 = vmatpush1.bf16.msra.mxu0 %v1981
    %2843 = vmatprep.mubr.bf16.mxu0 %v243
    %2844 = vmatmul.mubr.bf16.gmra.mrb[0].mxu0 %v242
    %v2845 = vpop.f32.mrb[0].mxu0
    %v2846 = vadd.f32 %v654, %v2845
    %v2847 = vpop.f32.mrb[0].mxu0
    %v2848 = vadd.f32 %v658, %v2847
    %v2849 = vpop.f32.mrb[0].mxu0
    %v2850 = vpop.f32.mrb[0].mxu0
    %2851 = vdwg.mxu0
    %2852 = vmatprep.subr.bf16.mxu0 %v1990
    %2853 = vmatpush1.bf16.msra.mxu0 %v1989
    %2854 = vmatprep.subr.bf16.mxu0 %v1998
    %2855 = vmatpush1.bf16.msra.mxu0 %v1997
    %2856 = vmatprep.subr.bf16.mxu0 %v2006
    %2857 = vmatpush1.bf16.msra.mxu0 %v2005
    %2858 = vmatprep.subr.bf16.mxu0 %v2014
    %2859 = vmatpush1.bf16.msra.mxu0 %v2013
    %2860 = vmatprep.subr.bf16.mxu0 %v2022
    %2861 = vmatpush1.bf16.msra.mxu0 %v2021
    %2862 = vmatprep.subr.bf16.mxu0 %v2030
    %2863 = vmatpush1.bf16.msra.mxu0 %v2029
    %2864 = vmatprep.subr.bf16.mxu0 %v2038
    %2865 = vmatpush1.bf16.msra.mxu0 %v2037
    %2866 = vmatprep.subr.bf16.mxu0 %v2046
    %2867 = vmatpush1.bf16.msra.mxu0 %v2045
    %2868 = vmatprep.subr.bf16.mxu0 %v2054
    %2869 = vmatpush1.bf16.msra.mxu0 %v2053
    %2870 = vmatprep.subr.bf16.mxu0 %v2062
    %2871 = vmatpush1.bf16.msra.mxu0 %v2061
    %2872 = vmatprep.subr.bf16.mxu0 %v2070
    %2873 = vmatpush1.bf16.msra.mxu0 %v2069
    %2874 = vmatprep.subr.bf16.mxu0 %v2078
    %2875 = vmatpush1.bf16.msra.mxu0 %v2077
    %2876 = vmatprep.subr.bf16.mxu0 %v2086
    %2877 = vmatpush1.bf16.msra.mxu0 %v2085
    %2878 = vmatprep.subr.bf16.mxu0 %v2094
    %2879 = vmatpush1.bf16.msra.mxu0 %v2093
    %2880 = vmatprep.subr.bf16.mxu0 %v2102
    %2881 = vmatpush1.bf16.msra.mxu0 %v2101
    %2882 = vmatprep.subr.bf16.mxu0 %v2110
    %2883 = vmatpush1.bf16.msra.mxu0 %v2109
    %2884 = vmatprep.mubr.bf16.mxu0 %v245
    %2885 = vmatmul.mubr.bf16.gmra.mrb[0].mxu0 %v244
    %v2886 = vpop.f32.mrb[0].mxu0
    %v2887 = vadd.f32 %v2846, %v2886
    %v2888 = vpop.f32.mrb[0].mxu0
    %v2889 = vadd.f32 %v2848, %v2888
    %v2890 = vpop.f32.mrb[0].mxu0
    %v2891 = vpop.f32.mrb[0].mxu0
    %2892 = vdwg.mxu0
    %2893 = vmatprep.subr.bf16.mxu0 %v2118
    %2894 = vmatpush1.bf16.msra.mxu0 %v2117
    %2895 = vmatprep.subr.bf16.mxu0 %v2126
    %2896 = vmatpush1.bf16.msra.mxu0 %v2125
    %2897 = vmatprep.subr.bf16.mxu0 %v2134
    %2898 = vmatpush1.bf16.msra.mxu0 %v2133
    %2899 = vmatprep.subr.bf16.mxu0 %v2142
    %2900 = vmatpush1.bf16.msra.mxu0 %v2141
    %2901 = vmatprep.subr.bf16.mxu0 %v2150
    %2902 = vmatpush1.bf16.msra.mxu0 %v2149
    %2903 = vmatprep.subr.bf16.mxu0 %v2158
    %2904 = vmatpush1.bf16.msra.mxu0 %v2157
    %2905 = vmatprep.subr.bf16.mxu0 %v2166
    %2906 = vmatpush1.bf16.msra.mxu0 %v2165
    %2907 = vmatprep.subr.bf16.mxu0 %v2174
    %2908 = vmatpush1.bf16.msra.mxu0 %v2173
    %2909 = vmatprep.subr.bf16.mxu0 %v2182
    %2910 = vmatpush1.bf16.msra.mxu0 %v2181
    %2911 = vmatprep.subr.bf16.mxu0 %v2190
    %2912 = vmatpush1.bf16.msra.mxu0 %v2189
    %2913 = vmatprep.subr.bf16.mxu0 %v2198
    %2914 = vmatpush1.bf16.msra.mxu0 %v2197
    %2915 = vmatprep.subr.bf16.mxu0 %v2206
    %2916 = vmatpush1.bf16.msra.mxu0 %v2205
    %2917 = vmatprep.subr.bf16.mxu0 %v2214
    %2918 = vmatpush1.bf16.msra.mxu0 %v2213
    %2919 = vmatprep.subr.bf16.mxu0 %v2222
    %2920 = vmatpush1.bf16.msra.mxu0 %v2221
    %2921 = vmatprep.subr.bf16.mxu0 %v2230
    %2922 = vmatpush1.bf16.msra.mxu0 %v2229
    %2923 = vmatprep.subr.bf16.mxu0 %v2238
    %2924 = vmatpush1.bf16.msra.mxu0 %v2237
    %2925 = vmatprep.mubr.bf16.mxu0 %v247
    %2926 = vmatmul.mubr.bf16.gmra.mrb[0].mxu0 %v246
    %v2927 = vpop.f32.mrb[0].mxu0
    %v2928 = vadd.f32 %v2887, %v2927
    %v2929 = vpop.f32.mrb[0].mxu0
    %v2930 = vadd.f32 %v2889, %v2929
    %v2931 = vpop.f32.mrb[0].mxu0
    %v2932 = vpop.f32.mrb[0].mxu0
    %2933 = vdwg.mxu0
    %2934 = vmatprep.subr.bf16.mxu0 %v2246
    %2935 = vmatpush1.bf16.msra.mxu0 %v2245
    %2936 = vmatprep.subr.bf16.mxu0 0
    %2937 = vmatpush1.bf16.msra.mxu0 0
    %2938 = vmatprep.subr.bf16.mxu0 0
    %2939 = vmatpush1.bf16.msra.mxu0 0
    %2940 = vmatprep.subr.bf16.mxu0 0
    %2941 = vmatpush1.bf16.msra.mxu0 0
    %2942 = vmatprep.subr.bf16.mxu0 0
    %2943 = vmatpush1.bf16.msra.mxu0 0
    %2944 = vmatprep.subr.bf16.mxu0 0
    %2945 = vmatpush1.bf16.msra.mxu0 0
    %2946 = vmatprep.subr.bf16.mxu0 0
    %2947 = vmatpush1.bf16.msra.mxu0 0
    %2948 = vmatprep.subr.bf16.mxu0 0
    %2949 = vmatpush1.bf16.msra.mxu0 0
    %2950 = vmatprep.subr.bf16.mxu0 0
    %2951 = vmatpush1.bf16.msra.mxu0 0
    %2952 = vmatprep.subr.bf16.mxu0 0
    %2953 = vmatpush1.bf16.msra.mxu0 0
    %2954 = vmatprep.subr.bf16.mxu0 0
    %2955 = vmatpush1.bf16.msra.mxu0 0
    %2956 = vmatprep.subr.bf16.mxu0 0
    %2957 = vmatpush1.bf16.msra.mxu0 0
    %2958 = vmatprep.subr.bf16.mxu0 0
    %2959 = vmatpush1.bf16.msra.mxu0 0
    %2960 = vmatprep.subr.bf16.mxu0 0
    %2961 = vmatpush1.bf16.msra.mxu0 0
    %2962 = vmatprep.subr.bf16.mxu0 0
    %2963 = vmatpush1.bf16.msra.mxu0 0
    %2964 = vmatprep.subr.bf16.mxu0 0
    %2965 = vmatpush1.bf16.msra.mxu0 0
    %2966 = vmatprep.mubr.bf16.mxu0 0
    %2967 = vmatmul.mubr.bf16.gmra.mrb[0].mxu0 %v2645
    %v2968 = vpop.f32.mrb[0].mxu0
    %v2969 = vadd.f32 %v2928, %v2968
    %v2970 = vpop.f32.mrb[0].mxu0
    %v2971 = vadd.f32 %v2930, %v2970
    %v2972 = vpop.f32.mrb[0].mxu0
    %v2973 = vpop.f32.mrb[0].mxu0
    %2974 = vdwg.mxu0
    %2975 = vmatprep.subr.bf16.mxu0 %v1864
    %2976 = vmatpush1.bf16.msra.mxu0 %v1863
    %2977 = vmatprep.subr.bf16.mxu0 %v1872
    %2978 = vmatpush1.bf16.msra.mxu0 %v1871
    %2979 = vmatprep.subr.bf16.mxu0 %v1880
    %2980 = vmatpush1.bf16.msra.mxu0 %v1879
    %2981 = vmatprep.subr.bf16.mxu0 %v1888
    %2982 = vmatpush1.bf16.msra.mxu0 %v1887
    %2983 = vmatprep.subr.bf16.mxu0 %v1896
    %2984 = vmatpush1.bf16.msra.mxu0 %v1895
    %2985 = vmatprep.subr.bf16.mxu0 %v1904
    %2986 = vmatpush1.bf16.msra.mxu0 %v1903
    %2987 = vmatprep.subr.bf16.mxu0 %v1912
    %2988 = vmatpush1.bf16.msra.mxu0 %v1911
    %2989 = vmatprep.subr.bf16.mxu0 %v1920
    %2990 = vmatpush1.bf16.msra.mxu0 %v1919
    %2991 = vmatprep.subr.bf16.mxu0 %v1928
    %2992 = vmatpush1.bf16.msra.mxu0 %v1927
    %2993 = vmatprep.subr.bf16.mxu0 %v1936
    %2994 = vmatpush1.bf16.msra.mxu0 %v1935
    %2995 = vmatprep.subr.bf16.mxu0 %v1944
    %2996 = vmatpush1.bf16.msra.mxu0 %v1943
    %2997 = vmatprep.subr.bf16.mxu0 %v1952
    %2998 = vmatpush1.bf16.msra.mxu0 %v1951
    %2999 = vmatprep.subr.bf16.mxu0 %v1960
    %3000 = vmatpush1.bf16.msra.mxu0 %v1959
    %3001 = vmatprep.subr.bf16.mxu0 %v1968
    %3002 = vmatpush1.bf16.msra.mxu0 %v1967
    %3003 = vmatprep.subr.bf16.mxu0 %v1976
    %3004 = vmatpush1.bf16.msra.mxu0 %v1975
    %3005 = vmatprep.subr.bf16.mxu0 %v1984
    %3006 = vmatpush1.bf16.msra.mxu0 %v1983
    %3007 = vmatprep.mubr.bf16.mxu0 %v243
    %3008 = vmatmul.mubr.bf16.gmra.mrb[0].mxu0 %v242
    %v3009 = vpop.f32.mrb[0].mxu0
    %v3010 = vadd.f32 %v662, %v3009
    %v3011 = vpop.f32.mrb[0].mxu0
    %v3012 = vadd.f32 %v666, %v3011
    %v3013 = vpop.f32.mrb[0].mxu0
    %v3014 = vpop.f32.mrb[0].mxu0
    %3015 = vdwg.mxu0
    %3016 = vmatprep.subr.bf16.mxu0 %v1992
    %3017 = vmatpush1.bf16.msra.mxu0 %v1991
    %3018 = vmatprep.subr.bf16.mxu0 %v2000
    %3019 = vmatpush1.bf16.msra.mxu0 %v1999
    %3020 = vmatprep.subr.bf16.mxu0 %v2008
    %3021 = vmatpush1.bf16.msra.mxu0 %v2007
    %3022 = vmatprep.subr.bf16.mxu0 %v2016
    %3023 = vmatpush1.bf16.msra.mxu0 %v2015
    %3024 = vmatprep.subr.bf16.mxu0 %v2024
    %3025 = vmatpush1.bf16.msra.mxu0 %v2023
    %3026 = vmatprep.subr.bf16.mxu0 %v2032
    %3027 = vmatpush1.bf16.msra.mxu0 %v2031
    %3028 = vmatprep.subr.bf16.mxu0 %v2040
    %3029 = vmatpush1.bf16.msra.mxu0 %v2039
    %3030 = vmatprep.subr.bf16.mxu0 %v2048
    %3031 = vmatpush1.bf16.msra.mxu0 %v2047
    %3032 = vmatprep.subr.bf16.mxu0 %v2056
    %3033 = vmatpush1.bf16.msra.mxu0 %v2055
    %3034 = vmatprep.subr.bf16.mxu0 %v2064
    %3035 = vmatpush1.bf16.msra.mxu0 %v2063
    %3036 = vmatprep.subr.bf16.mxu0 %v2072
    %3037 = vmatpush1.bf16.msra.mxu0 %v2071
    %3038 = vmatprep.subr.bf16.mxu0 %v2080
    %3039 = vmatpush1.bf16.msra.mxu0 %v2079
    %3040 = vmatprep.subr.bf16.mxu0 %v2088
    %3041 = vmatpush1.bf16.msra.mxu0 %v2087
    %3042 = vmatprep.subr.bf16.mxu0 %v2096
    %3043 = vmatpush1.bf16.msra.mxu0 %v2095
    %3044 = vmatprep.subr.bf16.mxu0 %v2104
    %3045 = vmatpush1.bf16.msra.mxu0 %v2103
    %3046 = vmatprep.subr.bf16.mxu0 %v2112
    %3047 = vmatpush1.bf16.msra.mxu0 %v2111
    %3048 = vmatprep.mubr.bf16.mxu0 %v245
    %3049 = vmatmul.mubr.bf16.gmra.mrb[0].mxu0 %v244
    %v3050 = vpop.f32.mrb[0].mxu0
    %v3051 = vadd.f32 %v3010, %v3050
    %v3052 = vpop.f32.mrb[0].mxu0
    %v3053 = vadd.f32 %v3012, %v3052
    %v3054 = vpop.f32.mrb[0].mxu0
    %v3055 = vpop.f32.mrb[0].mxu0
    %3056 = vdwg.mxu0
    %3057 = vmatprep.subr.bf16.mxu0 %v2120
    %3058 = vmatpush1.bf16.msra.mxu0 %v2119
    %3059 = vmatprep.subr.bf16.mxu0 %v2128
    %3060 = vmatpush1.bf16.msra.mxu0 %v2127
    %3061 = vmatprep.subr.bf16.mxu0 %v2136
    %3062 = vmatpush1.bf16.msra.mxu0 %v2135
    %3063 = vmatprep.subr.bf16.mxu0 %v2144
    %3064 = vmatpush1.bf16.msra.mxu0 %v2143
    %3065 = vmatprep.subr.bf16.mxu0 %v2152
    %3066 = vmatpush1.bf16.msra.mxu0 %v2151
    %3067 = vmatprep.subr.bf16.mxu0 %v2160
    %3068 = vmatpush1.bf16.msra.mxu0 %v2159
    %3069 = vmatprep.subr.bf16.mxu0 %v2168
    %3070 = vmatpush1.bf16.msra.mxu0 %v2167
    %3071 = vmatprep.subr.bf16.mxu0 %v2176
    %3072 = vmatpush1.bf16.msra.mxu0 %v2175
    %3073 = vmatprep.subr.bf16.mxu0 %v2184
    %3074 = vmatpush1.bf16.msra.mxu0 %v2183
    %3075 = vmatprep.subr.bf16.mxu0 %v2192
    %3076 = vmatpush1.bf16.msra.mxu0 %v2191
    %3077 = vmatprep.subr.bf16.mxu0 %v2200
    %3078 = vmatpush1.bf16.msra.mxu0 %v2199
    %3079 = vmatprep.subr.bf16.mxu0 %v2208
    %3080 = vmatpush1.bf16.msra.mxu0 %v2207
    %3081 = vmatprep.subr.bf16.mxu0 %v2216
    %3082 = vmatpush1.bf16.msra.mxu0 %v2215
    %3083 = vmatprep.subr.bf16.mxu0 %v2224
    %3084 = vmatpush1.bf16.msra.mxu0 %v2223
    %3085 = vmatprep.subr.bf16.mxu0 %v2232
    %3086 = vmatpush1.bf16.msra.mxu0 %v2231
    %3087 = vmatprep.subr.bf16.mxu0 %v2240
    %3088 = vmatpush1.bf16.msra.mxu0 %v2239
    %3089 = vmatprep.mubr.bf16.mxu0 %v247
    %3090 = vmatmul.mubr.bf16.gmra.mrb[0].mxu0 %v246
    %v3091 = vpop.f32.mrb[0].mxu0
    %v3092 = vadd.f32 %v3051, %v3091
    %v3093 = vpop.f32.mrb[0].mxu0
    %v3094 = vadd.f32 %v3053, %v3093
    %v3095 = vpop.f32.mrb[0].mxu0
    %v3096 = vpop.f32.mrb[0].mxu0
    %3097 = vdwg.mxu0
    %3098 = vmatprep.subr.bf16.mxu0 %v2248
    %3099 = vmatpush1.bf16.msra.mxu0 %v2247
    %3100 = vmatprep.subr.bf16.mxu0 0
    %3101 = vmatpush1.bf16.msra.mxu0 0
    %3102 = vmatprep.subr.bf16.mxu0 0
    %3103 = vmatpush1.bf16.msra.mxu0 0
    %3104 = vmatprep.subr.bf16.mxu0 0
    %3105 = vmatpush1.bf16.msra.mxu0 0
    %3106 = vmatprep.subr.bf16.mxu0 0
    %3107 = vmatpush1.bf16.msra.mxu0 0
    %3108 = vmatprep.subr.bf16.mxu0 0
    %3109 = vmatpush1.bf16.msra.mxu0 0
    %3110 = vmatprep.subr.bf16.mxu0 0
    %3111 = vmatpush1.bf16.msra.mxu0 0
    %3112 = vmatprep.subr.bf16.mxu0 0
    %3113 = vmatpush1.bf16.msra.mxu0 0
    %3114 = vmatprep.subr.bf16.mxu0 0
    %3115 = vmatpush1.bf16.msra.mxu0 0
    %3116 = vmatprep.subr.bf16.mxu0 0
    %3117 = vmatpush1.bf16.msra.mxu0 0
    %3118 = vmatprep.subr.bf16.mxu0 0
    %3119 = vmatpush1.bf16.msra.mxu0 0
    %3120 = vmatprep.subr.bf16.mxu0 0
    %3121 = vmatpush1.bf16.msra.mxu0 0
    %3122 = vmatprep.subr.bf16.mxu0 0
    %3123 = vmatpush1.bf16.msra.mxu0 0
    %3124 = vmatprep.subr.bf16.mxu0 0
    %3125 = vmatpush1.bf16.msra.mxu0 0
    %3126 = vmatprep.subr.bf16.mxu0 0
    %3127 = vmatpush1.bf16.msra.mxu0 0
    %3128 = vmatprep.subr.bf16.mxu0 0
    %3129 = vmatpush1.bf16.msra.mxu0 0
    %3130 = vmatprep.mubr.bf16.mxu0 0
    %3131 = vmatmul.mubr.bf16.gmra.mrb[0].mxu0 %v2645
    %v3132 = vpop.f32.mrb[0].mxu0
    %v3133 = vadd.f32 %v3092, %v3132
    %v3134 = vpop.f32.mrb[0].mxu0
    %v3135 = vadd.f32 %v3094, %v3134
    %v3136 = vpop.f32.mrb[0].mxu0
    %v3137 = vpop.f32.mrb[0].mxu0
    %3138 = vdwg.mxu0
    %3139 = vmatprep.subr.bf16.mxu0 %v1866
    %3140 = vmatpush1.bf16.msra.mxu0 %v1865
    %3141 = vmatprep.subr.bf16.mxu0 %v1874
    %3142 = vmatpush1.bf16.msra.mxu0 %v1873
    %3143 = vmatprep.subr.bf16.mxu0 %v1882
    %3144 = vmatpush1.bf16.msra.mxu0 %v1881
    %3145 = vmatprep.subr.bf16.mxu0 %v1890
    %3146 = vmatpush1.bf16.msra.mxu0 %v1889
    %3147 = vmatprep.subr.bf16.mxu0 %v1898
    %3148 = vmatpush1.bf16.msra.mxu0 %v1897
    %3149 = vmatprep.subr.bf16.mxu0 %v1906
    %3150 = vmatpush1.bf16.msra.mxu0 %v1905
    %3151 = vmatprep.subr.bf16.mxu0 %v1914
    %3152 = vmatpush1.bf16.msra.mxu0 %v1913
    %3153 = vmatprep.subr.bf16.mxu0 %v1922
    %3154 = vmatpush1.bf16.msra.mxu0 %v1921
    %3155 = vmatprep.subr.bf16.mxu0 %v1930
    %3156 = vmatpush1.bf16.msra.mxu0 %v1929
    %3157 = vmatprep.subr.bf16.mxu0 %v1938
    %3158 = vmatpush1.bf16.msra.mxu0 %v1937
    %3159 = vmatprep.subr.bf16.mxu0 %v1946
    %3160 = vmatpush1.bf16.msra.mxu0 %v1945
    %3161 = vmatprep.subr.bf16.mxu0 %v1954
    %3162 = vmatpush1.bf16.msra.mxu0 %v1953
    %3163 = vmatprep.subr.bf16.mxu0 %v1962
    %3164 = vmatpush1.bf16.msra.mxu0 %v1961
    %3165 = vmatprep.subr.bf16.mxu0 %v1970
    %3166 = vmatpush1.bf16.msra.mxu0 %v1969
    %3167 = vmatprep.subr.bf16.mxu0 %v1978
    %3168 = vmatpush1.bf16.msra.mxu0 %v1977
    %3169 = vmatprep.subr.bf16.mxu0 %v1986
    %3170 = vmatpush1.bf16.msra.mxu0 %v1985
    %3171 = vmatprep.mubr.bf16.mxu0 %v243
    %3172 = vmatmul.mubr.bf16.gmra.mrb[0].mxu0 %v242
    %v3173 = vpop.f32.mrb[0].mxu0
    %v3174 = vadd.f32 %v670, %v3173
    %v3175 = vpop.f32.mrb[0].mxu0
    %v3176 = vadd.f32 %v674, %v3175
    %v3177 = vpop.f32.mrb[0].mxu0
    %v3178 = vpop.f32.mrb[0].mxu0
    %3179 = vdwg.mxu0
    %3180 = vmatprep.subr.bf16.mxu0 %v1994
    %3181 = vmatpush1.bf16.msra.mxu0 %v1993
    %3182 = vmatprep.subr.bf16.mxu0 %v2002
    %3183 = vmatpush1.bf16.msra.mxu0 %v2001
    %3184 = vmatprep.subr.bf16.mxu0 %v2010
    %3185 = vmatpush1.bf16.msra.mxu0 %v2009
    %3186 = vmatprep.subr.bf16.mxu0 %v2018
    %3187 = vmatpush1.bf16.msra.mxu0 %v2017
    %3188 = vmatprep.subr.bf16.mxu0 %v2026
    %3189 = vmatpush1.bf16.msra.mxu0 %v2025
    %3190 = vmatprep.subr.bf16.mxu0 %v2034
    %3191 = vmatpush1.bf16.msra.mxu0 %v2033
    %3192 = vmatprep.subr.bf16.mxu0 %v2042
    %3193 = vmatpush1.bf16.msra.mxu0 %v2041
    %3194 = vmatprep.subr.bf16.mxu0 %v2050
    %3195 = vmatpush1.bf16.msra.mxu0 %v2049
    %3196 = vmatprep.subr.bf16.mxu0 %v2058
    %3197 = vmatpush1.bf16.msra.mxu0 %v2057
    %3198 = vmatprep.subr.bf16.mxu0 %v2066
    %3199 = vmatpush1.bf16.msra.mxu0 %v2065
    %3200 = vmatprep.subr.bf16.mxu0 %v2074
    %3201 = vmatpush1.bf16.msra.mxu0 %v2073
    %3202 = vmatprep.subr.bf16.mxu0 %v2082
    %3203 = vmatpush1.bf16.msra.mxu0 %v2081
    %3204 = vmatprep.subr.bf16.mxu0 %v2090
    %3205 = vmatpush1.bf16.msra.mxu0 %v2089
    %3206 = vmatprep.subr.bf16.mxu0 %v2098
    %3207 = vmatpush1.bf16.msra.mxu0 %v2097
    %3208 = vmatprep.subr.bf16.mxu0 %v2106
    %3209 = vmatpush1.bf16.msra.mxu0 %v2105
    %3210 = vmatprep.subr.bf16.mxu0 %v2114
    %3211 = vmatpush1.bf16.msra.mxu0 %v2113
    %3212 = vmatprep.mubr.bf16.mxu0 %v245
    %3213 = vmatmul.mubr.bf16.gmra.mrb[0].mxu0 %v244
    %v3214 = vpop.f32.mrb[0].mxu0
    %v3215 = vadd.f32 %v3174, %v3214
    %v3216 = vpop.f32.mrb[0].mxu0
    %v3217 = vadd.f32 %v3176, %v3216
    %v3218 = vpop.f32.mrb[0].mxu0
    %v3219 = vpop.f32.mrb[0].mxu0
    %3220 = vdwg.mxu0
    %3221 = vmatprep.subr.bf16.mxu0 %v2122
    %3222 = vmatpush1.bf16.msra.mxu0 %v2121
    %3223 = vmatprep.subr.bf16.mxu0 %v2130
    %3224 = vmatpush1.bf16.msra.mxu0 %v2129
    %3225 = vmatprep.subr.bf16.mxu0 %v2138
    %3226 = vmatpush1.bf16.msra.mxu0 %v2137
    %3227 = vmatprep.subr.bf16.mxu0 %v2146
    %3228 = vmatpush1.bf16.msra.mxu0 %v2145
    %3229 = vmatprep.subr.bf16.mxu0 %v2154
    %3230 = vmatpush1.bf16.msra.mxu0 %v2153
    %3231 = vmatprep.subr.bf16.mxu0 %v2162
    %3232 = vmatpush1.bf16.msra.mxu0 %v2161
    %3233 = vmatprep.subr.bf16.mxu0 %v2170
    %3234 = vmatpush1.bf16.msra.mxu0 %v2169
    %3235 = vmatprep.subr.bf16.mxu0 %v2178
    %3236 = vmatpush1.bf16.msra.mxu0 %v2177
    %3237 = vmatprep.subr.bf16.mxu0 %v2186
    %3238 = vmatpush1.bf16.msra.mxu0 %v2185
    %3239 = vmatprep.subr.bf16.mxu0 %v2194
    %3240 = vmatpush1.bf16.msra.mxu0 %v2193
    %3241 = vmatprep.subr.bf16.mxu0 %v2202
    %3242 = vmatpush1.bf16.msra.mxu0 %v2201
    %3243 = vmatprep.subr.bf16.mxu0 %v2210
    %3244 = vmatpush1.bf16.msra.mxu0 %v2209
    %3245 = vmatprep.subr.bf16.mxu0 %v2218
    %3246 = vmatpush1.bf16.msra.mxu0 %v2217
    %3247 = vmatprep.subr.bf16.mxu0 %v2226
    %3248 = vmatpush1.bf16.msra.mxu0 %v2225
    %3249 = vmatprep.subr.bf16.mxu0 %v2234
    %3250 = vmatpush1.bf16.msra.mxu0 %v2233
    %3251 = vmatprep.subr.bf16.mxu0 %v2242
    %3252 = vmatpush1.bf16.msra.mxu0 %v2241
    %3253 = vmatprep.mubr.bf16.mxu0 %v247
    %3254 = vmatmul.mubr.bf16.gmra.mrb[0].mxu0 %v246
    %v3255 = vpop.f32.mrb[0].mxu0
    %v3256 = vadd.f32 %v3215, %v3255
    %v3257 = vpop.f32.mrb[0].mxu0
    %v3258 = vadd.f32 %v3217, %v3257
    %v3259 = vpop.f32.mrb[0].mxu0
    %v3260 = vpop.f32.mrb[0].mxu0
    %3261 = vdwg.mxu0
    %3262 = vmatprep.subr.bf16.mxu0 %v2250
    %3263 = vmatpush1.bf16.msra.mxu0 %v2249
    %3264 = vmatprep.subr.bf16.mxu0 0
    %3265 = vmatpush1.bf16.msra.mxu0 0
    %3266 = vmatprep.subr.bf16.mxu0 0
    %3267 = vmatpush1.bf16.msra.mxu0 0
    %3268 = vmatprep.subr.bf16.mxu0 0
    %3269 = vmatpush1.bf16.msra.mxu0 0
    %3270 = vmatprep.subr.bf16.mxu0 0
    %3271 = vmatpush1.bf16.msra.mxu0 0
    %3272 = vmatprep.subr.bf16.mxu0 0
    %3273 = vmatpush1.bf16.msra.mxu0 0
    %3274 = vmatprep.subr.bf16.mxu0 0
    %3275 = vmatpush1.bf16.msra.mxu0 0
    %3276 = vmatprep.subr.bf16.mxu0 0
    %3277 = vmatpush1.bf16.msra.mxu0 0
    %3278 = vmatprep.subr.bf16.mxu0 0
    %3279 = vmatpush1.bf16.msra.mxu0 0
    %3280 = vmatprep.subr.bf16.mxu0 0
    %3281 = vmatpush1.bf16.msra.mxu0 0
    %3282 = vmatprep.subr.bf16.mxu0 0
    %3283 = vmatpush1.bf16.msra.mxu0 0
    %3284 = vmatprep.subr.bf16.mxu0 0
    %3285 = vmatpush1.bf16.msra.mxu0 0
    %3286 = vmatprep.subr.bf16.mxu0 0
    %3287 = vmatpush1.bf16.msra.mxu0 0
    %3288 = vmatprep.subr.bf16.mxu0 0
    %3289 = vmatpush1.bf16.msra.mxu0 0
    %3290 = vmatprep.subr.bf16.mxu0 0
    %3291 = vmatpush1.bf16.msra.mxu0 0
    %3292 = vmatprep.subr.bf16.mxu0 0
    %3293 = vmatpush1.bf16.msra.mxu0 0
    %3294 = vmatprep.mubr.bf16.mxu0 0
    %3295 = vmatmul.mubr.bf16.gmra.mrb[0].mxu0 %v2645
    %v3296 = vpop.f32.mrb[0].mxu0
    %v3297 = vadd.f32 %v3256, %v3296
    %v3298 = vpop.f32.mrb[0].mxu0
    %v3299 = vadd.f32 %v3258, %v3298
    %v3300 = vpop.f32.mrb[0].mxu0
    %v3301 = vpop.f32.mrb[0].mxu0
    %3302 = vdwg.mxu0
    %v3303 = vmax.f32 %v2805, 0.0
    %v3304 = vmax.f32 %v2807, 0.0
    %v3305 = vmax.f32 %v2969, 0.0
    %v3306 = vmax.f32 %v2971, 0.0
    %v3307 = vmax.f32 %v3133, 0.0
    %v3308 = vmax.f32 %v3135, 0.0
    %v3309 = vmax.f32 %v3297, 0.0
    %v3310 = vmax.f32 %v3299, 0.0
    %v3311 = vpack.c.bf16 %v3303, %v3303
    %v3312 = vpack.c.bf16 %v3304, %v3304
    %v3313 = vpack.c.bf16 %v3305, %v3305
    %v3314 = vpack.c.bf16 %v3306, %v3306
    %v3315 = vpack.c.bf16 %v3307, %v3307
    %v3316 = vpack.c.bf16 %v3308, %v3308
    %v3317 = vpack.c.bf16 %v3309, %v3309
    %v3318 = vpack.c.bf16 %v3310, %v3310
    %v3319 = vld [vmem:[#allocation8] sm:$0xff]
    %v3320 = vld [vmem:[#allocation8 + $0x8] sm:$0xff]
    %v3321 = vld [vmem:[#allocation8 + $0x10] sm:$0xff]
    %v3322 = vld [vmem:[#allocation8 + $0x18] sm:$0xff]
    %v3323 = vld [vmem:[#allocation8 + $0x20] sm:$0xff]
    %v3324 = vld [vmem:[#allocation8 + $0x28] sm:$0xff]
    %v3325 = vld [vmem:[#allocation8 + $0x30] sm:$0xff]
    %v3326 = vld [vmem:[#allocation8 + $0x38] sm:$0xff]
    %v3327 = vld [vmem:[#allocation8 + $0x40] sm:$0xff]
    %v3328 = vld [vmem:[#allocation8 + $0x48] sm:$0xff]
    %v3329 = vld [vmem:[#allocation8 + $0x50] sm:$0xff]
    %v3330 = vld [vmem:[#allocation8 + $0x58] sm:$0xff]
    %v3331 = vld [vmem:[#allocation8 + $0x60] sm:$0xff]
    %v3332 = vld [vmem:[#allocation8 + $0x68] sm:$0xff]
    %v3333 = vld [vmem:[#allocation8 + $0x70] sm:$0xff]
    %v3334 = vld [vmem:[#allocation8 + $0x78] sm:$0xff]
    %v3335 = vld [vmem:[#allocation8 + $0x80] sm:$0xff]
    %v3336 = vld [vmem:[#allocation8 + $0x88] sm:$0xff]
    %v3337 = vld [vmem:[#allocation8 + $0x90] sm:$0xff]
    %v3338 = vld [vmem:[#allocation8 + $0x98] sm:$0xff]
    %v3339 = vld [vmem:[#allocation8 + $0xa0] sm:$0xff]
    %v3340 = vld [vmem:[#allocation8 + $0xa8] sm:$0xff]
    %v3341 = vld [vmem:[#allocation8 + $0xb0] sm:$0xff]
    %v3342 = vld [vmem:[#allocation8 + $0xb8] sm:$0xff]
    %v3343 = vld [vmem:[#allocation8 + $0xc0] sm:$0xff]
    %v3344 = vld [vmem:[#allocation8 + $0xc8] sm:$0xff]
    %v3345 = vld [vmem:[#allocation8 + $0xd0] sm:$0xff]
    %v3346 = vld [vmem:[#allocation8 + $0xd8] sm:$0xff]
    %v3347 = vld [vmem:[#allocation8 + $0xe0] sm:$0xff]
    %v3348 = vld [vmem:[#allocation8 + $0xe8] sm:$0xff]
    %v3349 = vld [vmem:[#allocation8 + $0xf0] sm:$0xff]
    %v3350 = vld [vmem:[#allocation8 + $0xf8] sm:$0xff]
    %v3351 = vld [vmem:[#allocation8 + $0x100] sm:$0xff]
    %v3352 = vld [vmem:[#allocation8 + $0x108] sm:$0xff]
    %v3353 = vld [vmem:[#allocation8 + $0x110] sm:$0xff]
    %v3354 = vld [vmem:[#allocation8 + $0x118] sm:$0xff]
    %v3355 = vld [vmem:[#allocation8 + $0x120] sm:$0xff]
    %v3356 = vld [vmem:[#allocation8 + $0x128] sm:$0xff]
    %v3357 = vld [vmem:[#allocation8 + $0x130] sm:$0xff]
    %v3358 = vld [vmem:[#allocation8 + $0x138] sm:$0xff]
    %v3359 = vld [vmem:[#allocation8 + $0x140] sm:$0xff]
    %v3360 = vld [vmem:[#allocation8 + $0x148] sm:$0xff]
    %v3361 = vld [vmem:[#allocation8 + $0x150] sm:$0xff]
    %v3362 = vld [vmem:[#allocation8 + $0x158] sm:$0xff]
    %v3363 = vld [vmem:[#allocation8 + $0x160] sm:$0xff]
    %v3364 = vld [vmem:[#allocation8 + $0x168] sm:$0xff]
    %v3365 = vld [vmem:[#allocation8 + $0x170] sm:$0xff]
    %v3366 = vld [vmem:[#allocation8 + $0x178] sm:$0xff]
    %v3367 = vld [vmem:[#allocation8 + $0x180] sm:$0xff]
    %v3368 = vld [vmem:[#allocation8 + $0x188] sm:$0xff]
    %v3369 = vld [vmem:[#allocation8 + $0x190] sm:$0xff]
    %v3370 = vld [vmem:[#allocation8 + $0x198] sm:$0xff]
    %v3371 = vld [vmem:[#allocation8 + $0x1a0] sm:$0xff]
    %v3372 = vld [vmem:[#allocation8 + $0x1a8] sm:$0xff]
    %v3373 = vld [vmem:[#allocation8 + $0x1b0] sm:$0xff]
    %v3374 = vld [vmem:[#allocation8 + $0x1b8] sm:$0xff]
    %v3375 = vld [vmem:[#allocation8 + $0x1c0] sm:$0xff]
    %v3376 = vld [vmem:[#allocation8 + $0x1c8] sm:$0xff]
    %v3377 = vld [vmem:[#allocation8 + $0x1d0] sm:$0xff]
    %v3378 = vld [vmem:[#allocation8 + $0x1d8] sm:$0xff]
    %v3379 = vld [vmem:[#allocation8 + $0x1e0] sm:$0xff]
    %v3380 = vld [vmem:[#allocation8 + $0x1e8] sm:$0xff]
    %v3381 = vld [vmem:[#allocation8 + $0x1f0] sm:$0xff]
    %v3382 = vld [vmem:[#allocation8 + $0x1f8] sm:$0xff]
    %v3383 = vld [vmem:[#allocation8 + $0x200] sm:$0xff]
    %v3384 = vld [vmem:[#allocation8 + $0x208] sm:$0xff]
    %v3385 = vld [vmem:[#allocation8 + $0x210] sm:$0xff]
    %v3386 = vld [vmem:[#allocation8 + $0x218] sm:$0xff]
    %v3387 = vld [vmem:[#allocation8 + $0x220] sm:$0xff]
    %v3388 = vld [vmem:[#allocation8 + $0x228] sm:$0xff]
    %v3389 = vld [vmem:[#allocation8 + $0x230] sm:$0xff]
    %v3390 = vld [vmem:[#allocation8 + $0x238] sm:$0xff]
    %v3391 = vld [vmem:[#allocation8 + $0x240] sm:$0xff]
    %v3392 = vld [vmem:[#allocation8 + $0x248] sm:$0xff]
    %v3393 = vld [vmem:[#allocation8 + $0x250] sm:$0xff]
    %v3394 = vld [vmem:[#allocation8 + $0x258] sm:$0xff]
    %v3395 = vld [vmem:[#allocation8 + $0x260] sm:$0xff]
    %v3396 = vld [vmem:[#allocation8 + $0x268] sm:$0xff]
    %v3397 = vld [vmem:[#allocation8 + $0x270] sm:$0xff]
    %v3398 = vld [vmem:[#allocation8 + $0x278] sm:$0xff]
    %v3399 = vld [vmem:[#allocation8 + $0x280] sm:$0xff]
    %v3400 = vld [vmem:[#allocation8 + $0x288] sm:$0xff]
    %v3401 = vld [vmem:[#allocation8 + $0x290] sm:$0xff]
    %v3402 = vld [vmem:[#allocation8 + $0x298] sm:$0xff]
    %v3403 = vld [vmem:[#allocation8 + $0x2a0] sm:$0xff]
    %v3404 = vld [vmem:[#allocation8 + $0x2a8] sm:$0xff]
    %v3405 = vld [vmem:[#allocation8 + $0x2b0] sm:$0xff]
    %v3406 = vld [vmem:[#allocation8 + $0x2b8] sm:$0xff]
    %v3407 = vld [vmem:[#allocation8 + $0x2c0] sm:$0xff]
    %v3408 = vld [vmem:[#allocation8 + $0x2c8] sm:$0xff]
    %v3409 = vld [vmem:[#allocation8 + $0x2d0] sm:$0xff]
    %v3410 = vld [vmem:[#allocation8 + $0x2d8] sm:$0xff]
    %v3411 = vld [vmem:[#allocation8 + $0x2e0] sm:$0xff]
    %v3412 = vld [vmem:[#allocation8 + $0x2e8] sm:$0xff]
    %v3413 = vld [vmem:[#allocation8 + $0x2f0] sm:$0xff]
    %v3414 = vld [vmem:[#allocation8 + $0x2f8] sm:$0xff]
    %v3415 = vld [vmem:[#allocation8 + $0x300] sm:$0xff]
    %v3416 = vld [vmem:[#allocation8 + $0x308] sm:$0xff]
    %v3417 = vld [vmem:[#allocation8 + $0x310] sm:$0xff]
    %v3418 = vld [vmem:[#allocation8 + $0x318] sm:$0xff]
    %v3419 = vld [vmem:[#allocation8 + $0x320] sm:$0xff]
    %v3420 = vld [vmem:[#allocation8 + $0x328] sm:$0xff]
    %v3421 = vld [vmem:[#allocation8 + $0x330] sm:$0xff]
    %v3422 = vld [vmem:[#allocation8 + $0x338] sm:$0xff]
    %v3423 = vld [vmem:[#allocation8 + $0x340] sm:$0xff]
    %v3424 = vld [vmem:[#allocation8 + $0x348] sm:$0xff]
    %v3425 = vld [vmem:[#allocation8 + $0x350] sm:$0xff]
    %v3426 = vld [vmem:[#allocation8 + $0x358] sm:$0xff]
    %v3427 = vld [vmem:[#allocation8 + $0x360] sm:$0xff]
    %v3428 = vld [vmem:[#allocation8 + $0x368] sm:$0xff]
    %v3429 = vld [vmem:[#allocation8 + $0x370] sm:$0xff]
    %v3430 = vld [vmem:[#allocation8 + $0x378] sm:$0xff]
    %v3431 = vld [vmem:[#allocation8 + $0x380] sm:$0xff]
    %v3432 = vld [vmem:[#allocation8 + $0x388] sm:$0xff]
    %v3433 = vld [vmem:[#allocation8 + $0x390] sm:$0xff]
    %v3434 = vld [vmem:[#allocation8 + $0x398] sm:$0xff]
    %v3435 = vld [vmem:[#allocation8 + $0x3a0] sm:$0xff]
    %v3436 = vld [vmem:[#allocation8 + $0x3a8] sm:$0xff]
    %v3437 = vld [vmem:[#allocation8 + $0x3b0] sm:$0xff]
    %v3438 = vld [vmem:[#allocation8 + $0x3b8] sm:$0xff]
    %v3439 = vld [vmem:[#allocation8 + $0x3c0] sm:$0xff]
    %v3440 = vld [vmem:[#allocation8 + $0x3c8] sm:$0xff]
    %v3441 = vld [vmem:[#allocation8 + $0x3d0] sm:$0xff]
    %v3442 = vld [vmem:[#allocation8 + $0x3d8] sm:$0xff]
    %v3443 = vld [vmem:[#allocation8 + $0x3e0] sm:$0xff]
    %v3444 = vld [vmem:[#allocation8 + $0x3e8] sm:$0xff]
    %v3445 = vld [vmem:[#allocation8 + $0x3f0] sm:$0xff]
    %v3446 = vld [vmem:[#allocation8 + $0x3f8] sm:$0xff]
    %v3447 = vld [vmem:[#allocation8 + $0x400] sm:$0xff]
    %v3448 = vld [vmem:[#allocation8 + $0x408] sm:$0xff]
    %v3449 = vld [vmem:[#allocation8 + $0x410] sm:$0xff]
    %v3450 = vld [vmem:[#allocation8 + $0x418] sm:$0xff]
    %v3451 = vld [vmem:[#allocation8 + $0x420] sm:$0xff]
    %v3452 = vld [vmem:[#allocation8 + $0x428] sm:$0xff]
    %v3453 = vld [vmem:[#allocation8 + $0x430] sm:$0xff]
    %v3454 = vld [vmem:[#allocation8 + $0x438] sm:$0xff]
    %v3455 = vld [vmem:[#allocation8 + $0x440] sm:$0xff]
    %v3456 = vld [vmem:[#allocation8 + $0x448] sm:$0xff]
    %v3457 = vld [vmem:[#allocation8 + $0x450] sm:$0xff]
    %v3458 = vld [vmem:[#allocation8 + $0x458] sm:$0xff]
    %v3459 = vld [vmem:[#allocation8 + $0x460] sm:$0xff]
    %v3460 = vld [vmem:[#allocation8 + $0x468] sm:$0xff]
    %v3461 = vld [vmem:[#allocation8 + $0x470] sm:$0xff]
    %v3462 = vld [vmem:[#allocation8 + $0x478] sm:$0xff]
    %v3463 = vld [vmem:[#allocation8 + $0x480] sm:$0xff]
    %v3464 = vld [vmem:[#allocation8 + $0x488] sm:$0xff]
    %v3465 = vld [vmem:[#allocation8 + $0x490] sm:$0xff]
    %v3466 = vld [vmem:[#allocation8 + $0x498] sm:$0xff]
    %v3467 = vld [vmem:[#allocation8 + $0x4a0] sm:$0xff]
    %v3468 = vld [vmem:[#allocation8 + $0x4a8] sm:$0xff]
    %v3469 = vld [vmem:[#allocation8 + $0x4b0] sm:$0xff]
    %v3470 = vld [vmem:[#allocation8 + $0x4b8] sm:$0xff]
    %v3471 = vld [vmem:[#allocation8 + $0x4c0] sm:$0xff]
    %v3472 = vld [vmem:[#allocation8 + $0x4c8] sm:$0xff]
    %v3473 = vld [vmem:[#allocation8 + $0x4d0] sm:$0xff]
    %v3474 = vld [vmem:[#allocation8 + $0x4d8] sm:$0xff]
    %v3475 = vld [vmem:[#allocation8 + $0x4e0] sm:$0xff]
    %v3476 = vld [vmem:[#allocation8 + $0x4e8] sm:$0xff]
    %v3477 = vld [vmem:[#allocation8 + $0x4f0] sm:$0xff]
    %v3478 = vld [vmem:[#allocation8 + $0x4f8] sm:$0xff]
    %v3479 = vld [vmem:[#allocation8 + $0x500] sm:$0xff]
    %v3480 = vld [vmem:[#allocation8 + $0x508] sm:$0xff]
    %v3481 = vld [vmem:[#allocation8 + $0x510] sm:$0xff]
    %v3482 = vld [vmem:[#allocation8 + $0x518] sm:$0xff]
    %v3483 = vld [vmem:[#allocation8 + $0x520] sm:$0xff]
    %v3484 = vld [vmem:[#allocation8 + $0x528] sm:$0xff]
    %v3485 = vld [vmem:[#allocation8 + $0x530] sm:$0xff]
    %v3486 = vld [vmem:[#allocation8 + $0x538] sm:$0xff]
    %v3487 = vld [vmem:[#allocation8 + $0x540] sm:$0xff]
    %v3488 = vld [vmem:[#allocation8 + $0x548] sm:$0xff]
    %v3489 = vld [vmem:[#allocation8 + $0x550] sm:$0xff]
    %v3490 = vld [vmem:[#allocation8 + $0x558] sm:$0xff]
    %v3491 = vld [vmem:[#allocation8 + $0x560] sm:$0xff]
    %v3492 = vld [vmem:[#allocation8 + $0x568] sm:$0xff]
    %v3493 = vld [vmem:[#allocation8 + $0x570] sm:$0xff]
    %v3494 = vld [vmem:[#allocation8 + $0x578] sm:$0xff]
    %v3495 = vld [vmem:[#allocation8 + $0x580] sm:$0xff]
    %v3496 = vld [vmem:[#allocation8 + $0x588] sm:$0xff]
    %v3497 = vld [vmem:[#allocation8 + $0x590] sm:$0xff]
    %v3498 = vld [vmem:[#allocation8 + $0x598] sm:$0xff]
    %v3499 = vld [vmem:[#allocation8 + $0x5a0] sm:$0xff]
    %v3500 = vld [vmem:[#allocation8 + $0x5a8] sm:$0xff]
    %v3501 = vld [vmem:[#allocation8 + $0x5b0] sm:$0xff]
    %v3502 = vld [vmem:[#allocation8 + $0x5b8] sm:$0xff]
    %v3503 = vld [vmem:[#allocation8 + $0x5c0] sm:$0xff]
    %v3504 = vld [vmem:[#allocation8 + $0x5c8] sm:$0xff]
    %v3505 = vld [vmem:[#allocation8 + $0x5d0] sm:$0xff]
    %v3506 = vld [vmem:[#allocation8 + $0x5d8] sm:$0xff]
    %v3507 = vld [vmem:[#allocation8 + $0x5e0] sm:$0xff]
    %v3508 = vld [vmem:[#allocation8 + $0x5e8] sm:$0xff]
    %v3509 = vld [vmem:[#allocation8 + $0x5f0] sm:$0xff]
    %v3510 = vld [vmem:[#allocation8 + $0x5f8] sm:$0xff]
    %v3511 = vld [vmem:[#allocation8 + $0x600] sm:$0xff]
    %v3512 = vld [vmem:[#allocation8 + $0x608] sm:$0xff]
    %v3513 = vld [vmem:[#allocation8 + $0x610] sm:$0xff]
    %v3514 = vld [vmem:[#allocation8 + $0x618] sm:$0xff]
    %v3515 = vld [vmem:[#allocation8 + $0x620] sm:$0xff]
    %v3516 = vld [vmem:[#allocation8 + $0x628] sm:$0xff]
    %v3517 = vld [vmem:[#allocation8 + $0x630] sm:$0xff]
    %v3518 = vld [vmem:[#allocation8 + $0x638] sm:$0xff]
    %v3519 = vld [vmem:[#allocation8 + $0x640] sm:$0xff]
    %v3520 = vld [vmem:[#allocation8 + $0x648] sm:$0xff]
    %v3521 = vld [vmem:[#allocation8 + $0x650] sm:$0xff]
    %v3522 = vld [vmem:[#allocation8 + $0x658] sm:$0xff]
    %v3523 = vld [vmem:[#allocation8 + $0x660] sm:$0xff]
    %v3524 = vld [vmem:[#allocation8 + $0x668] sm:$0xff]
    %v3525 = vld [vmem:[#allocation8 + $0x670] sm:$0xff]
    %v3526 = vld [vmem:[#allocation8 + $0x678] sm:$0xff]
    %v3527 = vld [vmem:[#allocation8 + $0x680] sm:$0xff]
    %v3528 = vld [vmem:[#allocation8 + $0x688] sm:$0xff]
    %v3529 = vld [vmem:[#allocation8 + $0x690] sm:$0xff]
    %v3530 = vld [vmem:[#allocation8 + $0x698] sm:$0xff]
    %v3531 = vld [vmem:[#allocation8 + $0x6a0] sm:$0xff]
    %v3532 = vld [vmem:[#allocation8 + $0x6a8] sm:$0xff]
    %v3533 = vld [vmem:[#allocation8 + $0x6b0] sm:$0xff]
    %v3534 = vld [vmem:[#allocation8 + $0x6b8] sm:$0xff]
    %v3535 = vld [vmem:[#allocation8 + $0x6c0] sm:$0xff]
    %v3536 = vld [vmem:[#allocation8 + $0x6c8] sm:$0xff]
    %v3537 = vld [vmem:[#allocation8 + $0x6d0] sm:$0xff]
    %v3538 = vld [vmem:[#allocation8 + $0x6d8] sm:$0xff]
    %v3539 = vld [vmem:[#allocation8 + $0x6e0] sm:$0xff]
    %v3540 = vld [vmem:[#allocation8 + $0x6e8] sm:$0xff]
    %v3541 = vld [vmem:[#allocation8 + $0x6f0] sm:$0xff]
    %v3542 = vld [vmem:[#allocation8 + $0x6f8] sm:$0xff]
    %v3543 = vld [vmem:[#allocation8 + $0x700] sm:$0xff]
    %v3544 = vld [vmem:[#allocation8 + $0x708] sm:$0xff]
    %v3545 = vld [vmem:[#allocation8 + $0x710] sm:$0xff]
    %v3546 = vld [vmem:[#allocation8 + $0x718] sm:$0xff]
    %v3547 = vld [vmem:[#allocation8 + $0x720] sm:$0xff]
    %v3548 = vld [vmem:[#allocation8 + $0x728] sm:$0xff]
    %v3549 = vld [vmem:[#allocation8 + $0x730] sm:$0xff]
    %v3550 = vld [vmem:[#allocation8 + $0x738] sm:$0xff]
    %v3551 = vld [vmem:[#allocation8 + $0x740] sm:$0xff]
    %v3552 = vld [vmem:[#allocation8 + $0x748] sm:$0xff]
    %v3553 = vld [vmem:[#allocation8 + $0x750] sm:$0xff]
    %v3554 = vld [vmem:[#allocation8 + $0x758] sm:$0xff]
    %v3555 = vld [vmem:[#allocation8 + $0x760] sm:$0xff]
    %v3556 = vld [vmem:[#allocation8 + $0x768] sm:$0xff]
    %v3557 = vld [vmem:[#allocation8 + $0x770] sm:$0xff]
    %v3558 = vld [vmem:[#allocation8 + $0x778] sm:$0xff]
    %v3559 = vld [vmem:[#allocation8 + $0x780] sm:$0xff]
    %v3560 = vld [vmem:[#allocation8 + $0x788] sm:$0xff]
    %v3561 = vld [vmem:[#allocation8 + $0x790] sm:$0xff]
    %v3562 = vld [vmem:[#allocation8 + $0x798] sm:$0xff]
    %v3563 = vld [vmem:[#allocation8 + $0x7a0] sm:$0xff]
    %v3564 = vld [vmem:[#allocation8 + $0x7a8] sm:$0xff]
    %v3565 = vld [vmem:[#allocation8 + $0x7b0] sm:$0xff]
    %v3566 = vld [vmem:[#allocation8 + $0x7b8] sm:$0xff]
    %v3567 = vld [vmem:[#allocation8 + $0x7c0] sm:$0xff]
    %v3568 = vld [vmem:[#allocation8 + $0x7c8] sm:$0xff]
    %v3569 = vld [vmem:[#allocation8 + $0x7d0] sm:$0xff]
    %v3570 = vld [vmem:[#allocation8 + $0x7d8] sm:$0xff]
    %v3571 = vld [vmem:[#allocation8 + $0x7e0] sm:$0xff]
    %v3572 = vld [vmem:[#allocation8 + $0x7e8] sm:$0xff]
    %v3573 = vld [vmem:[#allocation8 + $0x7f0] sm:$0xff]
    %v3574 = vld [vmem:[#allocation8 + $0x7f8] sm:$0xff]
    %v3575 = vld [vmem:[#allocation10] sm:$0xf]
    %v3577 = vlaneseq
    %v3578 = vshrl.u32 %v3577, 7
    %v3579 = vsub.s32 0, %v3578
    %v3580 = vrot.slane %v3575, %v3579
    %v3581 = vlaneseq
    %v3582 = vshrl.u32 %v3581, 7
    %v3583 = vsub.s32 1, %v3582
    %v3584 = vrot.slane %v3575, %v3583
    %v3585 = vlaneseq
    %v3586 = vshrl.u32 %v3585, 7
    %v3587 = vsub.s32 2, %v3586
    %v3588 = vrot.slane %v3575, %v3587
    %v3589 = vlaneseq
    %v3590 = vshrl.u32 %v3589, 7
    %v3591 = vsub.s32 3, %v3590
    %v3592 = vrot.slane %v3575, %v3591
    %v3853 = vunpack.c.l.b16 %v3319
    %v3854 = vunpack.c.h.b16 %v3319
    %v3855 = vunpack.c.l.b16 %v3320
    %v3856 = vunpack.c.h.b16 %v3320
    %v3857 = vunpack.c.l.b16 %v3321
    %v3858 = vunpack.c.h.b16 %v3321
    %v3859 = vunpack.c.l.b16 %v3322
    %v3860 = vunpack.c.h.b16 %v3322
    %v3861 = vunpack.c.l.b16 %v3323
    %v3862 = vunpack.c.h.b16 %v3323
    %v3863 = vunpack.c.l.b16 %v3324
    %v3864 = vunpack.c.h.b16 %v3324
    %v3865 = vunpack.c.l.b16 %v3325
    %v3866 = vunpack.c.h.b16 %v3325
    %v3867 = vunpack.c.l.b16 %v3326
    %v3868 = vunpack.c.h.b16 %v3326
    %v3869 = vunpack.c.l.b16 %v3327
    %v3870 = vunpack.c.h.b16 %v3327
    %v3871 = vunpack.c.l.b16 %v3328
    %v3872 = vunpack.c.h.b16 %v3328
    %v3873 = vunpack.c.l.b16 %v3329
    %v3874 = vunpack.c.h.b16 %v3329
    %v3875 = vunpack.c.l.b16 %v3330
    %v3876 = vunpack.c.h.b16 %v3330
    %v3877 = vunpack.c.l.b16 %v3331
    %v3878 = vunpack.c.h.b16 %v3331
    %v3879 = vunpack.c.l.b16 %v3332
    %v3880 = vunpack.c.h.b16 %v3332
    %v3881 = vunpack.c.l.b16 %v3333
    %v3882 = vunpack.c.h.b16 %v3333
    %v3883 = vunpack.c.l.b16 %v3334
    %v3884 = vunpack.c.h.b16 %v3334
    %v3885 = vunpack.c.l.b16 %v3335
    %v3886 = vunpack.c.h.b16 %v3335
    %v3887 = vunpack.c.l.b16 %v3336
    %v3888 = vunpack.c.h.b16 %v3336
    %v3889 = vunpack.c.l.b16 %v3337
    %v3890 = vunpack.c.h.b16 %v3337
    %v3891 = vunpack.c.l.b16 %v3338
    %v3892 = vunpack.c.h.b16 %v3338
    %v3893 = vunpack.c.l.b16 %v3339
    %v3894 = vunpack.c.h.b16 %v3339
    %v3895 = vunpack.c.l.b16 %v3340
    %v3896 = vunpack.c.h.b16 %v3340
    %v3897 = vunpack.c.l.b16 %v3341
    %v3898 = vunpack.c.h.b16 %v3341
    %v3899 = vunpack.c.l.b16 %v3342
    %v3900 = vunpack.c.h.b16 %v3342
    %v3901 = vunpack.c.l.b16 %v3343
    %v3902 = vunpack.c.h.b16 %v3343
    %v3903 = vunpack.c.l.b16 %v3344
    %v3904 = vunpack.c.h.b16 %v3344
    %v3905 = vunpack.c.l.b16 %v3345
    %v3906 = vunpack.c.h.b16 %v3345
    %v3907 = vunpack.c.l.b16 %v3346
    %v3908 = vunpack.c.h.b16 %v3346
    %v3909 = vunpack.c.l.b16 %v3347
    %v3910 = vunpack.c.h.b16 %v3347
    %v3911 = vunpack.c.l.b16 %v3348
    %v3912 = vunpack.c.h.b16 %v3348
    %v3913 = vunpack.c.l.b16 %v3349
    %v3914 = vunpack.c.h.b16 %v3349
    %v3915 = vunpack.c.l.b16 %v3350
    %v3916 = vunpack.c.h.b16 %v3350
    %v3917 = vunpack.c.l.b16 %v3351
    %v3918 = vunpack.c.h.b16 %v3351
    %v3919 = vunpack.c.l.b16 %v3352
    %v3920 = vunpack.c.h.b16 %v3352
    %v3921 = vunpack.c.l.b16 %v3353
    %v3922 = vunpack.c.h.b16 %v3353
    %v3923 = vunpack.c.l.b16 %v3354
    %v3924 = vunpack.c.h.b16 %v3354
    %v3925 = vunpack.c.l.b16 %v3355
    %v3926 = vunpack.c.h.b16 %v3355
    %v3927 = vunpack.c.l.b16 %v3356
    %v3928 = vunpack.c.h.b16 %v3356
    %v3929 = vunpack.c.l.b16 %v3357
    %v3930 = vunpack.c.h.b16 %v3357
    %v3931 = vunpack.c.l.b16 %v3358
    %v3932 = vunpack.c.h.b16 %v3358
    %v3933 = vunpack.c.l.b16 %v3359
    %v3934 = vunpack.c.h.b16 %v3359
    %v3935 = vunpack.c.l.b16 %v3360
    %v3936 = vunpack.c.h.b16 %v3360
    %v3937 = vunpack.c.l.b16 %v3361
    %v3938 = vunpack.c.h.b16 %v3361
    %v3939 = vunpack.c.l.b16 %v3362
    %v3940 = vunpack.c.h.b16 %v3362
    %v3941 = vunpack.c.l.b16 %v3363
    %v3942 = vunpack.c.h.b16 %v3363
    %v3943 = vunpack.c.l.b16 %v3364
    %v3944 = vunpack.c.h.b16 %v3364
    %v3945 = vunpack.c.l.b16 %v3365
    %v3946 = vunpack.c.h.b16 %v3365
    %v3947 = vunpack.c.l.b16 %v3366
    %v3948 = vunpack.c.h.b16 %v3366
    %v3949 = vunpack.c.l.b16 %v3367
    %v3950 = vunpack.c.h.b16 %v3367
    %v3951 = vunpack.c.l.b16 %v3368
    %v3952 = vunpack.c.h.b16 %v3368
    %v3953 = vunpack.c.l.b16 %v3369
    %v3954 = vunpack.c.h.b16 %v3369
    %v3955 = vunpack.c.l.b16 %v3370
    %v3956 = vunpack.c.h.b16 %v3370
    %v3957 = vunpack.c.l.b16 %v3371
    %v3958 = vunpack.c.h.b16 %v3371
    %v3959 = vunpack.c.l.b16 %v3372
    %v3960 = vunpack.c.h.b16 %v3372
    %v3961 = vunpack.c.l.b16 %v3373
    %v3962 = vunpack.c.h.b16 %v3373
    %v3963 = vunpack.c.l.b16 %v3374
    %v3964 = vunpack.c.h.b16 %v3374
    %v3965 = vunpack.c.l.b16 %v3375
    %v3966 = vunpack.c.h.b16 %v3375
    %v3967 = vunpack.c.l.b16 %v3376
    %v3968 = vunpack.c.h.b16 %v3376
    %v3969 = vunpack.c.l.b16 %v3377
    %v3970 = vunpack.c.h.b16 %v3377
    %v3971 = vunpack.c.l.b16 %v3378
    %v3972 = vunpack.c.h.b16 %v3378
    %v3973 = vunpack.c.l.b16 %v3379
    %v3974 = vunpack.c.h.b16 %v3379
    %v3975 = vunpack.c.l.b16 %v3380
    %v3976 = vunpack.c.h.b16 %v3380
    %v3977 = vunpack.c.l.b16 %v3381
    %v3978 = vunpack.c.h.b16 %v3381
    %v3979 = vunpack.c.l.b16 %v3382
    %v3980 = vunpack.c.h.b16 %v3382
    %v3981 = vunpack.c.l.b16 %v3383
    %v3982 = vunpack.c.h.b16 %v3383
    %v3983 = vunpack.c.l.b16 %v3384
    %v3984 = vunpack.c.h.b16 %v3384
    %v3985 = vunpack.c.l.b16 %v3385
    %v3986 = vunpack.c.h.b16 %v3385
    %v3987 = vunpack.c.l.b16 %v3386
    %v3988 = vunpack.c.h.b16 %v3386
    %v3989 = vunpack.c.l.b16 %v3387
    %v3990 = vunpack.c.h.b16 %v3387
    %v3991 = vunpack.c.l.b16 %v3388
    %v3992 = vunpack.c.h.b16 %v3388
    %v3993 = vunpack.c.l.b16 %v3389
    %v3994 = vunpack.c.h.b16 %v3389
    %v3995 = vunpack.c.l.b16 %v3390
    %v3996 = vunpack.c.h.b16 %v3390
    %v3997 = vunpack.c.l.b16 %v3391
    %v3998 = vunpack.c.h.b16 %v3391
    %v3999 = vunpack.c.l.b16 %v3392
    %v4000 = vunpack.c.h.b16 %v3392
    %v4001 = vunpack.c.l.b16 %v3393
    %v4002 = vunpack.c.h.b16 %v3393
    %v4003 = vunpack.c.l.b16 %v3394
    %v4004 = vunpack.c.h.b16 %v3394
    %v4005 = vunpack.c.l.b16 %v3395
    %v4006 = vunpack.c.h.b16 %v3395
    %v4007 = vunpack.c.l.b16 %v3396
    %v4008 = vunpack.c.h.b16 %v3396
    %v4009 = vunpack.c.l.b16 %v3397
    %v4010 = vunpack.c.h.b16 %v3397
    %v4011 = vunpack.c.l.b16 %v3398
    %v4012 = vunpack.c.h.b16 %v3398
    %v4013 = vunpack.c.l.b16 %v3399
    %v4014 = vunpack.c.h.b16 %v3399
    %v4015 = vunpack.c.l.b16 %v3400
    %v4016 = vunpack.c.h.b16 %v3400
    %v4017 = vunpack.c.l.b16 %v3401
    %v4018 = vunpack.c.h.b16 %v3401
    %v4019 = vunpack.c.l.b16 %v3402
    %v4020 = vunpack.c.h.b16 %v3402
    %v4021 = vunpack.c.l.b16 %v3403
    %v4022 = vunpack.c.h.b16 %v3403
    %v4023 = vunpack.c.l.b16 %v3404
    %v4024 = vunpack.c.h.b16 %v3404
    %v4025 = vunpack.c.l.b16 %v3405
    %v4026 = vunpack.c.h.b16 %v3405
    %v4027 = vunpack.c.l.b16 %v3406
    %v4028 = vunpack.c.h.b16 %v3406
    %v4029 = vunpack.c.l.b16 %v3407
    %v4030 = vunpack.c.h.b16 %v3407
    %v4031 = vunpack.c.l.b16 %v3408
    %v4032 = vunpack.c.h.b16 %v3408
    %v4033 = vunpack.c.l.b16 %v3409
    %v4034 = vunpack.c.h.b16 %v3409
    %v4035 = vunpack.c.l.b16 %v3410
    %v4036 = vunpack.c.h.b16 %v3410
    %v4037 = vunpack.c.l.b16 %v3411
    %v4038 = vunpack.c.h.b16 %v3411
    %v4039 = vunpack.c.l.b16 %v3412
    %v4040 = vunpack.c.h.b16 %v3412
    %v4041 = vunpack.c.l.b16 %v3413
    %v4042 = vunpack.c.h.b16 %v3413
    %v4043 = vunpack.c.l.b16 %v3414
    %v4044 = vunpack.c.h.b16 %v3414
    %v4045 = vunpack.c.l.b16 %v3415
    %v4046 = vunpack.c.h.b16 %v3415
    %v4047 = vunpack.c.l.b16 %v3416
    %v4048 = vunpack.c.h.b16 %v3416
    %v4049 = vunpack.c.l.b16 %v3417
    %v4050 = vunpack.c.h.b16 %v3417
    %v4051 = vunpack.c.l.b16 %v3418
    %v4052 = vunpack.c.h.b16 %v3418
    %v4053 = vunpack.c.l.b16 %v3419
    %v4054 = vunpack.c.h.b16 %v3419
    %v4055 = vunpack.c.l.b16 %v3420
    %v4056 = vunpack.c.h.b16 %v3420
    %v4057 = vunpack.c.l.b16 %v3421
    %v4058 = vunpack.c.h.b16 %v3421
    %v4059 = vunpack.c.l.b16 %v3422
    %v4060 = vunpack.c.h.b16 %v3422
    %v4061 = vunpack.c.l.b16 %v3423
    %v4062 = vunpack.c.h.b16 %v3423
    %v4063 = vunpack.c.l.b16 %v3424
    %v4064 = vunpack.c.h.b16 %v3424
    %v4065 = vunpack.c.l.b16 %v3425
    %v4066 = vunpack.c.h.b16 %v3425
    %v4067 = vunpack.c.l.b16 %v3426
    %v4068 = vunpack.c.h.b16 %v3426
    %v4069 = vunpack.c.l.b16 %v3427
    %v4070 = vunpack.c.h.b16 %v3427
    %v4071 = vunpack.c.l.b16 %v3428
    %v4072 = vunpack.c.h.b16 %v3428
    %v4073 = vunpack.c.l.b16 %v3429
    %v4074 = vunpack.c.h.b16 %v3429
    %v4075 = vunpack.c.l.b16 %v3430
    %v4076 = vunpack.c.h.b16 %v3430
    %v4077 = vunpack.c.l.b16 %v3431
    %v4078 = vunpack.c.h.b16 %v3431
    %v4079 = vunpack.c.l.b16 %v3432
    %v4080 = vunpack.c.h.b16 %v3432
    %v4081 = vunpack.c.l.b16 %v3433
    %v4082 = vunpack.c.h.b16 %v3433
    %v4083 = vunpack.c.l.b16 %v3434
    %v4084 = vunpack.c.h.b16 %v3434
    %v4085 = vunpack.c.l.b16 %v3435
    %v4086 = vunpack.c.h.b16 %v3435
    %v4087 = vunpack.c.l.b16 %v3436
    %v4088 = vunpack.c.h.b16 %v3436
    %v4089 = vunpack.c.l.b16 %v3437
    %v4090 = vunpack.c.h.b16 %v3437
    %v4091 = vunpack.c.l.b16 %v3438
    %v4092 = vunpack.c.h.b16 %v3438
    %v4093 = vunpack.c.l.b16 %v3439
    %v4094 = vunpack.c.h.b16 %v3439
    %v4095 = vunpack.c.l.b16 %v3440
    %v4096 = vunpack.c.h.b16 %v3440
    %v4097 = vunpack.c.l.b16 %v3441
    %v4098 = vunpack.c.h.b16 %v3441
    %v4099 = vunpack.c.l.b16 %v3442
    %v4100 = vunpack.c.h.b16 %v3442
    %v4101 = vunpack.c.l.b16 %v3443
    %v4102 = vunpack.c.h.b16 %v3443
    %v4103 = vunpack.c.l.b16 %v3444
    %v4104 = vunpack.c.h.b16 %v3444
    %v4105 = vunpack.c.l.b16 %v3445
    %v4106 = vunpack.c.h.b16 %v3445
    %v4107 = vunpack.c.l.b16 %v3446
    %v4108 = vunpack.c.h.b16 %v3446
    %v4109 = vunpack.c.l.b16 %v3447
    %v4110 = vunpack.c.h.b16 %v3447
    %v4111 = vunpack.c.l.b16 %v3448
    %v4112 = vunpack.c.h.b16 %v3448
    %v4113 = vunpack.c.l.b16 %v3449
    %v4114 = vunpack.c.h.b16 %v3449
    %v4115 = vunpack.c.l.b16 %v3450
    %v4116 = vunpack.c.h.b16 %v3450
    %v4117 = vunpack.c.l.b16 %v3451
    %v4118 = vunpack.c.h.b16 %v3451
    %v4119 = vunpack.c.l.b16 %v3452
    %v4120 = vunpack.c.h.b16 %v3452
    %v4121 = vunpack.c.l.b16 %v3453
    %v4122 = vunpack.c.h.b16 %v3453
    %v4123 = vunpack.c.l.b16 %v3454
    %v4124 = vunpack.c.h.b16 %v3454
    %v4125 = vunpack.c.l.b16 %v3455
    %v4126 = vunpack.c.h.b16 %v3455
    %v4127 = vunpack.c.l.b16 %v3456
    %v4128 = vunpack.c.h.b16 %v3456
    %v4129 = vunpack.c.l.b16 %v3457
    %v4130 = vunpack.c.h.b16 %v3457
    %v4131 = vunpack.c.l.b16 %v3458
    %v4132 = vunpack.c.h.b16 %v3458
    %v4133 = vunpack.c.l.b16 %v3459
    %v4134 = vunpack.c.h.b16 %v3459
    %v4135 = vunpack.c.l.b16 %v3460
    %v4136 = vunpack.c.h.b16 %v3460
    %v4137 = vunpack.c.l.b16 %v3461
    %v4138 = vunpack.c.h.b16 %v3461
    %v4139 = vunpack.c.l.b16 %v3462
    %v4140 = vunpack.c.h.b16 %v3462
    %v4141 = vunpack.c.l.b16 %v3463
    %v4142 = vunpack.c.h.b16 %v3463
    %v4143 = vunpack.c.l.b16 %v3464
    %v4144 = vunpack.c.h.b16 %v3464
    %v4145 = vunpack.c.l.b16 %v3465
    %v4146 = vunpack.c.h.b16 %v3465
    %v4147 = vunpack.c.l.b16 %v3466
    %v4148 = vunpack.c.h.b16 %v3466
    %v4149 = vunpack.c.l.b16 %v3467
    %v4150 = vunpack.c.h.b16 %v3467
    %v4151 = vunpack.c.l.b16 %v3468
    %v4152 = vunpack.c.h.b16 %v3468
    %v4153 = vunpack.c.l.b16 %v3469
    %v4154 = vunpack.c.h.b16 %v3469
    %v4155 = vunpack.c.l.b16 %v3470
    %v4156 = vunpack.c.h.b16 %v3470
    %v4157 = vunpack.c.l.b16 %v3471
    %v4158 = vunpack.c.h.b16 %v3471
    %v4159 = vunpack.c.l.b16 %v3472
    %v4160 = vunpack.c.h.b16 %v3472
    %v4161 = vunpack.c.l.b16 %v3473
    %v4162 = vunpack.c.h.b16 %v3473
    %v4163 = vunpack.c.l.b16 %v3474
    %v4164 = vunpack.c.h.b16 %v3474
    %v4165 = vunpack.c.l.b16 %v3475
    %v4166 = vunpack.c.h.b16 %v3475
    %v4167 = vunpack.c.l.b16 %v3476
    %v4168 = vunpack.c.h.b16 %v3476
    %v4169 = vunpack.c.l.b16 %v3477
    %v4170 = vunpack.c.h.b16 %v3477
    %v4171 = vunpack.c.l.b16 %v3478
    %v4172 = vunpack.c.h.b16 %v3478
    %v4173 = vunpack.c.l.b16 %v3479
    %v4174 = vunpack.c.h.b16 %v3479
    %v4175 = vunpack.c.l.b16 %v3480
    %v4176 = vunpack.c.h.b16 %v3480
    %v4177 = vunpack.c.l.b16 %v3481
    %v4178 = vunpack.c.h.b16 %v3481
    %v4179 = vunpack.c.l.b16 %v3482
    %v4180 = vunpack.c.h.b16 %v3482
    %v4181 = vunpack.c.l.b16 %v3483
    %v4182 = vunpack.c.h.b16 %v3483
    %v4183 = vunpack.c.l.b16 %v3484
    %v4184 = vunpack.c.h.b16 %v3484
    %v4185 = vunpack.c.l.b16 %v3485
    %v4186 = vunpack.c.h.b16 %v3485
    %v4187 = vunpack.c.l.b16 %v3486
    %v4188 = vunpack.c.h.b16 %v3486
    %v4189 = vunpack.c.l.b16 %v3487
    %v4190 = vunpack.c.h.b16 %v3487
    %v4191 = vunpack.c.l.b16 %v3488
    %v4192 = vunpack.c.h.b16 %v3488
    %v4193 = vunpack.c.l.b16 %v3489
    %v4194 = vunpack.c.h.b16 %v3489
    %v4195 = vunpack.c.l.b16 %v3490
    %v4196 = vunpack.c.h.b16 %v3490
    %v4197 = vunpack.c.l.b16 %v3491
    %v4198 = vunpack.c.h.b16 %v3491
    %v4199 = vunpack.c.l.b16 %v3492
    %v4200 = vunpack.c.h.b16 %v3492
    %v4201 = vunpack.c.l.b16 %v3493
    %v4202 = vunpack.c.h.b16 %v3493
    %v4203 = vunpack.c.l.b16 %v3494
    %v4204 = vunpack.c.h.b16 %v3494
    %v4205 = vunpack.c.l.b16 %v3495
    %v4206 = vunpack.c.h.b16 %v3495
    %v4207 = vunpack.c.l.b16 %v3496
    %v4208 = vunpack.c.h.b16 %v3496
    %v4209 = vunpack.c.l.b16 %v3497
    %v4210 = vunpack.c.h.b16 %v3497
    %v4211 = vunpack.c.l.b16 %v3498
    %v4212 = vunpack.c.h.b16 %v3498
    %v4213 = vunpack.c.l.b16 %v3499
    %v4214 = vunpack.c.h.b16 %v3499
    %v4215 = vunpack.c.l.b16 %v3500
    %v4216 = vunpack.c.h.b16 %v3500
    %v4217 = vunpack.c.l.b16 %v3501
    %v4218 = vunpack.c.h.b16 %v3501
    %v4219 = vunpack.c.l.b16 %v3502
    %v4220 = vunpack.c.h.b16 %v3502
    %v4221 = vunpack.c.l.b16 %v3503
    %v4222 = vunpack.c.h.b16 %v3503
    %v4223 = vunpack.c.l.b16 %v3504
    %v4224 = vunpack.c.h.b16 %v3504
    %v4225 = vunpack.c.l.b16 %v3505
    %v4226 = vunpack.c.h.b16 %v3505
    %v4227 = vunpack.c.l.b16 %v3506
    %v4228 = vunpack.c.h.b16 %v3506
    %v4229 = vunpack.c.l.b16 %v3507
    %v4230 = vunpack.c.h.b16 %v3507
    %v4231 = vunpack.c.l.b16 %v3508
    %v4232 = vunpack.c.h.b16 %v3508
    %v4233 = vunpack.c.l.b16 %v3509
    %v4234 = vunpack.c.h.b16 %v3509
    %v4235 = vunpack.c.l.b16 %v3510
    %v4236 = vunpack.c.h.b16 %v3510
    %v4237 = vunpack.c.l.b16 %v3511
    %v4238 = vunpack.c.h.b16 %v3511
    %v4239 = vunpack.c.l.b16 %v3512
    %v4240 = vunpack.c.h.b16 %v3512
    %v4241 = vunpack.c.l.b16 %v3513
    %v4242 = vunpack.c.h.b16 %v3513
    %v4243 = vunpack.c.l.b16 %v3514
    %v4244 = vunpack.c.h.b16 %v3514
    %v4245 = vunpack.c.l.b16 %v3515
    %v4246 = vunpack.c.h.b16 %v3515
    %v4247 = vunpack.c.l.b16 %v3516
    %v4248 = vunpack.c.h.b16 %v3516
    %v4249 = vunpack.c.l.b16 %v3517
    %v4250 = vunpack.c.h.b16 %v3517
    %v4251 = vunpack.c.l.b16 %v3518
    %v4252 = vunpack.c.h.b16 %v3518
    %v4253 = vunpack.c.l.b16 %v3519
    %v4254 = vunpack.c.h.b16 %v3519
    %v4255 = vunpack.c.l.b16 %v3520
    %v4256 = vunpack.c.h.b16 %v3520
    %v4257 = vunpack.c.l.b16 %v3521
    %v4258 = vunpack.c.h.b16 %v3521
    %v4259 = vunpack.c.l.b16 %v3522
    %v4260 = vunpack.c.h.b16 %v3522
    %v4261 = vunpack.c.l.b16 %v3523
    %v4262 = vunpack.c.h.b16 %v3523
    %v4263 = vunpack.c.l.b16 %v3524
    %v4264 = vunpack.c.h.b16 %v3524
    %v4265 = vunpack.c.l.b16 %v3525
    %v4266 = vunpack.c.h.b16 %v3525
    %v4267 = vunpack.c.l.b16 %v3526
    %v4268 = vunpack.c.h.b16 %v3526
    %v4269 = vunpack.c.l.b16 %v3527
    %v4270 = vunpack.c.h.b16 %v3527
    %v4271 = vunpack.c.l.b16 %v3528
    %v4272 = vunpack.c.h.b16 %v3528
    %v4273 = vunpack.c.l.b16 %v3529
    %v4274 = vunpack.c.h.b16 %v3529
    %v4275 = vunpack.c.l.b16 %v3530
    %v4276 = vunpack.c.h.b16 %v3530
    %v4277 = vunpack.c.l.b16 %v3531
    %v4278 = vunpack.c.h.b16 %v3531
    %v4279 = vunpack.c.l.b16 %v3532
    %v4280 = vunpack.c.h.b16 %v3532
    %v4281 = vunpack.c.l.b16 %v3533
    %v4282 = vunpack.c.h.b16 %v3533
    %v4283 = vunpack.c.l.b16 %v3534
    %v4284 = vunpack.c.h.b16 %v3534
    %v4285 = vunpack.c.l.b16 %v3535
    %v4286 = vunpack.c.h.b16 %v3535
    %v4287 = vunpack.c.l.b16 %v3536
    %v4288 = vunpack.c.h.b16 %v3536
    %v4289 = vunpack.c.l.b16 %v3537
    %v4290 = vunpack.c.h.b16 %v3537
    %v4291 = vunpack.c.l.b16 %v3538
    %v4292 = vunpack.c.h.b16 %v3538
    %v4293 = vunpack.c.l.b16 %v3539
    %v4294 = vunpack.c.h.b16 %v3539
    %v4295 = vunpack.c.l.b16 %v3540
    %v4296 = vunpack.c.h.b16 %v3540
    %v4297 = vunpack.c.l.b16 %v3541
    %v4298 = vunpack.c.h.b16 %v3541
    %v4299 = vunpack.c.l.b16 %v3542
    %v4300 = vunpack.c.h.b16 %v3542
    %v4301 = vunpack.c.l.b16 %v3543
    %v4302 = vunpack.c.h.b16 %v3543
    %v4303 = vunpack.c.l.b16 %v3544
    %v4304 = vunpack.c.h.b16 %v3544
    %v4305 = vunpack.c.l.b16 %v3545
    %v4306 = vunpack.c.h.b16 %v3545
    %v4307 = vunpack.c.l.b16 %v3546
    %v4308 = vunpack.c.h.b16 %v3546
    %v4309 = vunpack.c.l.b16 %v3547
    %v4310 = vunpack.c.h.b16 %v3547
    %v4311 = vunpack.c.l.b16 %v3548
    %v4312 = vunpack.c.h.b16 %v3548
    %v4313 = vunpack.c.l.b16 %v3549
    %v4314 = vunpack.c.h.b16 %v3549
    %v4315 = vunpack.c.l.b16 %v3550
    %v4316 = vunpack.c.h.b16 %v3550
    %v4317 = vunpack.c.l.b16 %v3551
    %v4318 = vunpack.c.h.b16 %v3551
    %v4319 = vunpack.c.l.b16 %v3552
    %v4320 = vunpack.c.h.b16 %v3552
    %v4321 = vunpack.c.l.b16 %v3553
    %v4322 = vunpack.c.h.b16 %v3553
    %v4323 = vunpack.c.l.b16 %v3554
    %v4324 = vunpack.c.h.b16 %v3554
    %v4325 = vunpack.c.l.b16 %v3555
    %v4326 = vunpack.c.h.b16 %v3555
    %v4327 = vunpack.c.l.b16 %v3556
    %v4328 = vunpack.c.h.b16 %v3556
    %v4329 = vunpack.c.l.b16 %v3557
    %v4330 = vunpack.c.h.b16 %v3557
    %v4331 = vunpack.c.l.b16 %v3558
    %v4332 = vunpack.c.h.b16 %v3558
    %v4333 = vunpack.c.l.b16 %v3559
    %v4334 = vunpack.c.h.b16 %v3559
    %v4335 = vunpack.c.l.b16 %v3560
    %v4336 = vunpack.c.h.b16 %v3560
    %v4337 = vunpack.c.l.b16 %v3561
    %v4338 = vunpack.c.h.b16 %v3561
    %v4339 = vunpack.c.l.b16 %v3562
    %v4340 = vunpack.c.h.b16 %v3562
    %v4341 = vunpack.c.l.b16 %v3563
    %v4342 = vunpack.c.h.b16 %v3563
    %v4343 = vunpack.c.l.b16 %v3564
    %v4344 = vunpack.c.h.b16 %v3564
    %v4345 = vunpack.c.l.b16 %v3565
    %v4346 = vunpack.c.h.b16 %v3565
    %v4347 = vunpack.c.l.b16 %v3566
    %v4348 = vunpack.c.h.b16 %v3566
    %v4349 = vunpack.c.l.b16 %v3567
    %v4350 = vunpack.c.h.b16 %v3567
    %v4351 = vunpack.c.l.b16 %v3568
    %v4352 = vunpack.c.h.b16 %v3568
    %v4353 = vunpack.c.l.b16 %v3569
    %v4354 = vunpack.c.h.b16 %v3569
    %v4355 = vunpack.c.l.b16 %v3570
    %v4356 = vunpack.c.h.b16 %v3570
    %v4357 = vunpack.c.l.b16 %v3571
    %v4358 = vunpack.c.h.b16 %v3571
    %v4359 = vunpack.c.l.b16 %v3572
    %v4360 = vunpack.c.h.b16 %v3572
    %v4361 = vunpack.c.l.b16 %v3573
    %v4362 = vunpack.c.h.b16 %v3573
    %v4363 = vunpack.c.l.b16 %v3574
    %v4364 = vunpack.c.h.b16 %v3574
    %v4365 = vpack.c.b16 %v3857, %v3853
    %v4366 = vpack.c.b16 %v3858, %v3854
    %v4367 = vpack.c.b16 %v3859, %v3855
    %v4368 = vpack.c.b16 %v3860, %v3856
    %v4369 = vpack.c.b16 %v3865, %v3861
    %v4370 = vpack.c.b16 %v3866, %v3862
    %v4371 = vpack.c.b16 %v3867, %v3863
    %v4372 = vpack.c.b16 %v3868, %v3864
    %v4373 = vpack.c.b16 %v3873, %v3869
    %v4374 = vpack.c.b16 %v3874, %v3870
    %v4375 = vpack.c.b16 %v3875, %v3871
    %v4376 = vpack.c.b16 %v3876, %v3872
    %v4377 = vpack.c.b16 %v3881, %v3877
    %v4378 = vpack.c.b16 %v3882, %v3878
    %v4379 = vpack.c.b16 %v3883, %v3879
    %v4380 = vpack.c.b16 %v3884, %v3880
    %v4381 = vpack.c.b16 %v3889, %v3885
    %v4382 = vpack.c.b16 %v3890, %v3886
    %v4383 = vpack.c.b16 %v3891, %v3887
    %v4384 = vpack.c.b16 %v3892, %v3888
    %v4385 = vpack.c.b16 %v3897, %v3893
    %v4386 = vpack.c.b16 %v3898, %v3894
    %v4387 = vpack.c.b16 %v3899, %v3895
    %v4388 = vpack.c.b16 %v3900, %v3896
    %v4389 = vpack.c.b16 %v3905, %v3901
    %v4390 = vpack.c.b16 %v3906, %v3902
    %v4391 = vpack.c.b16 %v3907, %v3903
    %v4392 = vpack.c.b16 %v3908, %v3904
    %v4393 = vpack.c.b16 %v3913, %v3909
    %v4394 = vpack.c.b16 %v3914, %v3910
    %v4395 = vpack.c.b16 %v3915, %v3911
    %v4396 = vpack.c.b16 %v3916, %v3912
    %v4397 = vpack.c.b16 %v3921, %v3917
    %v4398 = vpack.c.b16 %v3922, %v3918
    %v4399 = vpack.c.b16 %v3923, %v3919
    %v4400 = vpack.c.b16 %v3924, %v3920
    %v4401 = vpack.c.b16 %v3929, %v3925
    %v4402 = vpack.c.b16 %v3930, %v3926
    %v4403 = vpack.c.b16 %v3931, %v3927
    %v4404 = vpack.c.b16 %v3932, %v3928
    %v4405 = vpack.c.b16 %v3937, %v3933
    %v4406 = vpack.c.b16 %v3938, %v3934
    %v4407 = vpack.c.b16 %v3939, %v3935
    %v4408 = vpack.c.b16 %v3940, %v3936
    %v4409 = vpack.c.b16 %v3945, %v3941
    %v4410 = vpack.c.b16 %v3946, %v3942
    %v4411 = vpack.c.b16 %v3947, %v3943
    %v4412 = vpack.c.b16 %v3948, %v3944
    %v4413 = vpack.c.b16 %v3953, %v3949
    %v4414 = vpack.c.b16 %v3954, %v3950
    %v4415 = vpack.c.b16 %v3955, %v3951
    %v4416 = vpack.c.b16 %v3956, %v3952
    %v4417 = vpack.c.b16 %v3961, %v3957
    %v4418 = vpack.c.b16 %v3962, %v3958
    %v4419 = vpack.c.b16 %v3963, %v3959
    %v4420 = vpack.c.b16 %v3964, %v3960
    %v4421 = vpack.c.b16 %v3969, %v3965
    %v4422 = vpack.c.b16 %v3970, %v3966
    %v4423 = vpack.c.b16 %v3971, %v3967
    %v4424 = vpack.c.b16 %v3972, %v3968
    %v4425 = vpack.c.b16 %v3977, %v3973
    %v4426 = vpack.c.b16 %v3978, %v3974
    %v4427 = vpack.c.b16 %v3979, %v3975
    %v4428 = vpack.c.b16 %v3980, %v3976
    %v4429 = vpack.c.b16 %v3985, %v3981
    %v4430 = vpack.c.b16 %v3986, %v3982
    %v4431 = vpack.c.b16 %v3987, %v3983
    %v4432 = vpack.c.b16 %v3988, %v3984
    %v4433 = vpack.c.b16 %v3993, %v3989
    %v4434 = vpack.c.b16 %v3994, %v3990
    %v4435 = vpack.c.b16 %v3995, %v3991
    %v4436 = vpack.c.b16 %v3996, %v3992
    %v4437 = vpack.c.b16 %v4001, %v3997
    %v4438 = vpack.c.b16 %v4002, %v3998
    %v4439 = vpack.c.b16 %v4003, %v3999
    %v4440 = vpack.c.b16 %v4004, %v4000
    %v4441 = vpack.c.b16 %v4009, %v4005
    %v4442 = vpack.c.b16 %v4010, %v4006
    %v4443 = vpack.c.b16 %v4011, %v4007
    %v4444 = vpack.c.b16 %v4012, %v4008
    %v4445 = vpack.c.b16 %v4017, %v4013
    %v4446 = vpack.c.b16 %v4018, %v4014
    %v4447 = vpack.c.b16 %v4019, %v4015
    %v4448 = vpack.c.b16 %v4020, %v4016
    %v4449 = vpack.c.b16 %v4025, %v4021
    %v4450 = vpack.c.b16 %v4026, %v4022
    %v4451 = vpack.c.b16 %v4027, %v4023
    %v4452 = vpack.c.b16 %v4028, %v4024
    %v4453 = vpack.c.b16 %v4033, %v4029
    %v4454 = vpack.c.b16 %v4034, %v4030
    %v4455 = vpack.c.b16 %v4035, %v4031
    %v4456 = vpack.c.b16 %v4036, %v4032
    %v4457 = vpack.c.b16 %v4041, %v4037
    %v4458 = vpack.c.b16 %v4042, %v4038
    %v4459 = vpack.c.b16 %v4043, %v4039
    %v4460 = vpack.c.b16 %v4044, %v4040
    %v4461 = vpack.c.b16 %v4049, %v4045
    %v4462 = vpack.c.b16 %v4050, %v4046
    %v4463 = vpack.c.b16 %v4051, %v4047
    %v4464 = vpack.c.b16 %v4052, %v4048
    %v4465 = vpack.c.b16 %v4057, %v4053
    %v4466 = vpack.c.b16 %v4058, %v4054
    %v4467 = vpack.c.b16 %v4059, %v4055
    %v4468 = vpack.c.b16 %v4060, %v4056
    %v4469 = vpack.c.b16 %v4065, %v4061
    %v4470 = vpack.c.b16 %v4066, %v4062
    %v4471 = vpack.c.b16 %v4067, %v4063
    %v4472 = vpack.c.b16 %v4068, %v4064
    %v4473 = vpack.c.b16 %v4073, %v4069
    %v4474 = vpack.c.b16 %v4074, %v4070
    %v4475 = vpack.c.b16 %v4075, %v4071
    %v4476 = vpack.c.b16 %v4076, %v4072
    %v4477 = vpack.c.b16 %v4081, %v4077
    %v4478 = vpack.c.b16 %v4082, %v4078
    %v4479 = vpack.c.b16 %v4083, %v4079
    %v4480 = vpack.c.b16 %v4084, %v4080
    %v4481 = vpack.c.b16 %v4089, %v4085
    %v4482 = vpack.c.b16 %v4090, %v4086
    %v4483 = vpack.c.b16 %v4091, %v4087
    %v4484 = vpack.c.b16 %v4092, %v4088
    %v4485 = vpack.c.b16 %v4097, %v4093
    %v4486 = vpack.c.b16 %v4098, %v4094
    %v4487 = vpack.c.b16 %v4099, %v4095
    %v4488 = vpack.c.b16 %v4100, %v4096
    %v4489 = vpack.c.b16 %v4105, %v4101
    %v4490 = vpack.c.b16 %v4106, %v4102
    %v4491 = vpack.c.b16 %v4107, %v4103
    %v4492 = vpack.c.b16 %v4108, %v4104
    %v4493 = vpack.c.b16 %v4113, %v4109
    %v4494 = vpack.c.b16 %v4114, %v4110
    %v4495 = vpack.c.b16 %v4115, %v4111
    %v4496 = vpack.c.b16 %v4116, %v4112
    %v4497 = vpack.c.b16 %v4121, %v4117
    %v4498 = vpack.c.b16 %v4122, %v4118
    %v4499 = vpack.c.b16 %v4123, %v4119
    %v4500 = vpack.c.b16 %v4124, %v4120
    %v4501 = vpack.c.b16 %v4129, %v4125
    %v4502 = vpack.c.b16 %v4130, %v4126
    %v4503 = vpack.c.b16 %v4131, %v4127
    %v4504 = vpack.c.b16 %v4132, %v4128
    %v4505 = vpack.c.b16 %v4137, %v4133
    %v4506 = vpack.c.b16 %v4138, %v4134
    %v4507 = vpack.c.b16 %v4139, %v4135
    %v4508 = vpack.c.b16 %v4140, %v4136
    %v4509 = vpack.c.b16 %v4145, %v4141
    %v4510 = vpack.c.b16 %v4146, %v4142
    %v4511 = vpack.c.b16 %v4147, %v4143
    %v4512 = vpack.c.b16 %v4148, %v4144
    %v4513 = vpack.c.b16 %v4153, %v4149
    %v4514 = vpack.c.b16 %v4154, %v4150
    %v4515 = vpack.c.b16 %v4155, %v4151
    %v4516 = vpack.c.b16 %v4156, %v4152
    %v4517 = vpack.c.b16 %v4161, %v4157
    %v4518 = vpack.c.b16 %v4162, %v4158
    %v4519 = vpack.c.b16 %v4163, %v4159
    %v4520 = vpack.c.b16 %v4164, %v4160
    %v4521 = vpack.c.b16 %v4169, %v4165
    %v4522 = vpack.c.b16 %v4170, %v4166
    %v4523 = vpack.c.b16 %v4171, %v4167
    %v4524 = vpack.c.b16 %v4172, %v4168
    %v4525 = vpack.c.b16 %v4177, %v4173
    %v4526 = vpack.c.b16 %v4178, %v4174
    %v4527 = vpack.c.b16 %v4179, %v4175
    %v4528 = vpack.c.b16 %v4180, %v4176
    %v4529 = vpack.c.b16 %v4185, %v4181
    %v4530 = vpack.c.b16 %v4186, %v4182
    %v4531 = vpack.c.b16 %v4187, %v4183
    %v4532 = vpack.c.b16 %v4188, %v4184
    %v4533 = vpack.c.b16 %v4193, %v4189
    %v4534 = vpack.c.b16 %v4194, %v4190
    %v4535 = vpack.c.b16 %v4195, %v4191
    %v4536 = vpack.c.b16 %v4196, %v4192
    %v4537 = vpack.c.b16 %v4201, %v4197
    %v4538 = vpack.c.b16 %v4202, %v4198
    %v4539 = vpack.c.b16 %v4203, %v4199
    %v4540 = vpack.c.b16 %v4204, %v4200
    %v4541 = vpack.c.b16 %v4209, %v4205
    %v4542 = vpack.c.b16 %v4210, %v4206
    %v4543 = vpack.c.b16 %v4211, %v4207
    %v4544 = vpack.c.b16 %v4212, %v4208
    %v4545 = vpack.c.b16 %v4217, %v4213
    %v4546 = vpack.c.b16 %v4218, %v4214
    %v4547 = vpack.c.b16 %v4219, %v4215
    %v4548 = vpack.c.b16 %v4220, %v4216
    %v4549 = vpack.c.b16 %v4225, %v4221
    %v4550 = vpack.c.b16 %v4226, %v4222
    %v4551 = vpack.c.b16 %v4227, %v4223
    %v4552 = vpack.c.b16 %v4228, %v4224
    %v4553 = vpack.c.b16 %v4233, %v4229
    %v4554 = vpack.c.b16 %v4234, %v4230
    %v4555 = vpack.c.b16 %v4235, %v4231
    %v4556 = vpack.c.b16 %v4236, %v4232
    %v4557 = vpack.c.b16 %v4241, %v4237
    %v4558 = vpack.c.b16 %v4242, %v4238
    %v4559 = vpack.c.b16 %v4243, %v4239
    %v4560 = vpack.c.b16 %v4244, %v4240
    %v4561 = vpack.c.b16 %v4249, %v4245
    %v4562 = vpack.c.b16 %v4250, %v4246
    %v4563 = vpack.c.b16 %v4251, %v4247
    %v4564 = vpack.c.b16 %v4252, %v4248
    %v4565 = vpack.c.b16 %v4257, %v4253
    %v4566 = vpack.c.b16 %v4258, %v4254
    %v4567 = vpack.c.b16 %v4259, %v4255
    %v4568 = vpack.c.b16 %v4260, %v4256
    %v4569 = vpack.c.b16 %v4265, %v4261
    %v4570 = vpack.c.b16 %v4266, %v4262
    %v4571 = vpack.c.b16 %v4267, %v4263
    %v4572 = vpack.c.b16 %v4268, %v4264
    %v4573 = vpack.c.b16 %v4273, %v4269
    %v4574 = vpack.c.b16 %v4274, %v4270
    %v4575 = vpack.c.b16 %v4275, %v4271
    %v4576 = vpack.c.b16 %v4276, %v4272
    %v4577 = vpack.c.b16 %v4281, %v4277
    %v4578 = vpack.c.b16 %v4282, %v4278
    %v4579 = vpack.c.b16 %v4283, %v4279
    %v4580 = vpack.c.b16 %v4284, %v4280
    %v4581 = vpack.c.b16 %v4289, %v4285
    %v4582 = vpack.c.b16 %v4290, %v4286
    %v4583 = vpack.c.b16 %v4291, %v4287
    %v4584 = vpack.c.b16 %v4292, %v4288
    %v4585 = vpack.c.b16 %v4297, %v4293
    %v4586 = vpack.c.b16 %v4298, %v4294
    %v4587 = vpack.c.b16 %v4299, %v4295
    %v4588 = vpack.c.b16 %v4300, %v4296
    %v4589 = vpack.c.b16 %v4305, %v4301
    %v4590 = vpack.c.b16 %v4306, %v4302
    %v4591 = vpack.c.b16 %v4307, %v4303
    %v4592 = vpack.c.b16 %v4308, %v4304
    %v4593 = vpack.c.b16 %v4313, %v4309
    %v4594 = vpack.c.b16 %v4314, %v4310
    %v4595 = vpack.c.b16 %v4315, %v4311
    %v4596 = vpack.c.b16 %v4316, %v4312
    %v4597 = vpack.c.b16 %v4321, %v4317
    %v4598 = vpack.c.b16 %v4322, %v4318
    %v4599 = vpack.c.b16 %v4323, %v4319
    %v4600 = vpack.c.b16 %v4324, %v4320
    %v4601 = vpack.c.b16 %v4329, %v4325
    %v4602 = vpack.c.b16 %v4330, %v4326
    %v4603 = vpack.c.b16 %v4331, %v4327
    %v4604 = vpack.c.b16 %v4332, %v4328
    %v4605 = vpack.c.b16 %v4337, %v4333
    %v4606 = vpack.c.b16 %v4338, %v4334
    %v4607 = vpack.c.b16 %v4339, %v4335
    %v4608 = vpack.c.b16 %v4340, %v4336
    %v4609 = vpack.c.b16 %v4345, %v4341
    %v4610 = vpack.c.b16 %v4346, %v4342
    %v4611 = vpack.c.b16 %v4347, %v4343
    %v4612 = vpack.c.b16 %v4348, %v4344
    %v4613 = vpack.c.b16 %v4353, %v4349
    %v4614 = vpack.c.b16 %v4354, %v4350
    %v4615 = vpack.c.b16 %v4355, %v4351
    %v4616 = vpack.c.b16 %v4356, %v4352
    %v4617 = vpack.c.b16 %v4361, %v4357
    %v4618 = vpack.c.b16 %v4362, %v4358
    %v4619 = vpack.c.b16 %v4363, %v4359
    %v4620 = vpack.c.b16 %v4364, %v4360
    %4877 = vmatprep.subr.bf16.mxu0 %v4366
    %4878 = vmatpush1.bf16.msra.mxu0 %v4365
    %4879 = vmatprep.subr.bf16.mxu0 %v4370
    %4880 = vmatpush1.bf16.msra.mxu0 %v4369
    %4881 = vmatprep.subr.bf16.mxu0 %v4374
    %4882 = vmatpush1.bf16.msra.mxu0 %v4373
    %4883 = vmatprep.subr.bf16.mxu0 %v4378
    %4884 = vmatpush1.bf16.msra.mxu0 %v4377
    %4885 = vmatprep.subr.bf16.mxu0 %v4382
    %4886 = vmatpush1.bf16.msra.mxu0 %v4381
    %4887 = vmatprep.subr.bf16.mxu0 %v4386
    %4888 = vmatpush1.bf16.msra.mxu0 %v4385
    %4889 = vmatprep.subr.bf16.mxu0 %v4390
    %4890 = vmatpush1.bf16.msra.mxu0 %v4389
    %4891 = vmatprep.subr.bf16.mxu0 %v4394
    %4892 = vmatpush1.bf16.msra.mxu0 %v4393
    %4893 = vmatprep.subr.bf16.mxu0 %v4398
    %4894 = vmatpush1.bf16.msra.mxu0 %v4397
    %4895 = vmatprep.subr.bf16.mxu0 %v4402
    %4896 = vmatpush1.bf16.msra.mxu0 %v4401
    %4897 = vmatprep.subr.bf16.mxu0 %v4406
    %4898 = vmatpush1.bf16.msra.mxu0 %v4405
    %4899 = vmatprep.subr.bf16.mxu0 %v4410
    %4900 = vmatpush1.bf16.msra.mxu0 %v4409
    %4901 = vmatprep.subr.bf16.mxu0 %v4414
    %4902 = vmatpush1.bf16.msra.mxu0 %v4413
    %4903 = vmatprep.subr.bf16.mxu0 %v4418
    %4904 = vmatpush1.bf16.msra.mxu0 %v4417
    %4905 = vmatprep.subr.bf16.mxu0 %v4422
    %4906 = vmatpush1.bf16.msra.mxu0 %v4421
    %4907 = vmatprep.subr.bf16.mxu0 %v4426
    %4908 = vmatpush1.bf16.msra.mxu0 %v4425
    %4909 = vmatprep.mubr.bf16.mxu0 %v3312
    %4910 = vmatmul.mubr.bf16.gmra.mrb[0].mxu0 %v3311
    %v4911 = vpop.f32.mrb[0].mxu0
    %v4912 = vadd.f32 %v3580, %v4911
    %v4913 = vpop.f32.mrb[0].mxu0
    %v4914 = vadd.f32 %v3584, %v4913
    %v4915 = vpop.f32.mrb[0].mxu0
    %v4916 = vpop.f32.mrb[0].mxu0
    %4917 = vdwg.mxu0
    %4918 = vmatprep.subr.bf16.mxu0 %v4430
    %4919 = vmatpush1.bf16.msra.mxu0 %v4429
    %4920 = vmatprep.subr.bf16.mxu0 %v4434
    %4921 = vmatpush1.bf16.msra.mxu0 %v4433
    %4922 = vmatprep.subr.bf16.mxu0 %v4438
    %4923 = vmatpush1.bf16.msra.mxu0 %v4437
    %4924 = vmatprep.subr.bf16.mxu0 %v4442
    %4925 = vmatpush1.bf16.msra.mxu0 %v4441
    %4926 = vmatprep.subr.bf16.mxu0 %v4446
    %4927 = vmatpush1.bf16.msra.mxu0 %v4445
    %4928 = vmatprep.subr.bf16.mxu0 %v4450
    %4929 = vmatpush1.bf16.msra.mxu0 %v4449
    %4930 = vmatprep.subr.bf16.mxu0 %v4454
    %4931 = vmatpush1.bf16.msra.mxu0 %v4453
    %4932 = vmatprep.subr.bf16.mxu0 %v4458
    %4933 = vmatpush1.bf16.msra.mxu0 %v4457
    %4934 = vmatprep.subr.bf16.mxu0 %v4462
    %4935 = vmatpush1.bf16.msra.mxu0 %v4461
    %4936 = vmatprep.subr.bf16.mxu0 %v4466
    %4937 = vmatpush1.bf16.msra.mxu0 %v4465
    %4938 = vmatprep.subr.bf16.mxu0 %v4470
    %4939 = vmatpush1.bf16.msra.mxu0 %v4469
    %4940 = vmatprep.subr.bf16.mxu0 %v4474
    %4941 = vmatpush1.bf16.msra.mxu0 %v4473
    %4942 = vmatprep.subr.bf16.mxu0 %v4478
    %4943 = vmatpush1.bf16.msra.mxu0 %v4477
    %4944 = vmatprep.subr.bf16.mxu0 %v4482
    %4945 = vmatpush1.bf16.msra.mxu0 %v4481
    %4946 = vmatprep.subr.bf16.mxu0 %v4486
    %4947 = vmatpush1.bf16.msra.mxu0 %v4485
    %4948 = vmatprep.subr.bf16.mxu0 %v4490
    %4949 = vmatpush1.bf16.msra.mxu0 %v4489
    %4950 = vmatprep.mubr.bf16.mxu0 %v3314
    %4951 = vmatmul.mubr.bf16.gmra.mrb[0].mxu0 %v3313
    %v4952 = vpop.f32.mrb[0].mxu0
    %v4953 = vadd.f32 %v4912, %v4952
    %v4954 = vpop.f32.mrb[0].mxu0
    %v4955 = vadd.f32 %v4914, %v4954
    %v4956 = vpop.f32.mrb[0].mxu0
    %v4957 = vpop.f32.mrb[0].mxu0
    %4958 = vdwg.mxu0
    %4959 = vmatprep.subr.bf16.mxu0 %v4494
    %4960 = vmatpush1.bf16.msra.mxu0 %v4493
    %4961 = vmatprep.subr.bf16.mxu0 %v4498
    %4962 = vmatpush1.bf16.msra.mxu0 %v4497
    %4963 = vmatprep.subr.bf16.mxu0 %v4502
    %4964 = vmatpush1.bf16.msra.mxu0 %v4501
    %4965 = vmatprep.subr.bf16.mxu0 %v4506
    %4966 = vmatpush1.bf16.msra.mxu0 %v4505
    %4967 = vmatprep.subr.bf16.mxu0 %v4510
    %4968 = vmatpush1.bf16.msra.mxu0 %v4509
    %4969 = vmatprep.subr.bf16.mxu0 %v4514
    %4970 = vmatpush1.bf16.msra.mxu0 %v4513
    %4971 = vmatprep.subr.bf16.mxu0 %v4518
    %4972 = vmatpush1.bf16.msra.mxu0 %v4517
    %4973 = vmatprep.subr.bf16.mxu0 %v4522
    %4974 = vmatpush1.bf16.msra.mxu0 %v4521
    %4975 = vmatprep.subr.bf16.mxu0 %v4526
    %4976 = vmatpush1.bf16.msra.mxu0 %v4525
    %4977 = vmatprep.subr.bf16.mxu0 %v4530
    %4978 = vmatpush1.bf16.msra.mxu0 %v4529
    %4979 = vmatprep.subr.bf16.mxu0 %v4534
    %4980 = vmatpush1.bf16.msra.mxu0 %v4533
    %4981 = vmatprep.subr.bf16.mxu0 %v4538
    %4982 = vmatpush1.bf16.msra.mxu0 %v4537
    %4983 = vmatprep.subr.bf16.mxu0 %v4542
    %4984 = vmatpush1.bf16.msra.mxu0 %v4541
    %4985 = vmatprep.subr.bf16.mxu0 %v4546
    %4986 = vmatpush1.bf16.msra.mxu0 %v4545
    %4987 = vmatprep.subr.bf16.mxu0 %v4550
    %4988 = vmatpush1.bf16.msra.mxu0 %v4549
    %4989 = vmatprep.subr.bf16.mxu0 %v4554
    %4990 = vmatpush1.bf16.msra.mxu0 %v4553
    %4991 = vmatprep.mubr.bf16.mxu0 %v3316
    %4992 = vmatmul.mubr.bf16.gmra.mrb[0].mxu0 %v3315
    %v4993 = vpop.f32.mrb[0].mxu0
    %v4994 = vadd.f32 %v4953, %v4993
    %v4995 = vpop.f32.mrb[0].mxu0
    %v4996 = vadd.f32 %v4955, %v4995
    %v4997 = vpop.f32.mrb[0].mxu0
    %v4998 = vpop.f32.mrb[0].mxu0
    %4999 = vdwg.mxu0
    %5000 = vmatprep.subr.bf16.mxu0 %v4558
    %5001 = vmatpush1.bf16.msra.mxu0 %v4557
    %5002 = vmatprep.subr.bf16.mxu0 %v4562
    %5003 = vmatpush1.bf16.msra.mxu0 %v4561
    %5004 = vmatprep.subr.bf16.mxu0 %v4566
    %5005 = vmatpush1.bf16.msra.mxu0 %v4565
    %5006 = vmatprep.subr.bf16.mxu0 %v4570
    %5007 = vmatpush1.bf16.msra.mxu0 %v4569
    %5008 = vmatprep.subr.bf16.mxu0 %v4574
    %5009 = vmatpush1.bf16.msra.mxu0 %v4573
    %5010 = vmatprep.subr.bf16.mxu0 %v4578
    %5011 = vmatpush1.bf16.msra.mxu0 %v4577
    %5012 = vmatprep.subr.bf16.mxu0 %v4582
    %5013 = vmatpush1.bf16.msra.mxu0 %v4581
    %5014 = vmatprep.subr.bf16.mxu0 %v4586
    %5015 = vmatpush1.bf16.msra.mxu0 %v4585
    %5016 = vmatprep.subr.bf16.mxu0 %v4590
    %5017 = vmatpush1.bf16.msra.mxu0 %v4589
    %5018 = vmatprep.subr.bf16.mxu0 %v4594
    %5019 = vmatpush1.bf16.msra.mxu0 %v4593
    %5020 = vmatprep.subr.bf16.mxu0 %v4598
    %5021 = vmatpush1.bf16.msra.mxu0 %v4597
    %5022 = vmatprep.subr.bf16.mxu0 %v4602
    %5023 = vmatpush1.bf16.msra.mxu0 %v4601
    %5024 = vmatprep.subr.bf16.mxu0 %v4606
    %5025 = vmatpush1.bf16.msra.mxu0 %v4605
    %5026 = vmatprep.subr.bf16.mxu0 %v4610
    %5027 = vmatpush1.bf16.msra.mxu0 %v4609
    %5028 = vmatprep.subr.bf16.mxu0 %v4614
    %5029 = vmatpush1.bf16.msra.mxu0 %v4613
    %5030 = vmatprep.subr.bf16.mxu0 %v4618
    %5031 = vmatpush1.bf16.msra.mxu0 %v4617
    %5032 = vmatprep.mubr.bf16.mxu0 %v3318
    %5033 = vmatmul.mubr.bf16.gmra.mrb[0].mxu0 %v3317
    %v5034 = vpop.f32.mrb[0].mxu0
    %v5035 = vadd.f32 %v4994, %v5034
    %v5036 = vpop.f32.mrb[0].mxu0
    %v5037 = vadd.f32 %v4996, %v5036
    %v5038 = vpop.f32.mrb[0].mxu0
    %v5039 = vpop.f32.mrb[0].mxu0
    %5040 = vdwg.mxu0
    %5041 = vmatprep.subr.bf16.mxu0 %v4368
    %5042 = vmatpush1.bf16.msra.mxu0 %v4367
    %5043 = vmatprep.subr.bf16.mxu0 %v4372
    %5044 = vmatpush1.bf16.msra.mxu0 %v4371
    %5045 = vmatprep.subr.bf16.mxu0 %v4376
    %5046 = vmatpush1.bf16.msra.mxu0 %v4375
    %5047 = vmatprep.subr.bf16.mxu0 %v4380
    %5048 = vmatpush1.bf16.msra.mxu0 %v4379
    %5049 = vmatprep.subr.bf16.mxu0 %v4384
    %5050 = vmatpush1.bf16.msra.mxu0 %v4383
    %5051 = vmatprep.subr.bf16.mxu0 %v4388
    %5052 = vmatpush1.bf16.msra.mxu0 %v4387
    %5053 = vmatprep.subr.bf16.mxu0 %v4392
    %5054 = vmatpush1.bf16.msra.mxu0 %v4391
    %5055 = vmatprep.subr.bf16.mxu0 %v4396
    %5056 = vmatpush1.bf16.msra.mxu0 %v4395
    %5057 = vmatprep.subr.bf16.mxu0 %v4400
    %5058 = vmatpush1.bf16.msra.mxu0 %v4399
    %5059 = vmatprep.subr.bf16.mxu0 %v4404
    %5060 = vmatpush1.bf16.msra.mxu0 %v4403
    %5061 = vmatprep.subr.bf16.mxu0 %v4408
    %5062 = vmatpush1.bf16.msra.mxu0 %v4407
    %5063 = vmatprep.subr.bf16.mxu0 %v4412
    %5064 = vmatpush1.bf16.msra.mxu0 %v4411
    %5065 = vmatprep.subr.bf16.mxu0 %v4416
    %5066 = vmatpush1.bf16.msra.mxu0 %v4415
    %5067 = vmatprep.subr.bf16.mxu0 %v4420
    %5068 = vmatpush1.bf16.msra.mxu0 %v4419
    %5069 = vmatprep.subr.bf16.mxu0 %v4424
    %5070 = vmatpush1.bf16.msra.mxu0 %v4423
    %5071 = vmatprep.subr.bf16.mxu0 %v4428
    %5072 = vmatpush1.bf16.msra.mxu0 %v4427
    %5073 = vmatprep.mubr.bf16.mxu0 %v3312
    %5074 = vmatmul.mubr.bf16.gmra.mrb[0].mxu0 %v3311
    %v5075 = vpop.f32.mrb[0].mxu0
    %v5076 = vadd.f32 %v3588, %v5075
    %v5077 = vpop.f32.mrb[0].mxu0
    %v5078 = vadd.f32 %v3592, %v5077
    %v5079 = vpop.f32.mrb[0].mxu0
    %v5080 = vpop.f32.mrb[0].mxu0
    %5081 = vdwg.mxu0
    %5082 = vmatprep.subr.bf16.mxu0 %v4432
    %5083 = vmatpush1.bf16.msra.mxu0 %v4431
    %5084 = vmatprep.subr.bf16.mxu0 %v4436
    %5085 = vmatpush1.bf16.msra.mxu0 %v4435
    %5086 = vmatprep.subr.bf16.mxu0 %v4440
    %5087 = vmatpush1.bf16.msra.mxu0 %v4439
    %5088 = vmatprep.subr.bf16.mxu0 %v4444
    %5089 = vmatpush1.bf16.msra.mxu0 %v4443
    %5090 = vmatprep.subr.bf16.mxu0 %v4448
    %5091 = vmatpush1.bf16.msra.mxu0 %v4447
    %5092 = vmatprep.subr.bf16.mxu0 %v4452
    %5093 = vmatpush1.bf16.msra.mxu0 %v4451
    %5094 = vmatprep.subr.bf16.mxu0 %v4456
    %5095 = vmatpush1.bf16.msra.mxu0 %v4455
    %5096 = vmatprep.subr.bf16.mxu0 %v4460
    %5097 = vmatpush1.bf16.msra.mxu0 %v4459
    %5098 = vmatprep.subr.bf16.mxu0 %v4464
    %5099 = vmatpush1.bf16.msra.mxu0 %v4463
    %5100 = vmatprep.subr.bf16.mxu0 %v4468
    %5101 = vmatpush1.bf16.msra.mxu0 %v4467
    %5102 = vmatprep.subr.bf16.mxu0 %v4472
    %5103 = vmatpush1.bf16.msra.mxu0 %v4471
    %5104 = vmatprep.subr.bf16.mxu0 %v4476
    %5105 = vmatpush1.bf16.msra.mxu0 %v4475
    %5106 = vmatprep.subr.bf16.mxu0 %v4480
    %5107 = vmatpush1.bf16.msra.mxu0 %v4479
    %5108 = vmatprep.subr.bf16.mxu0 %v4484
    %5109 = vmatpush1.bf16.msra.mxu0 %v4483
    %5110 = vmatprep.subr.bf16.mxu0 %v4488
    %5111 = vmatpush1.bf16.msra.mxu0 %v4487
    %5112 = vmatprep.subr.bf16.mxu0 %v4492
    %5113 = vmatpush1.bf16.msra.mxu0 %v4491
    %5114 = vmatprep.mubr.bf16.mxu0 %v3314
    %5115 = vmatmul.mubr.bf16.gmra.mrb[0].mxu0 %v3313
    %v5116 = vpop.f32.mrb[0].mxu0
    %v5117 = vadd.f32 %v5076, %v5116
    %v5118 = vpop.f32.mrb[0].mxu0
    %v5119 = vadd.f32 %v5078, %v5118
    %v5120 = vpop.f32.mrb[0].mxu0
    %v5121 = vpop.f32.mrb[0].mxu0
    %5122 = vdwg.mxu0
    %5123 = vmatprep.subr.bf16.mxu0 %v4496
    %5124 = vmatpush1.bf16.msra.mxu0 %v4495
    %5125 = vmatprep.subr.bf16.mxu0 %v4500
    %5126 = vmatpush1.bf16.msra.mxu0 %v4499
    %5127 = vmatprep.subr.bf16.mxu0 %v4504
    %5128 = vmatpush1.bf16.msra.mxu0 %v4503
    %5129 = vmatprep.subr.bf16.mxu0 %v4508
    %5130 = vmatpush1.bf16.msra.mxu0 %v4507
    %5131 = vmatprep.subr.bf16.mxu0 %v4512
    %5132 = vmatpush1.bf16.msra.mxu0 %v4511
    %5133 = vmatprep.subr.bf16.mxu0 %v4516
    %5134 = vmatpush1.bf16.msra.mxu0 %v4515
    %5135 = vmatprep.subr.bf16.mxu0 %v4520
    %5136 = vmatpush1.bf16.msra.mxu0 %v4519
    %5137 = vmatprep.subr.bf16.mxu0 %v4524
    %5138 = vmatpush1.bf16.msra.mxu0 %v4523
    %5139 = vmatprep.subr.bf16.mxu0 %v4528
    %5140 = vmatpush1.bf16.msra.mxu0 %v4527
    %5141 = vmatprep.subr.bf16.mxu0 %v4532
    %5142 = vmatpush1.bf16.msra.mxu0 %v4531
    %5143 = vmatprep.subr.bf16.mxu0 %v4536
    %5144 = vmatpush1.bf16.msra.mxu0 %v4535
    %5145 = vmatprep.subr.bf16.mxu0 %v4540
    %5146 = vmatpush1.bf16.msra.mxu0 %v4539
    %5147 = vmatprep.subr.bf16.mxu0 %v4544
    %5148 = vmatpush1.bf16.msra.mxu0 %v4543
    %5149 = vmatprep.subr.bf16.mxu0 %v4548
    %5150 = vmatpush1.bf16.msra.mxu0 %v4547
    %5151 = vmatprep.subr.bf16.mxu0 %v4552
    %5152 = vmatpush1.bf16.msra.mxu0 %v4551
    %5153 = vmatprep.subr.bf16.mxu0 %v4556
    %5154 = vmatpush1.bf16.msra.mxu0 %v4555
    %5155 = vmatprep.mubr.bf16.mxu0 %v3316
    %5156 = vmatmul.mubr.bf16.gmra.mrb[0].mxu0 %v3315
    %v5157 = vpop.f32.mrb[0].mxu0
    %v5158 = vadd.f32 %v5117, %v5157
    %v5159 = vpop.f32.mrb[0].mxu0
    %v5160 = vadd.f32 %v5119, %v5159
    %v5161 = vpop.f32.mrb[0].mxu0
    %v5162 = vpop.f32.mrb[0].mxu0
    %5163 = vdwg.mxu0
    %5164 = vmatprep.subr.bf16.mxu0 %v4560
    %5165 = vmatpush1.bf16.msra.mxu0 %v4559
    %5166 = vmatprep.subr.bf16.mxu0 %v4564
    %5167 = vmatpush1.bf16.msra.mxu0 %v4563
    %5168 = vmatprep.subr.bf16.mxu0 %v4568
    %5169 = vmatpush1.bf16.msra.mxu0 %v4567
    %5170 = vmatprep.subr.bf16.mxu0 %v4572
    %5171 = vmatpush1.bf16.msra.mxu0 %v4571
    %5172 = vmatprep.subr.bf16.mxu0 %v4576
    %5173 = vmatpush1.bf16.msra.mxu0 %v4575
    %5174 = vmatprep.subr.bf16.mxu0 %v4580
    %5175 = vmatpush1.bf16.msra.mxu0 %v4579
    %5176 = vmatprep.subr.bf16.mxu0 %v4584
    %5177 = vmatpush1.bf16.msra.mxu0 %v4583
    %5178 = vmatprep.subr.bf16.mxu0 %v4588
    %5179 = vmatpush1.bf16.msra.mxu0 %v4587
    %5180 = vmatprep.subr.bf16.mxu0 %v4592
    %5181 = vmatpush1.bf16.msra.mxu0 %v4591
    %5182 = vmatprep.subr.bf16.mxu0 %v4596
    %5183 = vmatpush1.bf16.msra.mxu0 %v4595
    %5184 = vmatprep.subr.bf16.mxu0 %v4600
    %5185 = vmatpush1.bf16.msra.mxu0 %v4599
    %5186 = vmatprep.subr.bf16.mxu0 %v4604
    %5187 = vmatpush1.bf16.msra.mxu0 %v4603
    %5188 = vmatprep.subr.bf16.mxu0 %v4608
    %5189 = vmatpush1.bf16.msra.mxu0 %v4607
    %5190 = vmatprep.subr.bf16.mxu0 %v4612
    %5191 = vmatpush1.bf16.msra.mxu0 %v4611
    %5192 = vmatprep.subr.bf16.mxu0 %v4616
    %5193 = vmatpush1.bf16.msra.mxu0 %v4615
    %5194 = vmatprep.subr.bf16.mxu0 %v4620
    %5195 = vmatpush1.bf16.msra.mxu0 %v4619
    %5196 = vmatprep.mubr.bf16.mxu0 %v3318
    %5197 = vmatmul.mubr.bf16.gmra.mrb[0].mxu0 %v3317
    %v5198 = vpop.f32.mrb[0].mxu0
    %v5199 = vadd.f32 %v5158, %v5198
    %v5200 = vpop.f32.mrb[0].mxu0
    %v5201 = vadd.f32 %v5160, %v5200
    %v5202 = vpop.f32.mrb[0].mxu0
    %v5203 = vpop.f32.mrb[0].mxu0
    %5204 = vdwg.mxu0
    %v5205 = vmax.f32 %v5035, 0.0
    %v5206 = vmax.f32 %v5037, 0.0
    %v5207 = vmax.f32 %v5199, 0.0
    %v5208 = vmax.f32 %v5201, 0.0
    %v5209 = vpack.c.bf16 %v5205, %v5205
    %v5210 = vpack.c.bf16 %v5206, %v5206
    %v5211 = vpack.c.bf16 %v5207, %v5207
    %v5212 = vpack.c.bf16 %v5208, %v5208
    %v5213 = vld [vmem:[#allocation11] sm:$0xf]
    %v5214 = vld [vmem:[#allocation11 + $0x4] sm:$0xf]
    %v5215 = vld [vmem:[#allocation11 + $0x8] sm:$0xf]
    %v5216 = vld [vmem:[#allocation11 + $0xc] sm:$0xf]
    %v5217 = vld [vmem:[#allocation11 + $0x10] sm:$0xf]
    %v5218 = vld [vmem:[#allocation11 + $0x14] sm:$0xf]
    %v5219 = vld [vmem:[#allocation11 + $0x18] sm:$0xf]
    %v5220 = vld [vmem:[#allocation11 + $0x1c] sm:$0xf]
    %v5221 = vld [vmem:[#allocation11 + $0x20] sm:$0xf]
    %v5222 = vld [vmem:[#allocation11 + $0x24] sm:$0xf]
    %v5223 = vld [vmem:[#allocation11 + $0x28] sm:$0xf]
    %v5224 = vld [vmem:[#allocation11 + $0x2c] sm:$0xf]
    %v5225 = vld [vmem:[#allocation11 + $0x30] sm:$0xf]
    %v5226 = vld [vmem:[#allocation11 + $0x34] sm:$0xf]
    %v5227 = vld [vmem:[#allocation11 + $0x38] sm:$0xf]
    %v5228 = vld [vmem:[#allocation11 + $0x3c] sm:$0xf]
    %v5229 = vld [vmem:[#allocation11 + $0x40] sm:$0xf]
    %v5230 = vld [vmem:[#allocation11 + $0x44] sm:$0xf]
    %v5231 = vld [vmem:[#allocation11 + $0x48] sm:$0xf]
    %v5232 = vld [vmem:[#allocation11 + $0x4c] sm:$0xf]
    %v5233 = vld [vmem:[#allocation11 + $0x50] sm:$0xf]
    %v5234 = vld [vmem:[#allocation11 + $0x54] sm:$0xf]
    %v5235 = vld [vmem:[#allocation11 + $0x58] sm:$0xf]
    %v5236 = vld [vmem:[#allocation11 + $0x5c] sm:$0xf]
    %v5237 = vld [vmem:[#allocation11 + $0x60] sm:$0xf]
    %v5238 = vld [vmem:[#allocation11 + $0x64] sm:$0xf]
    %v5239 = vld [vmem:[#allocation11 + $0x68] sm:$0xf]
    %v5240 = vld [vmem:[#allocation11 + $0x6c] sm:$0xf]
    %v5241 = vld [vmem:[#allocation11 + $0x70] sm:$0xf]
    %v5242 = vld [vmem:[#allocation11 + $0x74] sm:$0xf]
    %v5243 = vld [vmem:[#allocation11 + $0x78] sm:$0xf]
    %v5244 = vld [vmem:[#allocation11 + $0x7c] sm:$0xf]
    %v5245 = vld [vmem:[#allocation11 + $0x80] sm:$0xf]
    %v5246 = vld [vmem:[#allocation11 + $0x84] sm:$0xf]
    %v5247 = vld [vmem:[#allocation11 + $0x88] sm:$0xf]
    %v5248 = vld [vmem:[#allocation11 + $0x8c] sm:$0xf]
    %v5249 = vld [vmem:[#allocation11 + $0x90] sm:$0xf]
    %v5250 = vld [vmem:[#allocation11 + $0x94] sm:$0xf]
    %v5251 = vld [vmem:[#allocation11 + $0x98] sm:$0xf]
    %v5252 = vld [vmem:[#allocation11 + $0x9c] sm:$0xf]
    %v5253 = vld [vmem:[#allocation11 + $0xa0] sm:$0xf]
    %v5254 = vld [vmem:[#allocation11 + $0xa4] sm:$0xf]
    %v5255 = vld [vmem:[#allocation11 + $0xa8] sm:$0xf]
    %v5256 = vld [vmem:[#allocation11 + $0xac] sm:$0xf]
    %v5257 = vld [vmem:[#allocation11 + $0xb0] sm:$0xf]
    %v5258 = vld [vmem:[#allocation11 + $0xb4] sm:$0xf]
    %v5259 = vld [vmem:[#allocation11 + $0xb8] sm:$0xf]
    %v5260 = vld [vmem:[#allocation11 + $0xbc] sm:$0xf]
    %v5261 = vld [vmem:[#allocation11 + $0xc0] sm:$0xf]
    %v5262 = vld [vmem:[#allocation11 + $0xc4] sm:$0xf]
    %v5263 = vld [vmem:[#allocation11 + $0xc8] sm:$0xf]
    %v5264 = vld [vmem:[#allocation11 + $0xcc] sm:$0xf]
    %v5265 = vld [vmem:[#allocation11 + $0xd0] sm:$0xf]
    %v5266 = vld [vmem:[#allocation11 + $0xd4] sm:$0xf]
    %v5267 = vld [vmem:[#allocation11 + $0xd8] sm:$0xf]
    %v5268 = vld [vmem:[#allocation11 + $0xdc] sm:$0xf]
    %v5269 = vld [vmem:[#allocation11 + $0xe0] sm:$0xf]
    %v5270 = vld [vmem:[#allocation11 + $0xe4] sm:$0xf]
    %v5271 = vld [vmem:[#allocation11 + $0xe8] sm:$0xf]
    %v5272 = vld [vmem:[#allocation11 + $0xec] sm:$0xf]
    %v5273 = vld [vmem:[#allocation11 + $0xf0] sm:$0xf]
    %v5274 = vld [vmem:[#allocation11 + $0xf4] sm:$0xf]
    %v5275 = vld [vmem:[#allocation11 + $0xf8] sm:$0xf]
    %v5276 = vld [vmem:[#allocation11 + $0xfc] sm:$0xf]
    %v5277 = vld [vmem:[#allocation13] sm:$0x1]
    %v5279 = vlaneseq
    %v5280 = vshrl.u32 %v5279, 7
    %v5281 = vsub.s32 0, %v5280
    %v5282 = vrot.slane %v5277, %v5281
    %v5348 = vunpack.c.l.b16 %v5213
    %v5349 = vunpack.c.l.b16 %v5214
    %v5350 = vunpack.c.l.b16 %v5215
    %v5351 = vunpack.c.l.b16 %v5216
    %v5352 = vunpack.c.l.b16 %v5217
    %v5353 = vunpack.c.l.b16 %v5218
    %v5354 = vunpack.c.l.b16 %v5219
    %v5355 = vunpack.c.l.b16 %v5220
    %v5356 = vunpack.c.l.b16 %v5221
    %v5357 = vunpack.c.l.b16 %v5222
    %v5358 = vunpack.c.l.b16 %v5223
    %v5359 = vunpack.c.l.b16 %v5224
    %v5360 = vunpack.c.l.b16 %v5225
    %v5361 = vunpack.c.l.b16 %v5226
    %v5362 = vunpack.c.l.b16 %v5227
    %v5363 = vunpack.c.l.b16 %v5228
    %v5364 = vunpack.c.l.b16 %v5229
    %v5365 = vunpack.c.l.b16 %v5230
    %v5366 = vunpack.c.l.b16 %v5231
    %v5367 = vunpack.c.l.b16 %v5232
    %v5368 = vunpack.c.l.b16 %v5233
    %v5369 = vunpack.c.l.b16 %v5234
    %v5370 = vunpack.c.l.b16 %v5235
    %v5371 = vunpack.c.l.b16 %v5236
    %v5372 = vunpack.c.l.b16 %v5237
    %v5373 = vunpack.c.l.b16 %v5238
    %v5374 = vunpack.c.l.b16 %v5239
    %v5375 = vunpack.c.l.b16 %v5240
    %v5376 = vunpack.c.l.b16 %v5241
    %v5377 = vunpack.c.l.b16 %v5242
    %v5378 = vunpack.c.l.b16 %v5243
    %v5379 = vunpack.c.l.b16 %v5244
    %v5380 = vunpack.c.l.b16 %v5245
    %v5381 = vunpack.c.l.b16 %v5246
    %v5382 = vunpack.c.l.b16 %v5247
    %v5383 = vunpack.c.l.b16 %v5248
    %v5384 = vunpack.c.l.b16 %v5249
    %v5385 = vunpack.c.l.b16 %v5250
    %v5386 = vunpack.c.l.b16 %v5251
    %v5387 = vunpack.c.l.b16 %v5252
    %v5388 = vunpack.c.l.b16 %v5253
    %v5389 = vunpack.c.l.b16 %v5254
    %v5390 = vunpack.c.l.b16 %v5255
    %v5391 = vunpack.c.l.b16 %v5256
    %v5392 = vunpack.c.l.b16 %v5257
    %v5393 = vunpack.c.l.b16 %v5258
    %v5394 = vunpack.c.l.b16 %v5259
    %v5395 = vunpack.c.l.b16 %v5260
    %v5396 = vunpack.c.l.b16 %v5261
    %v5397 = vunpack.c.l.b16 %v5262
    %v5398 = vunpack.c.l.b16 %v5263
    %v5399 = vunpack.c.l.b16 %v5264
    %v5400 = vunpack.c.l.b16 %v5265
    %v5401 = vunpack.c.l.b16 %v5266
    %v5402 = vunpack.c.l.b16 %v5267
    %v5403 = vunpack.c.l.b16 %v5268
    %v5404 = vunpack.c.l.b16 %v5269
    %v5405 = vunpack.c.l.b16 %v5270
    %v5406 = vunpack.c.l.b16 %v5271
    %v5407 = vunpack.c.l.b16 %v5272
    %v5408 = vunpack.c.l.b16 %v5273
    %v5409 = vunpack.c.l.b16 %v5274
    %v5410 = vunpack.c.l.b16 %v5275
    %v5411 = vunpack.c.l.b16 %v5276
    %v5412 = vpack.c.b16 %v5349, %v5348
    %v5413 = vpack.c.b16 %v5351, %v5350
    %v5414 = vpack.c.b16 %v5353, %v5352
    %v5415 = vpack.c.b16 %v5355, %v5354
    %v5416 = vpack.c.b16 %v5357, %v5356
    %v5417 = vpack.c.b16 %v5359, %v5358
    %v5418 = vpack.c.b16 %v5361, %v5360
    %v5419 = vpack.c.b16 %v5363, %v5362
    %v5420 = vpack.c.b16 %v5365, %v5364
    %v5421 = vpack.c.b16 %v5367, %v5366
    %v5422 = vpack.c.b16 %v5369, %v5368
    %v5423 = vpack.c.b16 %v5371, %v5370
    %v5424 = vpack.c.b16 %v5373, %v5372
    %v5425 = vpack.c.b16 %v5375, %v5374
    %v5426 = vpack.c.b16 %v5377, %v5376
    %v5427 = vpack.c.b16 %v5379, %v5378
    %v5428 = vpack.c.b16 %v5381, %v5380
    %v5429 = vpack.c.b16 %v5383, %v5382
    %v5430 = vpack.c.b16 %v5385, %v5384
    %v5431 = vpack.c.b16 %v5387, %v5386
    %v5432 = vpack.c.b16 %v5389, %v5388
    %v5433 = vpack.c.b16 %v5391, %v5390
    %v5434 = vpack.c.b16 %v5393, %v5392
    %v5435 = vpack.c.b16 %v5395, %v5394
    %v5436 = vpack.c.b16 %v5397, %v5396
    %v5437 = vpack.c.b16 %v5399, %v5398
    %v5438 = vpack.c.b16 %v5401, %v5400
    %v5439 = vpack.c.b16 %v5403, %v5402
    %v5440 = vpack.c.b16 %v5405, %v5404
    %v5441 = vpack.c.b16 %v5407, %v5406
    %v5442 = vpack.c.b16 %v5409, %v5408
    %v5443 = vpack.c.b16 %v5411, %v5410
    %5476 = vmatprep.subr.bf16.mxu0 0
    %5477 = vmatpush1.bf16.msra.mxu0 %v5412
    %5478 = vmatprep.subr.bf16.mxu0 0
    %5479 = vmatpush1.bf16.msra.mxu0 %v5413
    %5480 = vmatprep.subr.bf16.mxu0 0
    %5481 = vmatpush1.bf16.msra.mxu0 %v5414
    %5482 = vmatprep.subr.bf16.mxu0 0
    %5483 = vmatpush1.bf16.msra.mxu0 %v5415
    %5484 = vmatprep.subr.bf16.mxu0 0
    %5485 = vmatpush1.bf16.msra.mxu0 %v5416
    %5486 = vmatprep.subr.bf16.mxu0 0
    %5487 = vmatpush1.bf16.msra.mxu0 %v5417
    %5488 = vmatprep.subr.bf16.mxu0 0
    %5489 = vmatpush1.bf16.msra.mxu0 %v5418
    %5490 = vmatprep.subr.bf16.mxu0 0
    %5491 = vmatpush1.bf16.msra.mxu0 %v5419
    %5492 = vmatprep.subr.bf16.mxu0 0
    %5493 = vmatpush1.bf16.msra.mxu0 %v5420
    %5494 = vmatprep.subr.bf16.mxu0 0
    %5495 = vmatpush1.bf16.msra.mxu0 %v5421
    %5496 = vmatprep.subr.bf16.mxu0 0
    %5497 = vmatpush1.bf16.msra.mxu0 %v5422
    %5498 = vmatprep.subr.bf16.mxu0 0
    %5499 = vmatpush1.bf16.msra.mxu0 %v5423
    %5500 = vmatprep.subr.bf16.mxu0 0
    %5501 = vmatpush1.bf16.msra.mxu0 %v5424
    %5502 = vmatprep.subr.bf16.mxu0 0
    %5503 = vmatpush1.bf16.msra.mxu0 %v5425
    %5504 = vmatprep.subr.bf16.mxu0 0
    %5505 = vmatpush1.bf16.msra.mxu0 %v5426
    %5506 = vmatprep.subr.bf16.mxu0 0
    %5507 = vmatpush1.bf16.msra.mxu0 %v5427
    %5508 = vmatprep.mubr.bf16.mxu0 %v5210
    %5509 = vmatmul.mubr.bf16.gmra.mrb[0].mxu0 %v5209
    %v5510 = vpop.f32.mrb[0].mxu0
    %v5511 = vadd.f32 %v5282, %v5510
    %v5512 = vpop.f32.mrb[0].mxu0
    %v5513 = vpop.f32.mrb[0].mxu0
    %v5514 = vpop.f32.mrb[0].mxu0
    %5515 = vdwg.mxu0
    %5516 = vmatprep.subr.bf16.mxu0 0
    %5517 = vmatpush1.bf16.msra.mxu0 %v5428
    %5518 = vmatprep.subr.bf16.mxu0 0
    %5519 = vmatpush1.bf16.msra.mxu0 %v5429
    %5520 = vmatprep.subr.bf16.mxu0 0
    %5521 = vmatpush1.bf16.msra.mxu0 %v5430
    %5522 = vmatprep.subr.bf16.mxu0 0
    %5523 = vmatpush1.bf16.msra.mxu0 %v5431
    %5524 = vmatprep.subr.bf16.mxu0 0
    %5525 = vmatpush1.bf16.msra.mxu0 %v5432
    %5526 = vmatprep.subr.bf16.mxu0 0
    %5527 = vmatpush1.bf16.msra.mxu0 %v5433
    %5528 = vmatprep.subr.bf16.mxu0 0
    %5529 = vmatpush1.bf16.msra.mxu0 %v5434
    %5530 = vmatprep.subr.bf16.mxu0 0
    %5531 = vmatpush1.bf16.msra.mxu0 %v5435
    %5532 = vmatprep.subr.bf16.mxu0 0
    %5533 = vmatpush1.bf16.msra.mxu0 %v5436
    %5534 = vmatprep.subr.bf16.mxu0 0
    %5535 = vmatpush1.bf16.msra.mxu0 %v5437
    %5536 = vmatprep.subr.bf16.mxu0 0
    %5537 = vmatpush1.bf16.msra.mxu0 %v5438
    %5538 = vmatprep.subr.bf16.mxu0 0
    %5539 = vmatpush1.bf16.msra.mxu0 %v5439
    %5540 = vmatprep.subr.bf16.mxu0 0
    %5541 = vmatpush1.bf16.msra.mxu0 %v5440
    %5542 = vmatprep.subr.bf16.mxu0 0
    %5543 = vmatpush1.bf16.msra.mxu0 %v5441
    %5544 = vmatprep.subr.bf16.mxu0 0
    %5545 = vmatpush1.bf16.msra.mxu0 %v5442
    %5546 = vmatprep.subr.bf16.mxu0 0
    %5547 = vmatpush1.bf16.msra.mxu0 %v5443
    %5548 = vmatprep.mubr.bf16.mxu0 %v5212
    %5549 = vmatmul.mubr.bf16.gmra.mrb[0].mxu0 %v5211
    %v5550 = vpop.f32.mrb[0].mxu0
    %v5551 = vadd.f32 %v5511, %v5550
    %v5552 = vpop.f32.mrb[0].mxu0
    %v5553 = vpop.f32.mrb[0].mxu0
    %v5554 = vpop.f32.mrb[0].mxu0
    %5555 = vdwg.mxu0
    %v5556 = vmax.f32 %v5551, 0.0
    %v5557 = vpack.c.bf16 %v5556, %v5556
    %v5558 = vld [vmem:[#allocation14] sm:$0xf]
    %v5559 = vld [vmem:[#allocation14 + $0x4] sm:$0xf]
    %v5560 = vld [vmem:[#allocation14 + $0x8] sm:$0xf]
    %v5561 = vld [vmem:[#allocation14 + $0xc] sm:$0xf]
    %v5562 = vld [vmem:[#allocation14 + $0x10] sm:$0xf]
    %v5563 = vld [vmem:[#allocation14 + $0x14] sm:$0xf]
    %v5564 = vld [vmem:[#allocation14 + $0x18] sm:$0xf]
    %v5565 = vld [vmem:[#allocation14 + $0x1c] sm:$0xf]
    %v5566 = vld [vmem:[#allocation14 + $0x20] sm:$0xf]
    %v5567 = vld [vmem:[#allocation14 + $0x24] sm:$0xf]
    %v5568 = vld [vmem:[#allocation14 + $0x28] sm:$0xf]
    %v5569 = vld [vmem:[#allocation14 + $0x2c] sm:$0xf]
    %v5570 = vld [vmem:[#allocation14 + $0x30] sm:$0xf]
    %v5571 = vld [vmem:[#allocation14 + $0x34] sm:$0xf]
    %v5572 = vld [vmem:[#allocation14 + $0x38] sm:$0xf]
    %v5573 = vld [vmem:[#allocation14 + $0x3c] sm:$0xf]
    %v5574 = vld [vmem:[#allocation16] sm:$0x1]
    %v5576 = vlaneseq
    %v5577 = vshrl.u32 %v5576, 7
    %v5578 = vsub.s32 0, %v5577
    %v5579 = vrot.slane %v5574, %v5578
    %v5597 = vunpack.c.l.b16 %v5558
    %v5598 = vunpack.c.l.b16 %v5559
    %v5599 = vunpack.c.l.b16 %v5560
    %v5600 = vunpack.c.l.b16 %v5561
    %v5601 = vunpack.c.l.b16 %v5562
    %v5602 = vunpack.c.l.b16 %v5563
    %v5603 = vunpack.c.l.b16 %v5564
    %v5604 = vunpack.c.l.b16 %v5565
    %v5605 = vunpack.c.l.b16 %v5566
    %v5606 = vunpack.c.l.b16 %v5567
    %v5607 = vunpack.c.l.b16 %v5568
    %v5608 = vunpack.c.l.b16 %v5569
    %v5609 = vunpack.c.l.b16 %v5570
    %v5610 = vunpack.c.l.b16 %v5571
    %v5611 = vunpack.c.l.b16 %v5572
    %v5612 = vunpack.c.l.b16 %v5573
    %v5613 = vpack.c.b16 %v5598, %v5597
    %v5614 = vpack.c.b16 %v5600, %v5599
    %v5615 = vpack.c.b16 %v5602, %v5601
    %v5616 = vpack.c.b16 %v5604, %v5603
    %v5617 = vpack.c.b16 %v5606, %v5605
    %v5618 = vpack.c.b16 %v5608, %v5607
    %v5619 = vpack.c.b16 %v5610, %v5609
    %v5620 = vpack.c.b16 %v5612, %v5611
    %5629 = vmatprep.subr.bf16.mxu0 0
    %5630 = vmatpush1.bf16.msra.mxu0 %v5613
    %5631 = vmatprep.subr.bf16.mxu0 0
    %5632 = vmatpush1.bf16.msra.mxu0 %v5614
    %5633 = vmatprep.subr.bf16.mxu0 0
    %5634 = vmatpush1.bf16.msra.mxu0 %v5615
    %5635 = vmatprep.subr.bf16.mxu0 0
    %5636 = vmatpush1.bf16.msra.mxu0 %v5616
    %5637 = vmatprep.subr.bf16.mxu0 0
    %5638 = vmatpush1.bf16.msra.mxu0 %v5617
    %5639 = vmatprep.subr.bf16.mxu0 0
    %5640 = vmatpush1.bf16.msra.mxu0 %v5618
    %5641 = vmatprep.subr.bf16.mxu0 0
    %5642 = vmatpush1.bf16.msra.mxu0 %v5619
    %5643 = vmatprep.subr.bf16.mxu0 0
    %5644 = vmatpush1.bf16.msra.mxu0 %v5620
    %5645 = vmatprep.subr.bf16.mxu0 0
    %5646 = vmatpush1.bf16.msra.mxu0 0
    %5647 = vmatprep.subr.bf16.mxu0 0
    %5648 = vmatpush1.bf16.msra.mxu0 0
    %5649 = vmatprep.subr.bf16.mxu0 0
    %5650 = vmatpush1.bf16.msra.mxu0 0
    %5651 = vmatprep.subr.bf16.mxu0 0
    %5652 = vmatpush1.bf16.msra.mxu0 0
    %5653 = vmatprep.subr.bf16.mxu0 0
    %5654 = vmatpush1.bf16.msra.mxu0 0
    %5655 = vmatprep.subr.bf16.mxu0 0
    %5656 = vmatpush1.bf16.msra.mxu0 0
    %5657 = vmatprep.subr.bf16.mxu0 0
    %5658 = vmatpush1.bf16.msra.mxu0 0
    %5659 = vmatprep.subr.bf16.mxu0 0
    %5660 = vmatpush1.bf16.msra.mxu0 0
    %5661 = vmatprep.mubr.bf16.mxu0 0
    %5662 = vmatmul.mubr.bf16.gmra.mrb[0].mxu0 %v5557
    %v5663 = vpop.f32.mrb[0].mxu0
    %v5664 = vadd.f32 %v5579, %v5663
    %v5665 = vpop.f32.mrb[0].mxu0
    %v5666 = vpop.f32.mrb[0].mxu0
    %v5667 = vpop.f32.mrb[0].mxu0
    %5668 = vdwg.mxu0
    %5669 = vmax.xlane.f32.xlu0 %v5664
    %v5670 = vpop.xlane.xlu0 %5669
    %v5671 = vsub.f32 %v5664, %v5670
    %v5672 = vmul.f32 %v5671, 1.442695
    %v5673 = vpow.pop %v5672
    %5674 = vadd.xlane.f32.xlu0 %v5673
    %v5675 = vpop.xlane.xlu0 %5674
    %v5676 = vlog2.pop %v5675
    %v5677 = vmul.f32 %v5676, 0.6931472
    %v5678 = vsub.f32 %v5671, %v5677
    %5679 = vst [vmem:[#allocation17] sm:$0xff] %v5678
    // Predicated region
    $region74: #{tpu_custom_call.1} parent=1 // pred_check
      _
    $region75: #{tpu_custom_call.1} parent=1 // pred_check_branch
      %5681 = sbr.rel (0) target = $region77
    $region76: #{tpu_custom_call.1} parent=1 // pred_region
      %s5683 = ssub.s32 128, 32
      %5684 = vsyncadd [#allocation4], %s5683
      %s5685 = sshll.u32 [#allocation17], 4
      %s5686 = int_to_ptr.vmem [resolvable:$true] %s5685
      %5691 = dma.vmem_to_hbm [thread:$0]  %s5686, 32, %s9, [#allocation4], 32, 32, 2
    $region77: #{tpu_custom_call.1} parent=1 // pred_fallthru
      _
    // Predicated region
    $region78: #{tpu_custom_call.1} parent=1 // pred_check
      _
    $region79: #{tpu_custom_call.1} parent=1 // pred_check_branch
      %5693 = sbr.rel (0) target = $region81
    $region80: #{tpu_custom_call.1} parent=1 // pred_region
      %5694 = dma.done [#allocation4], 128
    $region81: #{tpu_custom_call.1} parent=1 // pred_fallthru
      _
    %5695 = vsyncpa [#allocation3], 1
    %5696 = vsyncpa [#allocation6], 1
    %5697 = vsyncpa [#allocation9], 1
    %5698 = vsyncpa [#allocation12], 1
    %5699 = vsyncpa [#allocation15], 1
    %5700 = vsyncpa [#allocation4], 1

</llo_original>
